<compile_context>
chip_gen: v6e
topology: v6e:2x2x1
jax: 0.10.0
libtpu: 0.0.40
codegen_flags: <defaults>
</compile_context>

<pallas_src>
import functools

import jax
import jax.numpy as jnp
from jax.experimental import pallas as pl
from jax.experimental.pallas import tpu as pltpu


# bf16 MXU operands / bf16 intermediate activations with f32 accumulation.
# (Set False for exact f32 matmuls; changes numerics vs the f32 PyTorch module.)
USE_BF16_MATMUL = True
# pl.reciprocal(approx=True) uses the EUP vrcp (~2^-12 rel. error) for the
# softmax normalization; set False if tight tolerance vs PyTorch is required.
APPROX_RECIPROCAL = True
LN_EPS = 1e-5  # matches nn.LayerNorm default

_W_DTYPE = jnp.bfloat16 if USE_BF16_MATMUL else jnp.float32
_ACT_DTYPE = jnp.bfloat16 if USE_BF16_MATMUL else jnp.float32


def _vmem_capacity_bytes():
    cap = 64 << 20  # conservative fallback (v7x per-core VMEM)
    try:
        info = pltpu.get_tpu_info()
        cap = int(getattr(info, "vmem_capacity_bytes", cap)) or cap
    except Exception:
        pass
    return cap


_VMEM_CAP = _vmem_capacity_bytes()
# Raise the scoped-VMEM limit above the 16/32 MiB default, leaving headroom
# below the physical capacity (64 MiB on v7x, 128 MiB on v5e/v6e).
_VMEM_LIMIT = int(max(32 << 20, min(_VMEM_CAP - (8 << 20), 100 << 20)))
# Row-tile ceiling re-derived per chip: big tiles only where VMEM has headroom.
_MAX_ROW_TILE = 1024 if _VMEM_CAP >= (96 << 20) else 256


def _erf_approx(x):
    # Abramowitz & Stegun 7.1.26 (max abs error ~1.5e-7): only exp/mul/add,
    # guaranteed Mosaic lowering (avoids relying on lax.erf).
    a1, a2, a3, a4, a5 = 0.254829592, -0.284496736, 1.421413741, -1.453152027, 1.061405429
    p = 0.3275911
    ax = jnp.abs(x)
    t = 1.0 / (1.0 + p * ax)
    poly = ((((a5 * t + a4) * t + a3) * t + a2) * t + a1) * t
    y = 1.0 - poly * jnp.exp(-ax * ax)
    return jnp.where(x >= 0.0, y, -y)


def _gelu_exact(x):
    return 0.5 * x * (1.0 + _erf_approx(x * 0.7071067811865476))


def _row_tile(n_rows, max_tile=None):
    """Largest row tile that divides n_rows, is a multiple of 8, leaves >=2 grid steps."""
    # TODO(synk): switch to pl.cdiv + padded/masked last tile so awkward row
    #   counts don't fall back to a single full-size (pipeline-less) tile.
    if max_tile is None:
        max_tile = _MAX_ROW_TILE
    cap = min(max_tile, n_rows // 2)
    best, t = 0, 8
    while t <= cap:
        if n_rows % t == 0:
            best = t
        t += 8
    return best if best > 0 else n_rows


def _q_tile(n, max_tile=128):
    """Query-row tile for the attention grid (multiple of 8, divides N)."""
    cap = min(max_tile, max(8, n // 2))
    best, t = 0, 8
    while t <= cap:
        if n % t == 0:
            best = t
        t += 8
    return best if best > 0 else n


# ---------------------------------------------------------------------------
# Fused LayerNorm -> Linear (-> GELU) kernel, row-tiled, weights resident
# ---------------------------------------------------------------------------
def _ln_linear_kernel(x_ref, g_ref, b_ref, w_ref, wb_ref, o_ref, *, activation):
    x = x_ref[...].astype(jnp.float32)
    mean = jnp.mean(x, axis=-1, keepdims=True)
    var = jnp.mean(jnp.square(x - mean), axis=-1, keepdims=True)
    y = (x - mean) * jax.lax.rsqrt(var + LN_EPS)
    y = y * g_ref[...] + b_ref[...]
    acc = jnp.dot(y.astype(w_ref.dtype), w_ref[...],
                  preferred_element_type=jnp.float32)
    acc = acc + wb_ref[...]
    if activation == "gelu":
        acc = _gelu_exact(acc)
    o_ref[...] = acc.astype(o_ref.dtype)


def ln_linear(x, gamma, beta, w, b, activation=None, out_dtype=None):
    n, cin = x.shape
    cout = w.shape[1]
    if out_dtype is None:
        out_dtype = x.dtype
    tr = _row_tile(n)
    kern = functools.partial(_ln_linear_kernel, activation=activation)
    return pl.pallas_call(
        kern,
        out_shape=jax.ShapeDtypeStruct((n, cout), out_dtype),
        grid=(n // tr,),
        in_specs=[
            pl.BlockSpec((tr, cin), lambda i: (i, 0)),
            pl.BlockSpec((1, cin), lambda i: (0, 0)),
            pl.BlockSpec((1, cin), lambda i: (0, 0)),
            # TODO(synk): pipeline_mode=pl.Buffered(1) on the resident weight /
            #   bias operands, and stream cout blocks for very large dims (v7x).
            pl.BlockSpec((cin, cout), lambda i: (0, 0)),   # weight stays resident
            pl.BlockSpec((1, cout), lambda i: (0, 0)),
        ],
        out_specs=pl.BlockSpec((tr, cout), lambda i: (i, 0)),
        compiler_params=pltpu.CompilerParams(
            dimension_semantics=("parallel",), vmem_limit_bytes=_VMEM_LIMIT),
    )(x, gamma.reshape(1, cin), beta.reshape(1, cin), w, b.reshape(1, cout))


# ---------------------------------------------------------------------------
# Linear + residual-add kernel (proj / fc2), row-tiled, weights resident
# ---------------------------------------------------------------------------
def _linear_residual_kernel(x_ref, r_ref, w_ref, b_ref, o_ref):
    acc = jnp.dot(x_ref[...].astype(w_ref.dtype), w_ref[...],
                  preferred_element_type=jnp.float32)
    acc = acc + b_ref[...] + r_ref[...].astype(jnp.float32)
    o_ref[...] = acc.astype(o_ref.dtype)


def linear_residual(x, res, w, b):
    n, cin = x.shape
    cout = w.shape[1]
    tr = _row_tile(n)
    return pl.pallas_call(
        _linear_residual_kernel,
        out_shape=jax.ShapeDtypeStruct((n, cout), res.dtype),
        grid=(n // tr,),
        in_specs=[
            pl.BlockSpec((tr, cin), lambda i: (i, 0)),
            pl.BlockSpec((tr, cout), lambda i: (i, 0)),
            pl.BlockSpec((cin, cout), lambda i: (0, 0)),   # weight stays resident
            pl.BlockSpec((1, cout), lambda i: (0, 0)),
        ],
        out_specs=pl.BlockSpec((tr, cout), lambda i: (i, 0)),
        compiler_params=pltpu.CompilerParams(
            dimension_semantics=("parallel",), vmem_limit_bytes=_VMEM_LIMIT),
    )(x, res, w, b.reshape(1, cout))


# ---------------------------------------------------------------------------
# 3-D neighborhood attention: grid = (batch, q-tile); fused qkv resident per
# batch; NATTEN window mask built in-kernel from O(N) index vectors; single
# lane-dense output store per step.
# ---------------------------------------------------------------------------
def _na3d_attn_kernel(starts_ref, cols_ref, qkv_ref, o_ref, *,
                      num_heads, head_dim, q_tile, window):
    kd, kh, kw = window
    C = num_heads * head_dim

    # Clamped-center neighborhood mask for this q-tile: start = clip(i-k//2, 0, L-k).
    sd = starts_ref[:, 0:1]                              # (tq, 1) int32
    sh = starts_ref[:, 1:2]
    sw = starts_ref[:, 2:3]
    dj = cols_ref[0:1, :]                                # (1, N) int32
    hj = cols_ref[1:2, :]
    wj = cols_ref[2:3, :]
    mask = ((dj >= sd) & (dj < sd + kd)
            & (hj >= sh) & (hj < sh + kh)
            & (wj >= sw) & (wj < sw + kw))               # (tq, N) bool, VPU only

    neg = jnp.float32(-1e30)
    row0 = pl.multiple_of(pl.program_id(1) * q_tile, q_tile)

    # Heads are few -> static unroll; q/k/v are ref-sliced per head (the full
    # (N, 3C) tile is never materialized in vregs).  Per-head results are
    # concatenated and stored once, lane-dense.
    # TODO(synk): use lax.fori_loop + VMEM scratch for large num_heads.
    outs = []
    for h in range(num_heads):
        lo = h * head_dim
        q = qkv_ref[pl.ds(row0, q_tile), lo:lo + head_dim]            # (tq, hd)
        k = qkv_ref[:, C + lo:C + lo + head_dim]                      # (N,  hd)
        v = qkv_ref[:, 2 * C + lo:2 * C + lo + head_dim]              # (N,  hd)
        # head scale is pre-folded into the q columns of qkv_w / qkv_b
        s = jax.lax.dot_general(q, k, (((1,), (1,)), ((), ())),
                                preferred_element_type=jnp.float32)   # (tq, N) f32
        s = jnp.where(mask, s, neg)
        m = jnp.max(s, axis=-1, keepdims=True)
        p = jnp.exp(s - m)                                            # EUP
        denom = jnp.sum(p, axis=-1, keepdims=True)
        p = p * pl.reciprocal(denom, approx=APPROX_RECIPROCAL)        # EUP, not VALU divide
        pv = jnp.dot(p.astype(v.dtype), v,
                     preferred_element_type=jnp.float32)              # (tq, hd)
        outs.append(pv)

    # Single lane-dense store (no per-head sub-128-lane masked stores).
    o_ref[...] = jnp.concatenate(outs, axis=-1).astype(o_ref.dtype)


def neighborhood_attention(qkv, starts, cols, num_heads, head_dim, window):
    B, N, threeC = qkv.shape
    C = num_heads * head_dim
    tq = _q_tile(N)
    kern = functools.partial(_na3d_attn_kernel, num_heads=num_heads,
                             head_dim=head_dim, q_tile=tq, window=window)
    return pl.pallas_call(
        kern,
        out_shape=jax.ShapeDtypeStruct((B, N, C), qkv.dtype),
        grid=(B, N // tq),
        in_specs=[
            pl.BlockSpec((tq, 3), lambda b, qi: (qi, 0)),
            pl.BlockSpec((3, N), lambda b, qi: (0, 0)),
            # Fused qkv stays VMEM-resident per batch (constant index over the
            # q-tile axis); q rows are ref-sliced in-kernel.
            pl.BlockSpec((None, N, threeC), lambda b, qi: (b, 0, 0)),
        ],
        out_specs=pl.BlockSpec((None, tq, C), lambda b, qi: (b, qi, 0)),
        compiler_params=pltpu.CompilerParams(
            dimension_semantics=("parallel", "parallel"),
            vmem_limit_bytes=_VMEM_LIMIT),
    )(starts, cols, qkv)


def _na3d_index_tables(D, H, W, window):
    """Per-position (d,h,w) coordinates and clamped window starts (O(N) data)."""
    kd, kh, kw = window
    dd = jnp.repeat(jnp.arange(D, dtype=jnp.int32), H * W)
    hh = jnp.tile(jnp.repeat(jnp.arange(H, dtype=jnp.int32), W), D)
    ww = jnp.tile(jnp.arange(W, dtype=jnp.int32), D * H)
    starts = jnp.stack([
        jnp.clip(dd - kd // 2, 0, D - kd),
        jnp.clip(hh - kh // 2, 0, H - kh),
        jnp.clip(ww - kw // 2, 0, W - kw),
    ], axis=1)                                           # (N, 3)
    cols = jnp.stack([dd, hh, ww], axis=0)               # (3, N)
    return starts, cols


# ---------------------------------------------------------------------------
# Full block forward (matches Natten3DTransformerBlock.forward)
# ---------------------------------------------------------------------------
def natten3d_transformer_block(x, params, window_size, num_heads):
    B, D, H, W, C = x.shape
    N = D * H * W
    hd = C // num_heads
    # Guard against inverted clip bounds if a window dim exceeds its spatial dim.
    win = tuple(int(min(k, s)) for k, s in zip(window_size, (D, H, W)))

    xf = x.reshape(B * N, C)

    # ---- attention branch: (norm1 -> qkv) fused, NA3D, (proj + residual) fused ----
    qkv = ln_linear(xf, params["norm1_g"], params["norm1_b"],
                    params["qkv_w"], params["qkv_b"],
                    out_dtype=_ACT_DTYPE)                              # (B*N, 3C) bf16
    starts, cols = _na3d_index_tables(D, H, W, win)
    attn = neighborhood_attention(qkv.reshape(B, N, 3 * C), starts, cols,
                                  num_heads, hd, win)                  # (B, N, C) bf16
    x1 = linear_residual(attn.reshape(B * N, C), xf,
                         params["proj_w"], params["proj_b"])           # f32 residual 1

    # ---- MLP branch: (norm2 -> fc1 -> GELU) fused, (fc2 + residual) fused ----
    h1 = ln_linear(x1, params["norm2_g"], params["norm2_b"],
                   params["fc1_w"], params["fc1_b"], activation="gelu",
                   out_dtype=_ACT_DTYPE)                               # (B*N, hidden) bf16
    x2 = linear_residual(h1, x1, params["fc2_w"], params["fc2_b"])     # f32 residual 2

    x2 = x2.reshape(B, D, H, W, C)

    # ---- final W-axis wrap copy (matches the in-place slice assignments) ----
    # Two narrow dynamic-update-slices on the dead intermediate (in-place for
    # XLA) instead of a full-tensor concatenate.
    # TODO(synk): fold into the fc2 pallas_call via an aliased output block spec.
    wpad = window_size[2] // 2
    if wpad > 0:
        left_src = x2[:, :, :, W - 2 * wpad:W - wpad]
        right_src = x2[:, :, :, wpad:2 * wpad]
        x2 = jax.lax.dynamic_update_slice_in_dim(x2, left_src, 0, axis=3)
        x2 = jax.lax.dynamic_update_slice_in_dim(x2, right_src, W - wpad, axis=3)
    return x2


# ---------------------------------------------------------------------------
# Parameters
# ---------------------------------------------------------------------------
def init_params(key, dim, mlp_ratio):
    hidden = int(dim * mlp_ratio)
    ks = jax.random.split(key, 8)

    def w(k, shape, s=0.05):
        return jax.random.normal(k, shape, jnp.float32) * s

    return dict(
        norm1_g=jnp.ones((dim,), jnp.float32),
        norm1_b=jnp.zeros((dim,), jnp.float32),
        qkv_w=w(ks[0], (dim, 3 * dim)),
        qkv_b=w(ks[1], (3 * dim,), 0.01),
        proj_w=w(ks[2], (dim, dim)),
        proj_b=w(ks[3], (dim,), 0.01),
        norm2_g=jnp.ones((dim,), jnp.float32),
        norm2_b=jnp.zeros((dim,), jnp.float32),
        fc1_w=w(ks[4], (dim, hidden)),
        fc1_b=w(ks[5], (hidden,), 0.01),
        fc2_w=w(ks[6], (hidden, dim)),
        fc2_b=w(ks[7], (dim,), 0.01),
    )


def prepare_params(params, dim, num_heads):
    """One-time parameter transform: fold the head scale (head_dim**-0.5) into
    the q columns of the qkv projection and pre-cast matmul weights to the MXU
    operand dtype, so no per-forward weight cast / q scale is needed."""
    hd = dim // num_heads
    scale = jnp.float32(hd ** -0.5)
    qkv_w = params["qkv_w"].astype(jnp.float32).at[:, :dim].multiply(scale)
    qkv_b = params["qkv_b"].astype(jnp.float32).at[:dim].multiply(scale)
    out = dict(params)
    out["qkv_w"] = qkv_w.astype(_W_DTYPE)
    out["qkv_b"] = qkv_b
    for name in ("proj_w", "fc1_w", "fc2_w"):
        out[name] = params[name].astype(_W_DTYPE)
    return out


if __name__ == "__main__":
    B, D, H, W, C = 2, 4, 4, 8, 32
    num_heads = 4
    window_size = (3, 3, 3)
    mlp_ratio = 4.0

    key = jax.random.PRNGKey(0)
    kx, kp = jax.random.split(key)
    x = jax.random.normal(kx, (B, D, H, W, C), jnp.float32)
    params = prepare_params(init_params(kp, C, mlp_ratio), C, num_heads)

    fwd = jax.jit(functools.partial(
        natten3d_transformer_block, window_size=window_size, num_heads=num_heads))
    out = fwd(x, params)
    jax.block_until_ready(out)

    assert out.shape == (B, D, H, W, C)
    assert bool(jnp.all(jnp.isfinite(out)))
    print("KERNEL_OK")
</pallas_src>

<mosaic_0001>
module attributes {stable_mosaic.version = 11 : i64} {
  func.func @_linear_residual_kernel(%arg0: i32, %arg1: memref<128x32xbf16, #tpu.memory_space<vmem>>, %arg2: memref<128x32xf32, #tpu.memory_space<vmem>>, %arg3: memref<32x32xbf16, #tpu.memory_space<vmem>>, %arg4: memref<1x32xf32, #tpu.memory_space<vmem>>, %arg5: memref<128x32xf32, #tpu.memory_space<vmem>>) attributes {dimension_semantics = [#tpu.dimension_semantics<parallel>], iteration_bounds = array<i64: 2>, scalar_prefetch = 0 : i64, scratch_operands = 0 : i64, tpu.core_type = #tpu.core_type<tc>, window_params = [{transform_indices = @transform_0, window_bounds = array<i64: 128, 32>}, {transform_indices = @transform_1, window_bounds = array<i64: 128, 32>}, {pipeline_mode = #tpu.pipeline_mode<synchronous>, transform_indices = @transform_2, window_bounds = array<i64: 32, 32>}, {pipeline_mode = #tpu.pipeline_mode<synchronous>, transform_indices = @transform_3, window_bounds = array<i64: 1, 32>}, {transform_indices = @transform_4, window_bounds = array<i64: 128, 32>}]} {
    %c0 = arith.constant 0 : index
    %c0_0 = arith.constant 0 : index
    %0 = vector.load %arg1[%c0, %c0_0] : memref<128x32xbf16, #tpu.memory_space<vmem>>, vector<128x32xbf16>
    %c0_1 = arith.constant 0 : index
    %c0_2 = arith.constant 0 : index
    %1 = vector.load %arg3[%c0_1, %c0_2] : memref<32x32xbf16, #tpu.memory_space<vmem>>, vector<32x32xbf16>
    %cst = arith.constant dense<0.000000e+00> : vector<128x32xf32>
    %2 = tpu.matmul %0, %1, %cst {dimension_numbers = #tpu.dot_dimension_numbers<[1], [0], [0], [1], [0, 0, 1, 1], [], []>} : vector<128x32xbf16>, vector<32x32xbf16>, vector<128x32xf32> -> vector<128x32xf32>
    %c0_3 = arith.constant 0 : index
    %c0_4 = arith.constant 0 : index
    %3 = vector.load %arg4[%c0_3, %c0_4] : memref<1x32xf32, #tpu.memory_space<vmem>>, vector<1x32xf32>
    %4 = vector.broadcast %3 : vector<1x32xf32> to vector<128x32xf32>
    %5 = arith.addf %2, %4 : vector<128x32xf32>
    %c0_5 = arith.constant 0 : index
    %c0_6 = arith.constant 0 : index
    %6 = vector.load %arg2[%c0_5, %c0_6] : memref<128x32xf32, #tpu.memory_space<vmem>>, vector<128x32xf32>
    %7 = arith.addf %5, %6 : vector<128x32xf32>
    %c0_7 = arith.constant 0 : index
    %c0_8 = arith.constant 0 : index
    %8 = vector.load %arg5[%c0_7, %c0_8] : memref<128x32xf32, #tpu.memory_space<vmem>>, vector<128x32xf32>
    tpu.vector_store %arg5[%c0_7, %c0_8], %7 {strides = array<i32>} : memref<128x32xf32, #tpu.memory_space<vmem>>, vector<128x32xf32>,
    return
  }
  func.func @transform_0(%arg0: i32) -> (i32, i32) {
    %c0_i32 = arith.constant 0 : i32
    %c0_i32_0 = arith.constant 0 : i32
    return %arg0, %c0_i32 : i32, i32
  }
  func.func @transform_1(%arg0: i32) -> (i32, i32) {
    %c0_i32 = arith.constant 0 : i32
    %c0_i32_0 = arith.constant 0 : i32
    return %arg0, %c0_i32 : i32, i32
  }
  func.func @transform_2(%arg0: i32) -> (i32, i32) {
    %c0_i32 = arith.constant 0 : i32
    %c0_i32_0 = arith.constant 0 : i32
    %c0_i32_1 = arith.constant 0 : i32
    return %c0_i32, %c0_i32_0 : i32, i32
  }
  func.func @transform_3(%arg0: i32) -> (i32, i32) {
    %c0_i32 = arith.constant 0 : i32
    %c0_i32_0 = arith.constant 0 : i32
    %c0_i32_1 = arith.constant 0 : i32
    return %c0_i32, %c0_i32_0 : i32, i32
  }
  func.func @transform_4(%arg0: i32) -> (i32, i32) {
    %c0_i32 = arith.constant 0 : i32
    %c0_i32_0 = arith.constant 0 : i32
    return %arg0, %c0_i32 : i32, i32
  }
}

module attributes {stable_mosaic.version = 11 : i64} {
  func.func @_ln_linear_kernel(%arg0: i32, %arg1: memref<128x32xf32, #tpu.memory_space<vmem>>, %arg2: memref<1x32xf32, #tpu.memory_space<vmem>>, %arg3: memref<1x32xf32, #tpu.memory_space<vmem>>, %arg4: memref<32x96xbf16, #tpu.memory_space<vmem>>, %arg5: memref<1x96xf32, #tpu.memory_space<vmem>>, %arg6: memref<128x96xbf16, #tpu.memory_space<vmem>>) attributes {dimension_semantics = [#tpu.dimension_semantics<parallel>], iteration_bounds = array<i64: 2>, scalar_prefetch = 0 : i64, scratch_operands = 0 : i64, tpu.core_type = #tpu.core_type<tc>, window_params = [{transform_indices = @transform_0, window_bounds = array<i64: 128, 32>}, {pipeline_mode = #tpu.pipeline_mode<synchronous>, transform_indices = @transform_1, window_bounds = array<i64: 1, 32>}, {pipeline_mode = #tpu.pipeline_mode<synchronous>, transform_indices = @transform_2, window_bounds = array<i64: 1, 32>}, {pipeline_mode = #tpu.pipeline_mode<synchronous>, transform_indices = @transform_3, window_bounds = array<i64: 32, 96>}, {pipeline_mode = #tpu.pipeline_mode<synchronous>, transform_indices = @transform_4, window_bounds = array<i64: 1, 96>}, {transform_indices = @transform_5, window_bounds = array<i64: 128, 96>}]} {
    %c0 = arith.constant 0 : index
    %c0_0 = arith.constant 0 : index
    %0 = vector.load %arg1[%c0, %c0_0] : memref<128x32xf32, #tpu.memory_space<vmem>>, vector<128x32xf32>
    %cst = arith.constant dense<0.000000e+00> : vector<128xf32>
    %1 = vector.multi_reduction <add>, %0, %cst [1] : vector<128x32xf32> to vector<128xf32>
    %2 = vector.shape_cast %1 : vector<128xf32> to vector<128x1xf32>
    %cst_1 = arith.constant 3.200000e+01 : f32
    %3 = vector.broadcast %cst_1 : f32 to vector<128x1xf32>
    %4 = arith.divf %2, %3 : vector<128x1xf32>
    %5 = vector.broadcast %4 : vector<128x1xf32> to vector<128x32xf32>
    %6 = arith.subf %0, %5 : vector<128x32xf32>
    %7 = arith.mulf %6, %6 : vector<128x32xf32>
    %cst_2 = arith.constant dense<0.000000e+00> : vector<128xf32>
    %8 = vector.multi_reduction <add>, %7, %cst_2 [1] : vector<128x32xf32> to vector<128xf32>
    %9 = vector.shape_cast %8 : vector<128xf32> to vector<128x1xf32>
    %cst_3 = arith.constant 3.200000e+01 : f32
    %10 = vector.broadcast %cst_3 : f32 to vector<128x1xf32>
    %11 = arith.divf %9, %10 : vector<128x1xf32>
    %12 = vector.broadcast %4 : vector<128x1xf32> to vector<128x32xf32>
    %13 = arith.subf %0, %12 : vector<128x32xf32>
    %cst_4 = arith.constant 9.99999974E-6 : f32
    %14 = vector.broadcast %cst_4 : f32 to vector<128x1xf32>
    %15 = arith.addf %11, %14 : vector<128x1xf32>
    %16 = math.rsqrt %15 : vector<128x1xf32>
    %17 = vector.broadcast %16 : vector<128x1xf32> to vector<128x32xf32>
    %18 = arith.mulf %13, %17 : vector<128x32xf32>
    %c0_5 = arith.constant 0 : index
    %c0_6 = arith.constant 0 : index
    %19 = vector.load %arg2[%c0_5, %c0_6] : memref<1x32xf32, #tpu.memory_space<vmem>>, vector<1x32xf32>
    %20 = vector.broadcast %19 : vector<1x32xf32> to vector<128x32xf32>
    %21 = arith.mulf %18, %20 : vector<128x32xf32>
    %c0_7 = arith.constant 0 : index
    %c0_8 = arith.constant 0 : index
    %22 = vector.load %arg3[%c0_7, %c0_8] : memref<1x32xf32, #tpu.memory_space<vmem>>, vector<1x32xf32>
    %23 = vector.broadcast %22 : vector<1x32xf32> to vector<128x32xf32>
    %24 = arith.addf %21, %23 : vector<128x32xf32>
    %25 = arith.truncf %24 : vector<128x32xf32> to vector<128x32xbf16>
    %c0_9 = arith.constant 0 : index
    %c0_10 = arith.constant 0 : index
    %26 = vector.load %arg4[%c0_9, %c0_10] : memref<32x96xbf16, #tpu.memory_space<vmem>>, vector<32x96xbf16>
    %cst_11 = arith.constant dense<0.000000e+00> : vector<128x96xf32>
    %27 = tpu.matmul %25, %26, %cst_11 {dimension_numbers = #tpu.dot_dimension_numbers<[1], [0], [0], [1], [0, 0, 1, 1], [], []>} : vector<128x32xbf16>, vector<32x96xbf16>, vector<128x96xf32> -> vector<128x96xf32>
    %c0_12 = arith.constant 0 : index
    %c0_13 = arith.constant 0 : index
    %28 = vector.load %arg5[%c0_12, %c0_13] : memref<1x96xf32, #tpu.memory_space<vmem>>, vector<1x96xf32>
    %29 = vector.broadcast %28 : vector<1x96xf32> to vector<128x96xf32>
    %30 = arith.addf %27, %29 : vector<128x96xf32>
    %31 = arith.truncf %30 : vector<128x96xf32> to vector<128x96xbf16>
    %c0_14 = arith.constant 0 : index
    %c0_15 = arith.constant 0 : index
    %32 = vector.load %arg6[%c0_14, %c0_15] : memref<128x96xbf16, #tpu.memory_space<vmem>>, vector<128x96xbf16>
    tpu.vector_store %arg6[%c0_14, %c0_15], %31 {strides = array<i32>} : memref<128x96xbf16, #tpu.memory_space<vmem>>, vector<128x96xbf16>,
    return
  }
  func.func @transform_0(%arg0: i32) -> (i32, i32) {
    %c0_i32 = arith.constant 0 : i32
    %c0_i32_0 = arith.constant 0 : i32
    return %arg0, %c0_i32 : i32, i32
  }
  func.func @transform_1(%arg0: i32) -> (i32, i32) {
    %c0_i32 = arith.constant 0 : i32
    %c0_i32_0 = arith.constant 0 : i32
    %c0_i32_1 = arith.constant 0 : i32
    return %c0_i32, %c0_i32_0 : i32, i32
  }
  func.func @transform_2(%arg0: i32) -> (i32, i32) {
    %c0_i32 = arith.constant 0 : i32
    %c0_i32_0 = arith.constant 0 : i32
    %c0_i32_1 = arith.constant 0 : i32
    return %c0_i32, %c0_i32_0 : i32, i32
  }
  func.func @transform_3(%arg0: i32) -> (i32, i32) {
    %c0_i32 = arith.constant 0 : i32
    %c0_i32_0 = arith.constant 0 : i32
    %c0_i32_1 = arith.constant 0 : i32
    return %c0_i32, %c0_i32_0 : i32, i32
  }
  func.func @transform_4(%arg0: i32) -> (i32, i32) {
    %c0_i32 = arith.constant 0 : i32
    %c0_i32_0 = arith.constant 0 : i32
    %c0_i32_1 = arith.constant 0 : i32
    return %c0_i32, %c0_i32_0 : i32, i32
  }
  func.func @transform_5(%arg0: i32) -> (i32, i32) {
    %c0_i32 = arith.constant 0 : i32
    %c0_i32_0 = arith.constant 0 : i32
    return %arg0, %c0_i32 : i32, i32
  }
}

module attributes {stable_mosaic.version = 11 : i64} {
  func.func @_na3d_attn_kernel(%arg0: i32, %arg1: i32, %arg2: memref<64x3xi32, #tpu.memory_space<vmem>>, %arg3: memref<3x128xi32, #tpu.memory_space<vmem>>, %arg4: memref<1x128x96xbf16, #tpu.memory_space<vmem>>, %arg5: memref<1x64x32xbf16, #tpu.memory_space<vmem>>) attributes {dimension_semantics = [#tpu.dimension_semantics<parallel>, #tpu.dimension_semantics<parallel>], iteration_bounds = array<i64: 2, 2>, scalar_prefetch = 0 : i64, scratch_operands = 0 : i64, tpu.core_type = #tpu.core_type<tc>, window_params = [{transform_indices = @transform_0, window_bounds = array<i64: 64, 3>}, {pipeline_mode = #tpu.pipeline_mode<synchronous>, transform_indices = @transform_1, window_bounds = array<i64: 3, 128>}, {transform_indices = @transform_2, window_bounds = array<i64: 1, 128, 96>}, {transform_indices = @transform_3, window_bounds = array<i64: 1, 64, 32>}]} {
    %c0 = arith.constant 0 : index
    %c0_0 = arith.constant 0 : index
    %0 = vector.load %arg2[%c0, %c0_0] : memref<64x3xi32, #tpu.memory_space<vmem>>, vector<64x1xi32>
    %c0_1 = arith.constant 0 : index
    %c1 = arith.constant 1 : index
    %1 = vector.load %arg2[%c0_1, %c1] : memref<64x3xi32, #tpu.memory_space<vmem>>, vector<64x1xi32>
    %c0_2 = arith.constant 0 : index
    %c2 = arith.constant 2 : index
    %2 = vector.load %arg2[%c0_2, %c2] : memref<64x3xi32, #tpu.memory_space<vmem>>, vector<64x1xi32>
    %c0_3 = arith.constant 0 : index
    %c0_4 = arith.constant 0 : index
    %3 = vector.load %arg3[%c0_3, %c0_4] : memref<3x128xi32, #tpu.memory_space<vmem>>, vector<1x128xi32>
    %c1_5 = arith.constant 1 : index
    %c0_6 = arith.constant 0 : index
    %4 = vector.load %arg3[%c1_5, %c0_6] : memref<3x128xi32, #tpu.memory_space<vmem>>, vector<1x128xi32>
    %c2_7 = arith.constant 2 : index
    %c0_8 = arith.constant 0 : index
    %5 = vector.load %arg3[%c2_7, %c0_8] : memref<3x128xi32, #tpu.memory_space<vmem>>, vector<1x128xi32>
    %6 = vector.broadcast %3 : vector<1x128xi32> to vector<64x128xi32>
    %7 = vector.broadcast %0 : vector<64x1xi32> to vector<64x128xi32>
    %8 = arith.cmpi sge, %6, %7 : vector<64x128xi32>
    %c3_i32 = arith.constant 3 : i32
    %9 = vector.broadcast %c3_i32 : i32 to vector<64x1xi32>
    %10 = arith.addi %0, %9 : vector<64x1xi32>
    %11 = vector.broadcast %3 : vector<1x128xi32> to vector<64x128xi32>
    %12 = vector.broadcast %10 : vector<64x1xi32> to vector<64x128xi32>
    %13 = arith.cmpi slt, %11, %12 : vector<64x128xi32>
    %14 = arith.andi %8, %13 : vector<64x128xi1>
    %15 = vector.broadcast %4 : vector<1x128xi32> to vector<64x128xi32>
    %16 = vector.broadcast %1 : vector<64x1xi32> to vector<64x128xi32>
    %17 = arith.cmpi sge, %15, %16 : vector<64x128xi32>
    %18 = arith.andi %14, %17 : vector<64x128xi1>
    %c3_i32_9 = arith.constant 3 : i32
    %19 = vector.broadcast %c3_i32_9 : i32 to vector<64x1xi32>
    %20 = arith.addi %1, %19 : vector<64x1xi32>
    %21 = vector.broadcast %4 : vector<1x128xi32> to vector<64x128xi32>
    %22 = vector.broadcast %20 : vector<64x1xi32> to vector<64x128xi32>
    %23 = arith.cmpi slt, %21, %22 : vector<64x128xi32>
    %24 = arith.andi %18, %23 : vector<64x128xi1>
    %25 = vector.broadcast %5 : vector<1x128xi32> to vector<64x128xi32>
    %26 = vector.broadcast %2 : vector<64x1xi32> to vector<64x128xi32>
    %27 = arith.cmpi sge, %25, %26 : vector<64x128xi32>
    %28 = arith.andi %24, %27 : vector<64x128xi1>
    %c3_i32_10 = arith.constant 3 : i32
    %29 = vector.broadcast %c3_i32_10 : i32 to vector<64x1xi32>
    %30 = arith.addi %2, %29 : vector<64x1xi32>
    %31 = vector.broadcast %5 : vector<1x128xi32> to vector<64x128xi32>
    %32 = vector.broadcast %30 : vector<64x1xi32> to vector<64x128xi32>
    %33 = arith.cmpi slt, %31, %32 : vector<64x128xi32>
    %34 = arith.andi %28, %33 : vector<64x128xi1>
    %c64_i32 = arith.constant 64 : i32
    %35 = arith.muli %arg1, %c64_i32 : i32
    %36 = tpu.assume_multiple %35, 64 : i32
    %c0_11 = arith.constant 0 : index
    %37 = arith.index_cast %36 : i32 to index
    %c0_12 = arith.constant 0 : index
    %38 = vector.load %arg4[%c0_11, %37, %c0_12] : memref<1x128x96xbf16, #tpu.memory_space<vmem>>, vector<1x64x8xbf16>
    %39 = vector.shape_cast %38 : vector<1x64x8xbf16> to vector<64x8xbf16>
    %c0_13 = arith.constant 0 : index
    %c0_14 = arith.constant 0 : index
    %c32 = arith.constant 32 : index
    %40 = vector.load %arg4[%c0_13, %c0_14, %c32] : memref<1x128x96xbf16, #tpu.memory_space<vmem>>, vector<1x128x8xbf16>
    %41 = vector.shape_cast %40 : vector<1x128x8xbf16> to vector<128x8xbf16>
    %c0_15 = arith.constant 0 : index
    %c0_16 = arith.constant 0 : index
    %c64 = arith.constant 64 : index
    %42 = vector.load %arg4[%c0_15, %c0_16, %c64] : memref<1x128x96xbf16, #tpu.memory_space<vmem>>, vector<1x128x8xbf16>
    %43 = vector.shape_cast %42 : vector<1x128x8xbf16> to vector<128x8xbf16>
    %cst = arith.constant dense<0.000000e+00> : vector<64x128xf32>
    %44 = tpu.matmul %39, %41, %cst {dimension_numbers = #tpu.dot_dimension_numbers<[1], [1], [0], [0], [0, 0, 1, 0], [], []>} : vector<64x8xbf16>, vector<128x8xbf16>, vector<64x128xf32> -> vector<64x128xf32>
    %cst_17 = arith.constant -1.000000e+30 : f32
    %45 = vector.broadcast %cst_17 : f32 to vector<64x128xf32>
    %46 = arith.select %34, %44, %45 : vector<64x128xi1>, vector<64x128xf32>
    %cst_18 = arith.constant dense<0xFF800000> : vector<64xf32>
    %47 = vector.multi_reduction <maximumf>, %46, %cst_18 [1] : vector<64x128xf32> to vector<64xf32>
    %48 = vector.shape_cast %47 : vector<64xf32> to vector<64x1xf32>
    %49 = vector.broadcast %48 : vector<64x1xf32> to vector<64x128xf32>
    %50 = arith.subf %46, %49 : vector<64x128xf32>
    %51 = math.exp %50 : vector<64x128xf32>
    %cst_19 = arith.constant dense<0.000000e+00> : vector<64xf32>
    %52 = vector.multi_reduction <add>, %51, %cst_19 [1] : vector<64x128xf32> to vector<64xf32>
    %53 = vector.shape_cast %52 : vector<64xf32> to vector<64x1xf32>
    %54 = tpu.reciprocal %53 {approx = true} : vector<64x1xf32> -> vector<64x1xf32>
    %55 = vector.broadcast %54 : vector<64x1xf32> to vector<64x128xf32>
    %56 = arith.mulf %51, %55 : vector<64x128xf32>
    %57 = arith.truncf %56 : vector<64x128xf32> to vector<64x128xbf16>
    %cst_20 = arith.constant dense<0.000000e+00> : vector<64x8xf32>
    %58 = tpu.matmul %57, %43, %cst_20 {dimension_numbers = #tpu.dot_dimension_numbers<[1], [0], [0], [1], [0, 0, 1, 1], [], []>} : vector<64x128xbf16>, vector<128x8xbf16>, vector<64x8xf32> -> vector<64x8xf32>
    %c0_21 = arith.constant 0 : index
    %59 = arith.index_cast %36 : i32 to index
    %c8 = arith.constant 8 : index
    %60 = vector.load %arg4[%c0_21, %59, %c8] : memref<1x128x96xbf16, #tpu.memory_space<vmem>>, vector<1x64x8xbf16>
    %61 = vector.shape_cast %60 : vector<1x64x8xbf16> to vector<64x8xbf16>
    %c0_22 = arith.constant 0 : index
    %c0_23 = arith.constant 0 : index
    %c40 = arith.constant 40 : index
    %62 = vector.load %arg4[%c0_22, %c0_23, %c40] : memref<1x128x96xbf16, #tpu.memory_space<vmem>>, vector<1x128x8xbf16>
    %63 = vector.shape_cast %62 : vector<1x128x8xbf16> to vector<128x8xbf16>
    %c0_24 = arith.constant 0 : index
    %c0_25 = arith.constant 0 : index
    %c72 = arith.constant 72 : index
    %64 = vector.load %arg4[%c0_24, %c0_25, %c72] : memref<1x128x96xbf16, #tpu.memory_space<vmem>>, vector<1x128x8xbf16>
    %65 = vector.shape_cast %64 : vector<1x128x8xbf16> to vector<128x8xbf16>
    %cst_26 = arith.constant dense<0.000000e+00> : vector<64x128xf32>
    %66 = tpu.matmul %61, %63, %cst_26 {dimension_numbers = #tpu.dot_dimension_numbers<[1], [1], [0], [0], [0, 0, 1, 0], [], []>} : vector<64x8xbf16>, vector<128x8xbf16>, vector<64x128xf32> -> vector<64x128xf32>
    %cst_27 = arith.constant -1.000000e+30 : f32
    %67 = vector.broadcast %cst_27 : f32 to vector<64x128xf32>
    %68 = arith.select %34, %66, %67 : vector<64x128xi1>, vector<64x128xf32>
    %cst_28 = arith.constant dense<0xFF800000> : vector<64xf32>
    %69 = vector.multi_reduction <maximumf>, %68, %cst_28 [1] : vector<64x128xf32> to vector<64xf32>
    %70 = vector.shape_cast %69 : vector<64xf32> to vector<64x1xf32>
    %71 = vector.broadcast %70 : vector<64x1xf32> to vector<64x128xf32>
    %72 = arith.subf %68, %71 : vector<64x128xf32>
    %73 = math.exp %72 : vector<64x128xf32>
    %cst_29 = arith.constant dense<0.000000e+00> : vector<64xf32>
    %74 = vector.multi_reduction <add>, %73, %cst_29 [1] : vector<64x128xf32> to vector<64xf32>
    %75 = vector.shape_cast %74 : vector<64xf32> to vector<64x1xf32>
    %76 = tpu.reciprocal %75 {approx = true} : vector<64x1xf32> -> vector<64x1xf32>
    %77 = vector.broadcast %76 : vector<64x1xf32> to vector<64x128xf32>
    %78 = arith.mulf %73, %77 : vector<64x128xf32>
    %79 = arith.truncf %78 : vector<64x128xf32> to vector<64x128xbf16>
    %cst_30 = arith.constant dense<0.000000e+00> : vector<64x8xf32>
    %80 = tpu.matmul %79, %65, %cst_30 {dimension_numbers = #tpu.dot_dimension_numbers<[1], [0], [0], [1], [0, 0, 1, 1], [], []>} : vector<64x128xbf16>, vector<128x8xbf16>, vector<64x8xf32> -> vector<64x8xf32>
    %c0_31 = arith.constant 0 : index
    %81 = arith.index_cast %36 : i32 to index
    %c16 = arith.constant 16 : index
    %82 = vector.load %arg4[%c0_31, %81, %c16] : memref<1x128x96xbf16, #tpu.memory_space<vmem>>, vector<1x64x8xbf16>
    %83 = vector.shape_cast %82 : vector<1x64x8xbf16> to vector<64x8xbf16>
    %c0_32 = arith.constant 0 : index
    %c0_33 = arith.constant 0 : index
    %c48 = arith.constant 48 : index
    %84 = vector.load %arg4[%c0_32, %c0_33, %c48] : memref<1x128x96xbf16, #tpu.memory_space<vmem>>, vector<1x128x8xbf16>
    %85 = vector.shape_cast %84 : vector<1x128x8xbf16> to vector<128x8xbf16>
    %c0_34 = arith.constant 0 : index
    %c0_35 = arith.constant 0 : index
    %c80 = arith.constant 80 : index
    %86 = vector.load %arg4[%c0_34, %c0_35, %c80] : memref<1x128x96xbf16, #tpu.memory_space<vmem>>, vector<1x128x8xbf16>
    %87 = vector.shape_cast %86 : vector<1x128x8xbf16> to vector<128x8xbf16>
    %cst_36 = arith.constant dense<0.000000e+00> : vector<64x128xf32>
    %88 = tpu.matmul %83, %85, %cst_36 {dimension_numbers = #tpu.dot_dimension_numbers<[1], [1], [0], [0], [0, 0, 1, 0], [], []>} : vector<64x8xbf16>, vector<128x8xbf16>, vector<64x128xf32> -> vector<64x128xf32>
    %cst_37 = arith.constant -1.000000e+30 : f32
    %89 = vector.broadcast %cst_37 : f32 to vector<64x128xf32>
    %90 = arith.select %34, %88, %89 : vector<64x128xi1>, vector<64x128xf32>
    %cst_38 = arith.constant dense<0xFF800000> : vector<64xf32>
    %91 = vector.multi_reduction <maximumf>, %90, %cst_38 [1] : vector<64x128xf32> to vector<64xf32>
    %92 = vector.shape_cast %91 : vector<64xf32> to vector<64x1xf32>
    %93 = vector.broadcast %92 : vector<64x1xf32> to vector<64x128xf32>
    %94 = arith.subf %90, %93 : vector<64x128xf32>
    %95 = math.exp %94 : vector<64x128xf32>
    %cst_39 = arith.constant dense<0.000000e+00> : vector<64xf32>
    %96 = vector.multi_reduction <add>, %95, %cst_39 [1] : vector<64x128xf32> to vector<64xf32>
    %97 = vector.shape_cast %96 : vector<64xf32> to vector<64x1xf32>
    %98 = tpu.reciprocal %97 {approx = true} : vector<64x1xf32> -> vector<64x1xf32>
    %99 = vector.broadcast %98 : vector<64x1xf32> to vector<64x128xf32>
    %100 = arith.mulf %95, %99 : vector<64x128xf32>
    %101 = arith.truncf %100 : vector<64x128xf32> to vector<64x128xbf16>
    %cst_40 = arith.constant dense<0.000000e+00> : vector<64x8xf32>
    %102 = tpu.matmul %101, %87, %cst_40 {dimension_numbers = #tpu.dot_dimension_numbers<[1], [0], [0], [1], [0, 0, 1, 1], [], []>} : vector<64x128xbf16>, vector<128x8xbf16>, vector<64x8xf32> -> vector<64x8xf32>
    %c0_41 = arith.constant 0 : index
    %103 = arith.index_cast %36 : i32 to index
    %c24 = arith.constant 24 : index
    %104 = vector.load %arg4[%c0_41, %103, %c24] : memref<1x128x96xbf16, #tpu.memory_space<vmem>>, vector<1x64x8xbf16>
    %105 = vector.shape_cast %104 : vector<1x64x8xbf16> to vector<64x8xbf16>
    %c0_42 = arith.constant 0 : index
    %c0_43 = arith.constant 0 : index
    %c56 = arith.constant 56 : index
    %106 = vector.load %arg4[%c0_42, %c0_43, %c56] : memref<1x128x96xbf16, #tpu.memory_space<vmem>>, vector<1x128x8xbf16>
    %107 = vector.shape_cast %106 : vector<1x128x8xbf16> to vector<128x8xbf16>
    %c0_44 = arith.constant 0 : index
    %c0_45 = arith.constant 0 : index
    %c88 = arith.constant 88 : index
    %108 = vector.load %arg4[%c0_44, %c0_45, %c88] : memref<1x128x96xbf16, #tpu.memory_space<vmem>>, vector<1x128x8xbf16>
    %109 = vector.shape_cast %108 : vector<1x128x8xbf16> to vector<128x8xbf16>
    %cst_46 = arith.constant dense<0.000000e+00> : vector<64x128xf32>
    %110 = tpu.matmul %105, %107, %cst_46 {dimension_numbers = #tpu.dot_dimension_numbers<[1], [1], [0], [0], [0, 0, 1, 0], [], []>} : vector<64x8xbf16>, vector<128x8xbf16>, vector<64x128xf32> -> vector<64x128xf32>
    %cst_47 = arith.constant -1.000000e+30 : f32
    %111 = vector.broadcast %cst_47 : f32 to vector<64x128xf32>
    %112 = arith.select %34, %110, %111 : vector<64x128xi1>, vector<64x128xf32>
    %cst_48 = arith.constant dense<0xFF800000> : vector<64xf32>
    %113 = vector.multi_reduction <maximumf>, %112, %cst_48 [1] : vector<64x128xf32> to vector<64xf32>
    %114 = vector.shape_cast %113 : vector<64xf32> to vector<64x1xf32>
    %115 = vector.broadcast %114 : vector<64x1xf32> to vector<64x128xf32>
    %116 = arith.subf %112, %115 : vector<64x128xf32>
    %117 = math.exp %116 : vector<64x128xf32>
    %cst_49 = arith.constant dense<0.000000e+00> : vector<64xf32>
    %118 = vector.multi_reduction <add>, %117, %cst_49 [1] : vector<64x128xf32> to vector<64xf32>
    %119 = vector.shape_cast %118 : vector<64xf32> to vector<64x1xf32>
    %120 = tpu.reciprocal %119 {approx = true} : vector<64x1xf32> -> vector<64x1xf32>
    %121 = vector.broadcast %120 : vector<64x1xf32> to vector<64x128xf32>
    %122 = arith.mulf %117, %121 : vector<64x128xf32>
    %123 = arith.truncf %122 : vector<64x128xf32> to vector<64x128xbf16>
    %cst_50 = arith.constant dense<0.000000e+00> : vector<64x8xf32>
    %124 = tpu.matmul %123, %109, %cst_50 {dimension_numbers = #tpu.dot_dimension_numbers<[1], [0], [0], [1], [0, 0, 1, 1], [], []>} : vector<64x128xbf16>, vector<128x8xbf16>, vector<64x8xf32> -> vector<64x8xf32>
    %125 = tpu.concatenate %58, %80, %102, %124 in 1 : vector<64x8xf32>, vector<64x8xf32>, vector<64x8xf32>, vector<64x8xf32> -> vector<64x32xf32>
    %126 = arith.truncf %125 : vector<64x32xf32> to vector<64x32xbf16>
    %c0_51 = arith.constant 0 : index
    %c0_52 = arith.constant 0 : index
    %c0_53 = arith.constant 0 : index
    %127 = vector.load %arg5[%c0_51, %c0_52, %c0_53] : memref<1x64x32xbf16, #tpu.memory_space<vmem>>, vector<1x64x32xbf16>
    %128 = vector.shape_cast %127 : vector<1x64x32xbf16> to vector<64x32xbf16>
    %129 = vector.shape_cast %126 : vector<64x32xbf16> to vector<1x64x32xbf16>
    tpu.vector_store %arg5[%c0_51, %c0_52, %c0_53], %129 {strides = array<i32>} : memref<1x64x32xbf16, #tpu.memory_space<vmem>>, vector<1x64x32xbf16>,
    return
  }
  func.func @transform_0(%arg0: i32, %arg1: i32) -> (i32, i32) {
    %c0_i32 = arith.constant 0 : i32
    %c0_i32_0 = arith.constant 0 : i32
    return %arg1, %c0_i32 : i32, i32
  }
  func.func @transform_1(%arg0: i32, %arg1: i32) -> (i32, i32) {
    %c0_i32 = arith.constant 0 : i32
    %c0_i32_0 = arith.constant 0 : i32
    %c0_i32_1 = arith.constant 0 : i32
    return %c0_i32, %c0_i32_0 : i32, i32
  }
  func.func @transform_2(%arg0: i32, %arg1: i32) -> (i32, i32, i32) {
    %c0_i32 = arith.constant 0 : i32
    %c0_i32_0 = arith.constant 0 : i32
    %c0_i32_1 = arith.constant 0 : i32
    return %arg0, %c0_i32, %c0_i32_0 : i32, i32, i32
  }
  func.func @transform_3(%arg0: i32, %arg1: i32) -> (i32, i32, i32) {
    %c0_i32 = arith.constant 0 : i32
    %c0_i32_0 = arith.constant 0 : i32
    return %arg0, %arg1, %c0_i32 : i32, i32, i32
  }
}

module attributes {stable_mosaic.version = 11 : i64} {
  func.func @_ln_linear_kernel(%arg0: i32, %arg1: memref<128x32xf32, #tpu.memory_space<vmem>>, %arg2: memref<1x32xf32, #tpu.memory_space<vmem>>, %arg3: memref<1x32xf32, #tpu.memory_space<vmem>>, %arg4: memref<32x128xbf16, #tpu.memory_space<vmem>>, %arg5: memref<1x128xf32, #tpu.memory_space<vmem>>, %arg6: memref<128x128xbf16, #tpu.memory_space<vmem>>) attributes {dimension_semantics = [#tpu.dimension_semantics<parallel>], iteration_bounds = array<i64: 2>, scalar_prefetch = 0 : i64, scratch_operands = 0 : i64, tpu.core_type = #tpu.core_type<tc>, window_params = [{transform_indices = @transform_0, window_bounds = array<i64: 128, 32>}, {pipeline_mode = #tpu.pipeline_mode<synchronous>, transform_indices = @transform_1, window_bounds = array<i64: 1, 32>}, {pipeline_mode = #tpu.pipeline_mode<synchronous>, transform_indices = @transform_2, window_bounds = array<i64: 1, 32>}, {pipeline_mode = #tpu.pipeline_mode<synchronous>, transform_indices = @transform_3, window_bounds = array<i64: 32, 128>}, {pipeline_mode = #tpu.pipeline_mode<synchronous>, transform_indices = @transform_4, window_bounds = array<i64: 1, 128>}, {transform_indices = @transform_5, window_bounds = array<i64: 128, 128>}]} {
    %c0 = arith.constant 0 : index
    %c0_0 = arith.constant 0 : index
    %0 = vector.load %arg1[%c0, %c0_0] : memref<128x32xf32, #tpu.memory_space<vmem>>, vector<128x32xf32>
    %cst = arith.constant dense<0.000000e+00> : vector<128xf32>
    %1 = vector.multi_reduction <add>, %0, %cst [1] : vector<128x32xf32> to vector<128xf32>
    %2 = vector.shape_cast %1 : vector<128xf32> to vector<128x1xf32>
    %cst_1 = arith.constant 3.200000e+01 : f32
    %3 = vector.broadcast %cst_1 : f32 to vector<128x1xf32>
    %4 = arith.divf %2, %3 : vector<128x1xf32>
    %5 = vector.broadcast %4 : vector<128x1xf32> to vector<128x32xf32>
    %6 = arith.subf %0, %5 : vector<128x32xf32>
    %7 = arith.mulf %6, %6 : vector<128x32xf32>
    %cst_2 = arith.constant dense<0.000000e+00> : vector<128xf32>
    %8 = vector.multi_reduction <add>, %7, %cst_2 [1] : vector<128x32xf32> to vector<128xf32>
    %9 = vector.shape_cast %8 : vector<128xf32> to vector<128x1xf32>
    %cst_3 = arith.constant 3.200000e+01 : f32
    %10 = vector.broadcast %cst_3 : f32 to vector<128x1xf32>
    %11 = arith.divf %9, %10 : vector<128x1xf32>
    %12 = vector.broadcast %4 : vector<128x1xf32> to vector<128x32xf32>
    %13 = arith.subf %0, %12 : vector<128x32xf32>
    %cst_4 = arith.constant 9.99999974E-6 : f32
    %14 = vector.broadcast %cst_4 : f32 to vector<128x1xf32>
    %15 = arith.addf %11, %14 : vector<128x1xf32>
    %16 = math.rsqrt %15 : vector<128x1xf32>
    %17 = vector.broadcast %16 : vector<128x1xf32> to vector<128x32xf32>
    %18 = arith.mulf %13, %17 : vector<128x32xf32>
    %c0_5 = arith.constant 0 : index
    %c0_6 = arith.constant 0 : index
    %19 = vector.load %arg2[%c0_5, %c0_6] : memref<1x32xf32, #tpu.memory_space<vmem>>, vector<1x32xf32>
    %20 = vector.broadcast %19 : vector<1x32xf32> to vector<128x32xf32>
    %21 = arith.mulf %18, %20 : vector<128x32xf32>
    %c0_7 = arith.constant 0 : index
    %c0_8 = arith.constant 0 : index
    %22 = vector.load %arg3[%c0_7, %c0_8] : memref<1x32xf32, #tpu.memory_space<vmem>>, vector<1x32xf32>
    %23 = vector.broadcast %22 : vector<1x32xf32> to vector<128x32xf32>
    %24 = arith.addf %21, %23 : vector<128x32xf32>
    %25 = arith.truncf %24 : vector<128x32xf32> to vector<128x32xbf16>
    %c0_9 = arith.constant 0 : index
    %c0_10 = arith.constant 0 : index
    %26 = vector.load %arg4[%c0_9, %c0_10] : memref<32x128xbf16, #tpu.memory_space<vmem>>, vector<32x128xbf16>
    %cst_11 = arith.constant dense<0.000000e+00> : vector<128x128xf32>
    %27 = tpu.matmul %25, %26, %cst_11 {dimension_numbers = #tpu.dot_dimension_numbers<[1], [0], [0], [1], [0, 0, 1, 1], [], []>} : vector<128x32xbf16>, vector<32x128xbf16>, vector<128x128xf32> -> vector<128x128xf32>
    %c0_12 = arith.constant 0 : index
    %c0_13 = arith.constant 0 : index
    %28 = vector.load %arg5[%c0_12, %c0_13] : memref<1x128xf32, #tpu.memory_space<vmem>>, vector<1x128xf32>
    %29 = vector.broadcast %28 : vector<1x128xf32> to vector<128x128xf32>
    %30 = arith.addf %27, %29 : vector<128x128xf32>
    %cst_14 = arith.constant 5.000000e-01 : f32
    %31 = vector.broadcast %cst_14 : f32 to vector<128x128xf32>
    %32 = arith.mulf %31, %30 : vector<128x128xf32>
    %cst_15 = arith.constant 0.707106769 : f32
    %33 = vector.broadcast %cst_15 : f32 to vector<128x128xf32>
    %34 = arith.mulf %30, %33 : vector<128x128xf32>
    %35 = math.absf %34 : vector<128x128xf32>
    %cst_16 = arith.constant 0.327591091 : f32
    %36 = vector.broadcast %cst_16 : f32 to vector<128x128xf32>
    %37 = arith.mulf %36, %35 : vector<128x128xf32>
    %cst_17 = arith.constant 1.000000e+00 : f32
    %38 = vector.broadcast %cst_17 : f32 to vector<128x128xf32>
    %39 = arith.addf %38, %37 : vector<128x128xf32>
    %cst_18 = arith.constant 1.000000e+00 : f32
    %40 = vector.broadcast %cst_18 : f32 to vector<128x128xf32>
    %41 = arith.divf %40, %39 : vector<128x128xf32>
    %cst_19 = arith.constant 1.06140542 : f32
    %42 = vector.broadcast %cst_19 : f32 to vector<128x128xf32>
    %43 = arith.mulf %42, %41 : vector<128x128xf32>
    %cst_20 = arith.constant -1.45315206 : f32
    %44 = vector.broadcast %cst_20 : f32 to vector<128x128xf32>
    %45 = arith.addf %43, %44 : vector<128x128xf32>
    %46 = arith.mulf %45, %41 : vector<128x128xf32>
    %cst_21 = arith.constant 1.42141378 : f32
    %47 = vector.broadcast %cst_21 : f32 to vector<128x128xf32>
    %48 = arith.addf %46, %47 : vector<128x128xf32>
    %49 = arith.mulf %48, %41 : vector<128x128xf32>
    %cst_22 = arith.constant -0.284496725 : f32
    %50 = vector.broadcast %cst_22 : f32 to vector<128x128xf32>
    %51 = arith.addf %49, %50 : vector<128x128xf32>
    %52 = arith.mulf %51, %41 : vector<128x128xf32>
    %cst_23 = arith.constant 0.254829586 : f32
    %53 = vector.broadcast %cst_23 : f32 to vector<128x128xf32>
    %54 = arith.addf %52, %53 : vector<128x128xf32>
    %55 = arith.mulf %54, %41 : vector<128x128xf32>
    %cst_24 = arith.constant 0.000000e+00 : f32
    %56 = vector.broadcast %cst_24 : f32 to vector<128x128xf32>
    %57 = arith.subf %56, %35 : vector<128x128xf32>
    %58 = arith.mulf %57, %35 : vector<128x128xf32>
    %59 = math.exp %58 : vector<128x128xf32>
    %60 = arith.mulf %55, %59 : vector<128x128xf32>
    %cst_25 = arith.constant 1.000000e+00 : f32
    %61 = vector.broadcast %cst_25 : f32 to vector<128x128xf32>
    %62 = arith.subf %61, %60 : vector<128x128xf32>
    %cst_26 = arith.constant 0.000000e+00 : f32
    %63 = vector.broadcast %cst_26 : f32 to vector<128x128xf32>
    %64 = arith.cmpf oge, %34, %63 : vector<128x128xf32>
    %cst_27 = arith.constant 0.000000e+00 : f32
    %65 = vector.broadcast %cst_27 : f32 to vector<128x128xf32>
    %66 = arith.subf %65, %62 : vector<128x128xf32>
    %67 = arith.select %64, %62, %66 : vector<128x128xi1>, vector<128x128xf32>
    %cst_28 = arith.constant 1.000000e+00 : f32
    %68 = vector.broadcast %cst_28 : f32 to vector<128x128xf32>
    %69 = arith.addf %68, %67 : vector<128x128xf32>
    %70 = arith.mulf %32, %69 : vector<128x128xf32>
    %71 = arith.truncf %70 : vector<128x128xf32> to vector<128x128xbf16>
    %c0_29 = arith.constant 0 : index
    %c0_30 = arith.constant 0 : index
    %72 = vector.load %arg6[%c0_29, %c0_30] : memref<128x128xbf16, #tpu.memory_space<vmem>>, vector<128x128xbf16>
    tpu.vector_store %arg6[%c0_29, %c0_30], %71 {strides = array<i32>} : memref<128x128xbf16, #tpu.memory_space<vmem>>, vector<128x128xbf16>,
    return
  }
  func.func @transform_0(%arg0: i32) -> (i32, i32) {
    %c0_i32 = arith.constant 0 : i32
    %c0_i32_0 = arith.constant 0 : i32
    return %arg0, %c0_i32 : i32, i32
  }
  func.func @transform_1(%arg0: i32) -> (i32, i32) {
    %c0_i32 = arith.constant 0 : i32
    %c0_i32_0 = arith.constant 0 : i32
    %c0_i32_1 = arith.constant 0 : i32
    return %c0_i32, %c0_i32_0 : i32, i32
  }
  func.func @transform_2(%arg0: i32) -> (i32, i32) {
    %c0_i32 = arith.constant 0 : i32
    %c0_i32_0 = arith.constant 0 : i32
    %c0_i32_1 = arith.constant 0 : i32
    return %c0_i32, %c0_i32_0 : i32, i32
  }
  func.func @transform_3(%arg0: i32) -> (i32, i32) {
    %c0_i32 = arith.constant 0 : i32
    %c0_i32_0 = arith.constant 0 : i32
    %c0_i32_1 = arith.constant 0 : i32
    return %c0_i32, %c0_i32_0 : i32, i32
  }
  func.func @transform_4(%arg0: i32) -> (i32, i32) {
    %c0_i32 = arith.constant 0 : i32
    %c0_i32_0 = arith.constant 0 : i32
    %c0_i32_1 = arith.constant 0 : i32
    return %c0_i32, %c0_i32_0 : i32, i32
  }
  func.func @transform_5(%arg0: i32) -> (i32, i32) {
    %c0_i32 = arith.constant 0 : i32
    %c0_i32_0 = arith.constant 0 : i32
    return %arg0, %c0_i32 : i32, i32
  }
}

module attributes {stable_mosaic.version = 11 : i64} {
  func.func @_linear_residual_kernel(%arg0: i32, %arg1: memref<128x128xbf16, #tpu.memory_space<vmem>>, %arg2: memref<128x32xf32, #tpu.memory_space<vmem>>, %arg3: memref<128x32xbf16, #tpu.memory_space<vmem>>, %arg4: memref<1x32xf32, #tpu.memory_space<vmem>>, %arg5: memref<128x32xf32, #tpu.memory_space<vmem>>) attributes {dimension_semantics = [#tpu.dimension_semantics<parallel>], iteration_bounds = array<i64: 2>, scalar_prefetch = 0 : i64, scratch_operands = 0 : i64, tpu.core_type = #tpu.core_type<tc>, window_params = [{transform_indices = @transform_0, window_bounds = array<i64: 128, 128>}, {transform_indices = @transform_1, window_bounds = array<i64: 128, 32>}, {pipeline_mode = #tpu.pipeline_mode<synchronous>, transform_indices = @transform_2, window_bounds = array<i64: 128, 32>}, {pipeline_mode = #tpu.pipeline_mode<synchronous>, transform_indices = @transform_3, window_bounds = array<i64: 1, 32>}, {transform_indices = @transform_4, window_bounds = array<i64: 128, 32>}]} {
    %c0 = arith.constant 0 : index
    %c0_0 = arith.constant 0 : index
    %0 = vector.load %arg1[%c0, %c0_0] : memref<128x128xbf16, #tpu.memory_space<vmem>>, vector<128x128xbf16>
    %c0_1 = arith.constant 0 : index
    %c0_2 = arith.constant 0 : index
    %1 = vector.load %arg3[%c0_1, %c0_2] : memref<128x32xbf16, #tpu.memory_space<vmem>>, vector<128x32xbf16>
    %cst = arith.constant dense<0.000000e+00> : vector<128x32xf32>
    %2 = tpu.matmul %0, %1, %cst {dimension_numbers = #tpu.dot_dimension_numbers<[1], [0], [0], [1], [0, 0, 1, 1], [], []>} : vector<128x128xbf16>, vector<128x32xbf16>, vector<128x32xf32> -> vector<128x32xf32>
    %c0_3 = arith.constant 0 : index
    %c0_4 = arith.constant 0 : index
    %3 = vector.load %arg4[%c0_3, %c0_4] : memref<1x32xf32, #tpu.memory_space<vmem>>, vector<1x32xf32>
    %4 = vector.broadcast %3 : vector<1x32xf32> to vector<128x32xf32>
    %5 = arith.addf %2, %4 : vector<128x32xf32>
    %c0_5 = arith.constant 0 : index
    %c0_6 = arith.constant 0 : index
    %6 = vector.load %arg2[%c0_5, %c0_6] : memref<128x32xf32, #tpu.memory_space<vmem>>, vector<128x32xf32>
    %7 = arith.addf %5, %6 : vector<128x32xf32>
    %c0_7 = arith.constant 0 : index
    %c0_8 = arith.constant 0 : index
    %8 = vector.load %arg5[%c0_7, %c0_8] : memref<128x32xf32, #tpu.memory_space<vmem>>, vector<128x32xf32>
    tpu.vector_store %arg5[%c0_7, %c0_8], %7 {strides = array<i32>} : memref<128x32xf32, #tpu.memory_space<vmem>>, vector<128x32xf32>,
    return
  }
  func.func @transform_0(%arg0: i32) -> (i32, i32) {
    %c0_i32 = arith.constant 0 : i32
    %c0_i32_0 = arith.constant 0 : i32
    return %arg0, %c0_i32 : i32, i32
  }
  func.func @transform_1(%arg0: i32) -> (i32, i32) {
    %c0_i32 = arith.constant 0 : i32
    %c0_i32_0 = arith.constant 0 : i32
    return %arg0, %c0_i32 : i32, i32
  }
  func.func @transform_2(%arg0: i32) -> (i32, i32) {
    %c0_i32 = arith.constant 0 : i32
    %c0_i32_0 = arith.constant 0 : i32
    %c0_i32_1 = arith.constant 0 : i32
    return %c0_i32, %c0_i32_0 : i32, i32
  }
  func.func @transform_3(%arg0: i32) -> (i32, i32) {
    %c0_i32 = arith.constant 0 : i32
    %c0_i32_0 = arith.constant 0 : i32
    %c0_i32_1 = arith.constant 0 : i32
    return %c0_i32, %c0_i32_0 : i32, i32
  }
  func.func @transform_4(%arg0: i32) -> (i32, i32) {
    %c0_i32 = arith.constant 0 : i32
    %c0_i32_0 = arith.constant 0 : i32
    return %arg0, %c0_i32 : i32, i32
  }
}

</mosaic_0001>

<llo_original>
// kernel: tile.12
$region0: #{tile.12}
  %s0 = inlined_call_operand.vmem [shape: s32[4,8], index: 0, kind: input, shape index: {}]
  %s1 = inlined_call_operand.vmem [shape: s32[32], index: 1, kind: output, shape index: {}]
  $region1: #{tile.12} parent=0
    #allocation0 [shape = 'u8[4096]{0}', space=vmem, size = 0x1000, scoped, tag = 'scoped mem for output reshape']
    #allocation1 [shape = 'u8[4096]{0}', space=vmem, size = 0x1000, scoped, tag = 'scoped mem for input reshape']
    %s3 = sshll.u32 1, 4
    %s4 = ssub.s32 %s3, 1
    %v5 = vld [vmem:[%s0] sm:%s4]
    %6 = vst [vmem:[#allocation1] sm:%s4] %v5
    %v7 = vld [vmem:[#allocation1] sm:$0x1]
    %vm8 = vcmask 64512
    %9 = vst.msk [vmem:[#allocation0] sm:$0x1] %vm8, %v7
    %s10 = scalar_lea.vmem [#allocation1], 3
    %v11 = vld [vmem:[%s10] sm:$0x1]
    %12 = vrot.lane.b32.xlu0 %v11, 24
    %v13 = vpop.permute.xlu0 %12
    %vm14 = vcmask 261312
    %15 = vst.msk [vmem:[#allocation0] sm:$0x1] %vm14, %v13
    %s16 = scalar_lea.vmem [#allocation1], 2
    %v17 = vld [vmem:[%s16] sm:$0x1]
    %18 = vrot.lane.b32.xlu0 %v17, 16
    %v19 = vpop.permute.xlu0 %18
    %vm20 = vcmask 195712
    %21 = vst.msk [vmem:[#allocation0] sm:$0x1] %vm20, %v19
    %s22 = scalar_lea.vmem [#allocation1], 1
    %v23 = vld [vmem:[%s22] sm:$0x1]
    %24 = vrot.lane.b32.xlu0 %v23, 8
    %v25 = vpop.permute.xlu0 %24
    %vm26 = vcmask 130112
    %27 = vst.msk [vmem:[#allocation0] sm:$0x1] %vm26, %v25
    %s29 = sshll.u32 1, 1
    %s30 = ssub.s32 %s29, 1
    %v32 = vld [vmem:[#allocation0] sm:%s30]
    %s33 = sshll.u32 1, 1
    %s34 = ssub.s32 %s33, 1
    %35 = vst [vmem:[%s1] sm:%s34] %v32

// kernel: tile.13
$region0: #{tile.13}
  #allocation0 [shape = 's32[1]{0}', space=sflag, size = 0x4, scoped, tag = 'scoped memory for tile.13']
  %s0 = inlined_call_operand.vmem [shape: s32[32], index: 0, kind: input, shape index: {}]
  %s1 = inlined_call_operand.vmem [shape: s32[4,32], index: 1, kind: output, shape index: {}]
  // Predicated region
  $region2: #{tile.13} parent=0 // pred_check
    _
  $region3: #{tile.13} parent=0 // pred_check_branch
    %3 = sbr.rel (0) target = $region5
  $region4: #{tile.13} parent=0 // pred_region
    _
  $region5: #{tile.13} parent=0 // pred_fallthru
    _
  %v4 = vld [vmem:[%s0] ss:$0 sm:$0xff]
  %5 = vst [vmem:[%s1] sm:$0xf] %v4

// kernel: tile.20
$region0: #{tile.20}
  %s0 = inlined_call_operand.vmem [shape: s32[4,32], index: 0, kind: input, shape index: {}]
  %s1 = inlined_call_operand.vmem [shape: s32[1,128], index: 1, kind: output, shape index: {}]
  $region1: #{tile.20} parent=0
    #allocation0 [shape = 'u8[4096]{0}', space=vmem, size = 0x1000, scoped, tag = 'scoped mem for output reshape']
    #allocation1 [shape = 'u8[4096]{0}', space=vmem, size = 0x1000, scoped, tag = 'scoped mem for input reshape']
    %s3 = sshll.u32 1, 4
    %s4 = ssub.s32 %s3, 1
    %v5 = vld [vmem:[%s0] sm:%s4]
    %6 = vst [vmem:[#allocation1] sm:%s4] %v5
    %v7 = vld [vmem:[#allocation1] sm:$0x1]
    %vm8 = vcmask 261120
    %9 = vst.msk [vmem:[#allocation0] sm:$0x1] %vm8, %v7
    %s10 = scalar_lea.vmem [#allocation1], 3
    %v11 = vld [vmem:[%s10] sm:$0x1]
    %12 = vrot.lane.b32.xlu0 %v11, 96
    %v13 = vpop.permute.xlu0 %12
    %vm14 = vcmask 1048320
    %15 = vst.msk [vmem:[#allocation0] sm:$0x1] %vm14, %v13
    %s16 = scalar_lea.vmem [#allocation1], 2
    %v17 = vld [vmem:[%s16] sm:$0x1]
    %18 = vrot.lane.b32.xlu0 %v17, 64
    %v19 = vpop.permute.xlu0 %18
    %vm20 = vcmask 785920
    %21 = vst.msk [vmem:[#allocation0] sm:$0x1] %vm20, %v19
    %s22 = scalar_lea.vmem [#allocation1], 1
    %v23 = vld [vmem:[%s22] sm:$0x1]
    %24 = vrot.lane.b32.xlu0 %v23, 32
    %v25 = vpop.permute.xlu0 %24
    %vm26 = vcmask 523520
    %27 = vst.msk [vmem:[#allocation0] sm:$0x1] %vm26, %v25
    %s29 = sshll.u32 1, 1
    %s30 = ssub.s32 %s29, 1
    %v32 = vld [vmem:[#allocation0] sm:%s30]
    %s33 = sshll.u32 1, 1
    %s34 = ssub.s32 %s33, 1
    %35 = vst [vmem:[%s1] sm:%s34] %v32

// kernel: tile.21
$region0: #{tile.21}
  %s0 = inlined_call_operand.vmem [shape: s32[16,8], index: 0, kind: input, shape index: {}]
  %s1 = inlined_call_operand.vmem [shape: s32[1,128], index: 1, kind: output, shape index: {}]
  $region1: #{tile.21} parent=0
    #allocation0 [shape = 'u8[4096]{0}', space=vmem, size = 0x1000, scoped, tag = 'scoped mem for output reshape']
    %v2 = vld [vmem:[%s0] sm:$0x1]
    %vm3 = vcmask 64512
    %4 = vst.msk [vmem:[#allocation0] sm:$0x1] %vm3, %v2
    %s5 = scalar_lea.vmem %s0, 15
    %v6 = vld [vmem:[%s5] sm:$0x1]
    %7 = vrot.lane.b32.xlu0 %v6, 120
    %v8 = vpop.permute.xlu0 %7
    %vm9 = vcmask 1048512
    %10 = vst.msk [vmem:[#allocation0] sm:$0x1] %vm9, %v8
    %s11 = scalar_lea.vmem %s0, 14
    %v12 = vld [vmem:[%s11] sm:$0x1]
    %13 = vrot.lane.b32.xlu0 %v12, 112
    %v14 = vpop.permute.xlu0 %13
    %vm15 = vcmask 982912
    %16 = vst.msk [vmem:[#allocation0] sm:$0x1] %vm15, %v14
    %s17 = scalar_lea.vmem %s0, 13
    %v18 = vld [vmem:[%s17] sm:$0x1]
    %19 = vrot.lane.b32.xlu0 %v18, 104
    %v20 = vpop.permute.xlu0 %19
    %vm21 = vcmask 917312
    %22 = vst.msk [vmem:[#allocation0] sm:$0x1] %vm21, %v20
    %s23 = scalar_lea.vmem %s0, 12
    %v24 = vld [vmem:[%s23] sm:$0x1]
    %25 = vrot.lane.b32.xlu0 %v24, 96
    %v26 = vpop.permute.xlu0 %25
    %vm27 = vcmask 851712
    %28 = vst.msk [vmem:[#allocation0] sm:$0x1] %vm27, %v26
    %s29 = scalar_lea.vmem %s0, 11
    %v30 = vld [vmem:[%s29] sm:$0x1]
    %31 = vrot.lane.b32.xlu0 %v30, 88
    %v32 = vpop.permute.xlu0 %31
    %vm33 = vcmask 786112
    %34 = vst.msk [vmem:[#allocation0] sm:$0x1] %vm33, %v32
    %s35 = scalar_lea.vmem %s0, 10
    %v36 = vld [vmem:[%s35] sm:$0x1]
    %37 = vrot.lane.b32.xlu0 %v36, 80
    %v38 = vpop.permute.xlu0 %37
    %vm39 = vcmask 720512
    %40 = vst.msk [vmem:[#allocation0] sm:$0x1] %vm39, %v38
    %s41 = scalar_lea.vmem %s0, 9
    %v42 = vld [vmem:[%s41] sm:$0x1]
    %43 = vrot.lane.b32.xlu0 %v42, 72
    %v44 = vpop.permute.xlu0 %43
    %vm45 = vcmask 654912
    %46 = vst.msk [vmem:[#allocation0] sm:$0x1] %vm45, %v44
    %s47 = scalar_lea.vmem %s0, 8
    %v48 = vld [vmem:[%s47] sm:$0x1]
    %49 = vrot.lane.b32.xlu0 %v48, 64
    %v50 = vpop.permute.xlu0 %49
    %vm51 = vcmask 589312
    %52 = vst.msk [vmem:[#allocation0] sm:$0x1] %vm51, %v50
    %s53 = scalar_lea.vmem %s0, 7
    %v54 = vld [vmem:[%s53] sm:$0x1]
    %55 = vrot.lane.b32.xlu0 %v54, 56
    %v56 = vpop.permute.xlu0 %55
    %vm57 = vcmask 523712
    %58 = vst.msk [vmem:[#allocation0] sm:$0x1] %vm57, %v56
    %s59 = scalar_lea.vmem %s0, 6
    %v60 = vld [vmem:[%s59] sm:$0x1]
    %61 = vrot.lane.b32.xlu0 %v60, 48
    %v62 = vpop.permute.xlu0 %61
    %vm63 = vcmask 458112
    %64 = vst.msk [vmem:[#allocation0] sm:$0x1] %vm63, %v62
    %s65 = scalar_lea.vmem %s0, 5
    %v66 = vld [vmem:[%s65] sm:$0x1]
    %67 = vrot.lane.b32.xlu0 %v66, 40
    %v68 = vpop.permute.xlu0 %67
    %vm69 = vcmask 392512
    %70 = vst.msk [vmem:[#allocation0] sm:$0x1] %vm69, %v68
    %s71 = scalar_lea.vmem %s0, 4
    %v72 = vld [vmem:[%s71] sm:$0x1]
    %73 = vrot.lane.b32.xlu0 %v72, 32
    %v74 = vpop.permute.xlu0 %73
    %vm75 = vcmask 326912
    %76 = vst.msk [vmem:[#allocation0] sm:$0x1] %vm75, %v74
    %s77 = scalar_lea.vmem %s0, 3
    %v78 = vld [vmem:[%s77] sm:$0x1]
    %79 = vrot.lane.b32.xlu0 %v78, 24
    %v80 = vpop.permute.xlu0 %79
    %vm81 = vcmask 261312
    %82 = vst.msk [vmem:[#allocation0] sm:$0x1] %vm81, %v80
    %s83 = scalar_lea.vmem %s0, 2
    %v84 = vld [vmem:[%s83] sm:$0x1]
    %85 = vrot.lane.b32.xlu0 %v84, 16
    %v86 = vpop.permute.xlu0 %85
    %vm87 = vcmask 195712
    %88 = vst.msk [vmem:[#allocation0] sm:$0x1] %vm87, %v86
    %s89 = scalar_lea.vmem %s0, 1
    %v90 = vld [vmem:[%s89] sm:$0x1]
    %91 = vrot.lane.b32.xlu0 %v90, 8
    %v92 = vpop.permute.xlu0 %91
    %vm93 = vcmask 130112
    %94 = vst.msk [vmem:[#allocation0] sm:$0x1] %vm93, %v92
    %s96 = sshll.u32 1, 1
    %s97 = ssub.s32 %s96, 1
    %v99 = vld [vmem:[#allocation0] sm:%s97]
    %s100 = sshll.u32 1, 1
    %s101 = ssub.s32 %s100, 1
    %102 = vst [vmem:[%s1] sm:%s101] %v99

// kernel: natten3d_transformer_block.5
$region0: #{natten3d_transformer_block.5}
  #allocation0 [shape = 'u32[]', space=smem, size = 0x4, offset = 0x4, fixed_abs, tag = 'smem constant byte address 0x4 - core index']
  #allocation1 [shape = 'u32[144,128]{1,0:T(1,128)}', space=vmem, size = 0x12000, scoped, tag = 'internal scratch']
  %s0 = inlined_call_operand.vmem [shape: f32[256,32], index: 0, kind: input, shape index: {}]
  %s1 = inlined_call_operand.vmem [shape: f32[1,32], index: 1, kind: input, shape index: {}]
  %s2 = inlined_call_operand.vmem [shape: f32[1,32], index: 2, kind: input, shape index: {}]
  %s3 = inlined_call_operand.vmem [shape: bf16[32,96], index: 3, kind: input, shape index: {}]
  %s4 = inlined_call_operand.vmem [shape: f32[1,96], index: 4, kind: input, shape index: {}]
  %s5 = inlined_call_operand.vmem [shape: bf16[256,96], index: 5, kind: output, shape index: {}]
  %s6 = sld [smem:[#allocation0]]
  $region53: #{natten3d_transformer_block.5} parent=0
    _
  %s8 = ssub.s32 1, %s6
  %s9 = scalar_select 0, %s8, %s6
  loop: start=0, step=1, limit=4
  $region2: #{natten3d_transformer_block.5} parent=0 // loop_pre_header
    _
  $region3: #{natten3d_transformer_block.5} parent=0 // loop_header
    %s11 = sphi 0, %s15
    %p12 = scmp.ge.s32.totalorder %s11, 4
    %s21 = sphi 0, %s23
    %s24 = sphi 0, %s21
    %s25 = sphi 0, %s24
    %s41 = sphi 0, %s25
    %s45 = sphi 0, %s45
    %s47 = sphi 0, %s45
    %s48 = sphi 0, %s47
    %s62 = sphi 0, %s48
    %s66 = sphi 0, %s66
    %s68 = sphi 0, %s66
    %s69 = sphi 0, %s68
    %s83 = sphi 0, %s69
    %s87 = sphi 0, %s87
    %s89 = sphi 0, %s87
    %s90 = sphi 0, %s89
    %s104 = sphi 0, %s90
    %s108 = sphi 0, %s108
    %s110 = sphi 0, %s108
    %s111 = sphi 0, %s110
    %s125 = sphi 0, %s111
    %s131 = sphi 0, %s133
    %s134 = sphi 0, %s131
    %s135 = sphi 0, %s134
    %s151 = sphi 0, %s135
  $region4: #{natten3d_transformer_block.5} parent=0 // loop_header_branch
    %14 = sbr.rel (%p12) target = $region8
  $region5: #{natten3d_transformer_block.5} parent=0 // loop_body
    %s16 = ssub.s32 %s11, 1
    %s17 = ssub.s32 %s11, 2
    %s18 = sadd.s32 %s11, 1
    %s19 = ssub.s32 %s11, %s18
    %p20 = scmp.eq.s32.totalorder %s19, 0
    %s22 = sadd.s32 %s21, 1
    %s23 = scalar_select %p20, %s21, %s22
    %p26 = pneg %p20
    %p27 = scmp.eq.s32.totalorder %s11, 1
    %p28 = por %p26, %p27
    %p29 = scmp.ne.s32.totalorder %s21, %s24
    %p30 = scmp.eq.s32.totalorder %s11, 0
    %p31 = por %p29, %p30
    %p32 = scmp.ne.s32.totalorder %s21, %s24
    %p33 = scmp.eq.s32.totalorder %s16, 1
    %p34 = por %p32, %p33
    %p35 = scmp.ne.s32.totalorder %s24, %s25
    %p36 = scmp.eq.s32.totalorder %s16, 0
    %p37 = por %p35, %p36
    %p38 = scmp.ne.s32.totalorder %s24, %s25
    %p39 = scmp.eq.s32.totalorder %s17, 1
    %p40 = por %p38, %p39
    %p42 = scmp.ne.s32.totalorder %s25, %s41
    %p43 = scmp.eq.s32.totalorder %s17, 0
    %p44 = por %p42, %p43
    %s46 = sadd.s32 %s45, 1
    %p49 = scmp.eq.s32.totalorder %s11, 1
    %p50 = scmp.ne.s32.totalorder %s45, %s47
    %p51 = scmp.eq.s32.totalorder %s11, 0
    %p52 = por %p50, %p51
    %p53 = scmp.ne.s32.totalorder %s45, %s47
    %p54 = scmp.eq.s32.totalorder %s16, 1
    %p55 = por %p53, %p54
    %p56 = scmp.ne.s32.totalorder %s47, %s48
    %p57 = scmp.eq.s32.totalorder %s16, 0
    %p58 = por %p56, %p57
    %p59 = scmp.ne.s32.totalorder %s47, %s48
    %p60 = scmp.eq.s32.totalorder %s17, 1
    %p61 = por %p59, %p60
    %p63 = scmp.ne.s32.totalorder %s48, %s62
    %p64 = scmp.eq.s32.totalorder %s17, 0
    %p65 = por %p63, %p64
    %s67 = sadd.s32 %s66, 1
    %p70 = scmp.eq.s32.totalorder %s11, 1
    %p71 = scmp.ne.s32.totalorder %s66, %s68
    %p72 = scmp.eq.s32.totalorder %s11, 0
    %p73 = por %p71, %p72
    %p74 = scmp.ne.s32.totalorder %s66, %s68
    %p75 = scmp.eq.s32.totalorder %s16, 1
    %p76 = por %p74, %p75
    %p77 = scmp.ne.s32.totalorder %s68, %s69
    %p78 = scmp.eq.s32.totalorder %s16, 0
    %p79 = por %p77, %p78
    %p80 = scmp.ne.s32.totalorder %s68, %s69
    %p81 = scmp.eq.s32.totalorder %s17, 1
    %p82 = por %p80, %p81
    %p84 = scmp.ne.s32.totalorder %s69, %s83
    %p85 = scmp.eq.s32.totalorder %s17, 0
    %p86 = por %p84, %p85
    %s88 = sadd.s32 %s87, 1
    %p91 = scmp.eq.s32.totalorder %s11, 1
    %p92 = scmp.ne.s32.totalorder %s87, %s89
    %p93 = scmp.eq.s32.totalorder %s11, 0
    %p94 = por %p92, %p93
    %p95 = scmp.ne.s32.totalorder %s87, %s89
    %p96 = scmp.eq.s32.totalorder %s16, 1
    %p97 = por %p95, %p96
    %p98 = scmp.ne.s32.totalorder %s89, %s90
    %p99 = scmp.eq.s32.totalorder %s16, 0
    %p100 = por %p98, %p99
    %p101 = scmp.ne.s32.totalorder %s89, %s90
    %p102 = scmp.eq.s32.totalorder %s17, 1
    %p103 = por %p101, %p102
    %p105 = scmp.ne.s32.totalorder %s90, %s104
    %p106 = scmp.eq.s32.totalorder %s17, 0
    %p107 = por %p105, %p106
    %s109 = sadd.s32 %s108, 1
    %p112 = scmp.eq.s32.totalorder %s11, 1
    %p113 = scmp.ne.s32.totalorder %s108, %s110
    %p114 = scmp.eq.s32.totalorder %s11, 0
    %p115 = por %p113, %p114
    %p116 = scmp.ne.s32.totalorder %s108, %s110
    %p117 = scmp.eq.s32.totalorder %s16, 1
    %p118 = por %p116, %p117
    %p119 = scmp.ne.s32.totalorder %s110, %s111
    %p120 = scmp.eq.s32.totalorder %s16, 0
    %p121 = por %p119, %p120
    %p122 = scmp.ne.s32.totalorder %s110, %s111
    %p123 = scmp.eq.s32.totalorder %s17, 1
    %p124 = por %p122, %p123
    %p126 = scmp.ne.s32.totalorder %s111, %s125
    %p127 = scmp.eq.s32.totalorder %s17, 0
    %p128 = por %p126, %p127
    %s129 = ssub.s32 %s11, %s18
    %p130 = scmp.eq.s32.totalorder %s129, 0
    %s132 = sadd.s32 %s131, 1
    %s133 = scalar_select %p130, %s131, %s132
    %p136 = pneg %p130
    %p137 = scmp.eq.s32.totalorder %s11, 1
    %p138 = por %p136, %p137
    %p139 = scmp.ne.s32.totalorder %s131, %s134
    %p140 = scmp.eq.s32.totalorder %s11, 0
    %p141 = por %p139, %p140
    %p142 = scmp.ne.s32.totalorder %s131, %s134
    %p143 = scmp.eq.s32.totalorder %s16, 1
    %p144 = por %p142, %p143
    %p145 = scmp.ne.s32.totalorder %s134, %s135
    %p146 = scmp.eq.s32.totalorder %s16, 0
    %p147 = por %p145, %p146
    %p148 = scmp.ne.s32.totalorder %s134, %s135
    %p149 = scmp.eq.s32.totalorder %s17, 1
    %p150 = por %p148, %p149
    %p152 = scmp.ne.s32.totalorder %s135, %s151
    %p153 = scmp.eq.s32.totalorder %s17, 0
    %p154 = por %p152, %p153
    %p155 = scmp.le.s32.totalorder 1, %s11
    %p156 = scmp.lt.s32.totalorder %s11, 3
    %p157 = pnand %p155, %p156
    %p158 = pneg %p157
    // Predicated region
    $region9: #{natten3d_transformer_block.5} parent=5 // pred_check
      _
    $region10: #{natten3d_transformer_block.5} parent=5 // pred_check_branch
      %160 = sbr.rel (%p157) target = $region12
    $region11: #{natten3d_transformer_block.5} parent=5 // pred_region
      %s161 = ssub.s32 %s11, 1
      // Predicated region
      $region13: #{natten3d_transformer_block.5} parent=11 // pred_check
        %p162 = pneg %p58
      $region14: #{natten3d_transformer_block.5} parent=11 // pred_check_branch
        %164 = sbr.rel (%p162) target = $region16
      $region15: #{natten3d_transformer_block.5} parent=11 // pred_region
        _
      $region16: #{natten3d_transformer_block.5} parent=11 // pred_fallthru
        _
      // Predicated region
      $region17: #{natten3d_transformer_block.5} parent=11 // pred_check
        %p165 = pneg %p79
      $region18: #{natten3d_transformer_block.5} parent=11 // pred_check_branch
        %167 = sbr.rel (%p165) target = $region20
      $region19: #{natten3d_transformer_block.5} parent=11 // pred_region
        _
      $region20: #{natten3d_transformer_block.5} parent=11 // pred_fallthru
        _
      // Predicated region
      $region21: #{natten3d_transformer_block.5} parent=11 // pred_check
        %p168 = pneg %p100
      $region22: #{natten3d_transformer_block.5} parent=11 // pred_check_branch
        %170 = sbr.rel (%p168) target = $region24
      $region23: #{natten3d_transformer_block.5} parent=11 // pred_region
        _
      $region24: #{natten3d_transformer_block.5} parent=11 // pred_fallthru
        _
      // Predicated region
      $region25: #{natten3d_transformer_block.5} parent=11 // pred_check
        %p171 = pneg %p121
      $region26: #{natten3d_transformer_block.5} parent=11 // pred_check_branch
        %173 = sbr.rel (%p171) target = $region28
      $region27: #{natten3d_transformer_block.5} parent=11 // pred_region
        _
      $region28: #{natten3d_transformer_block.5} parent=11 // pred_fallthru
        _
    $region12: #{natten3d_transformer_block.5} parent=5 // pred_fallthru
      _
    %p174 = scmp.lt.s32.totalorder %s11, 2
    // Predicated region
    $region29: #{natten3d_transformer_block.5} parent=5 // pred_check
      %p175 = pneg %p174
    $region30: #{natten3d_transformer_block.5} parent=5 // pred_check_branch
      %177 = sbr.rel (%p175) target = $region32
    $region31: #{natten3d_transformer_block.5} parent=5 // pred_region
      // Predicated region
      $region33: #{natten3d_transformer_block.5} parent=31 // pred_check
        %p178 = pneg %p31
      $region34: #{natten3d_transformer_block.5} parent=31 // pred_check_branch
        %180 = sbr.rel (%p178) target = $region36
      $region35: #{natten3d_transformer_block.5} parent=31 // pred_region
        %s181 = smul.u32 16, %s11
        %p182 = scmp.lt.s32.totalorder %s181, 31
        %s183 = scalar_select %p182, %s181, 31
        %s184 = smul.addr %s183, 8
        %s185 = scalar_lea.vmem %s0, %s184
        %s186 = smul.u32 16, %s11
      $region36: #{natten3d_transformer_block.5} parent=31 // pred_fallthru
        _
    $region32: #{natten3d_transformer_block.5} parent=5 // pred_fallthru
      _
    %p187 = scmp.le.s32.totalorder 1, %s11
    %p188 = scmp.lt.s32.totalorder %s11, 3
    %p189 = pnand %p187, %p188
    %p190 = pneg %p189
    // Predicated region
    $region37: #{natten3d_transformer_block.5} parent=5 // pred_check
      _
    $region38: #{natten3d_transformer_block.5} parent=5 // pred_check_branch
      %192 = sbr.rel (%p189) target = $region40
    $region39: #{natten3d_transformer_block.5} parent=5 // pred_region
      %s193 = ssub.s32 %s11, 1
      %s194 = smul.u32 16, %s16
      %p195 = scmp.lt.s32.totalorder %s194, 31
      %s196 = scalar_select %p195, %s194, 31
      %s197 = smul.addr %s196, 8
      %s198 = scalar_lea.vmem %s0, %s197
      %p199 = pneg %p37
      %p200 = pneg %p34
      %p201 = pneg %p58
      %p202 = pneg %p55
      %p203 = pneg %p79
      %p204 = pneg %p76
      %p205 = pneg %p100
      %p206 = pneg %p97
      %p207 = pneg %p121
      %p208 = pneg %p118
      %p209 = pneg %p147
      %p210 = pneg %p144
      %s211 = smul.u32 16, %s16
      %p212 = scmp.lt.s32.totalorder %s211, 31
      %s213 = scalar_select %p212, %s211, 31
      %s214 = smul.addr %s213, 4
      %s215 = scalar_lea.vmem %s5, %s214
      %s216 = smul.u32 16, %s16
      %p217 = scmp.lt.s32.totalorder %s216, 31
      %s218 = scalar_select %p217, %s216, 31
      %s219 = smul.addr %s218, 8
      %s220 = scalar_lea.vmem %s0, %s219
      %s221 = smul.u32 16, %s16
      %s222 = smul.u32 16, %s16
      %p223 = scmp.lt.s32.totalorder %s222, 31
      %s224 = scalar_select %p223, %s222, 31
      %s225 = smul.addr %s224, 4
      %s226 = scalar_lea.vmem %s5, %s225
      %s227 = smul.u32 16, %s16
      %v229 = vld [vmem:[%s220] sm:$0xff]
      %v230 = vld [vmem:[%s220 + $0x8] sm:$0xff]
      %v231 = vld [vmem:[%s220 + $0x10] sm:$0xff]
      %v232 = vld [vmem:[%s220 + $0x18] sm:$0xff]
      %v233 = vld [vmem:[%s220 + $0x20] sm:$0xff]
      %v234 = vld [vmem:[%s220 + $0x28] sm:$0xff]
      %v235 = vld [vmem:[%s220 + $0x30] sm:$0xff]
      %v236 = vld [vmem:[%s220 + $0x38] sm:$0xff]
      %v237 = vld [vmem:[%s220 + $0x40] sm:$0xff]
      %v238 = vld [vmem:[%s220 + $0x48] sm:$0xff]
      %v239 = vld [vmem:[%s220 + $0x50] sm:$0xff]
      %v240 = vld [vmem:[%s220 + $0x58] sm:$0xff]
      %v241 = vld [vmem:[%s220 + $0x60] sm:$0xff]
      %v242 = vld [vmem:[%s220 + $0x68] sm:$0xff]
      %v243 = vld [vmem:[%s220 + $0x70] sm:$0xff]
      %v244 = vld [vmem:[%s220 + $0x78] sm:$0xff]
      %vm245 = vcmask 261120
      %v246 = vsel %vm245, %v229, 0.0
      %247 = vadd.xlane.f32.xlu0 %v246
      %v248 = vpop.xlane.xlu0 %247
      %v249 = vsel %vm245, %v230, 0.0
      %250 = vadd.xlane.f32.xlu0 %v249
      %v251 = vpop.xlane.xlu0 %250
      %v252 = vsel %vm245, %v231, 0.0
      %253 = vadd.xlane.f32.xlu0 %v252
      %v254 = vpop.xlane.xlu0 %253
      %v255 = vsel %vm245, %v232, 0.0
      %256 = vadd.xlane.f32.xlu0 %v255
      %v257 = vpop.xlane.xlu0 %256
      %v258 = vsel %vm245, %v233, 0.0
      %259 = vadd.xlane.f32.xlu0 %v258
      %v260 = vpop.xlane.xlu0 %259
      %v261 = vsel %vm245, %v234, 0.0
      %262 = vadd.xlane.f32.xlu0 %v261
      %v263 = vpop.xlane.xlu0 %262
      %v264 = vsel %vm245, %v235, 0.0
      %265 = vadd.xlane.f32.xlu0 %v264
      %v266 = vpop.xlane.xlu0 %265
      %v267 = vsel %vm245, %v236, 0.0
      %268 = vadd.xlane.f32.xlu0 %v267
      %v269 = vpop.xlane.xlu0 %268
      %v270 = vsel %vm245, %v237, 0.0
      %271 = vadd.xlane.f32.xlu0 %v270
      %v272 = vpop.xlane.xlu0 %271
      %v273 = vsel %vm245, %v238, 0.0
      %274 = vadd.xlane.f32.xlu0 %v273
      %v275 = vpop.xlane.xlu0 %274
      %v276 = vsel %vm245, %v239, 0.0
      %277 = vadd.xlane.f32.xlu0 %v276
      %v278 = vpop.xlane.xlu0 %277
      %v279 = vsel %vm245, %v240, 0.0
      %280 = vadd.xlane.f32.xlu0 %v279
      %v281 = vpop.xlane.xlu0 %280
      %v282 = vsel %vm245, %v241, 0.0
      %283 = vadd.xlane.f32.xlu0 %v282
      %v284 = vpop.xlane.xlu0 %283
      %v285 = vsel %vm245, %v242, 0.0
      %286 = vadd.xlane.f32.xlu0 %v285
      %v287 = vpop.xlane.xlu0 %286
      %v288 = vsel %vm245, %v243, 0.0
      %289 = vadd.xlane.f32.xlu0 %v288
      %v290 = vpop.xlane.xlu0 %289
      %v291 = vsel %vm245, %v244, 0.0
      %292 = vadd.xlane.f32.xlu0 %v291
      %v293 = vpop.xlane.xlu0 %292
      %v294 = vrcp.pop 32.0
      %v295 = vmul.f32 %v248, %v294
      %v296 = vmul.f32 %v251, %v294
      %v297 = vmul.f32 %v254, %v294
      %v298 = vmul.f32 %v257, %v294
      %v299 = vmul.f32 %v260, %v294
      %v300 = vmul.f32 %v263, %v294
      %v301 = vmul.f32 %v266, %v294
      %v302 = vmul.f32 %v269, %v294
      %v303 = vmul.f32 %v272, %v294
      %v304 = vmul.f32 %v275, %v294
      %v305 = vmul.f32 %v278, %v294
      %v306 = vmul.f32 %v281, %v294
      %v307 = vmul.f32 %v284, %v294
      %v308 = vmul.f32 %v287, %v294
      %v309 = vmul.f32 %v290, %v294
      %v310 = vmul.f32 %v293, %v294
      %v311 = vsub.f32 %v229, %v295
      %v312 = vsub.f32 %v230, %v296
      %v313 = vsub.f32 %v231, %v297
      %v314 = vsub.f32 %v232, %v298
      %v315 = vsub.f32 %v233, %v299
      %v316 = vsub.f32 %v234, %v300
      %v317 = vsub.f32 %v235, %v301
      %v318 = vsub.f32 %v236, %v302
      %v319 = vsub.f32 %v237, %v303
      %v320 = vsub.f32 %v238, %v304
      %v321 = vsub.f32 %v239, %v305
      %v322 = vsub.f32 %v240, %v306
      %v323 = vsub.f32 %v241, %v307
      %v324 = vsub.f32 %v242, %v308
      %v325 = vsub.f32 %v243, %v309
      %v326 = vsub.f32 %v244, %v310
      %v327 = vmul.f32 %v311, %v311
      %v328 = vmul.f32 %v312, %v312
      %v329 = vmul.f32 %v313, %v313
      %v330 = vmul.f32 %v314, %v314
      %v331 = vmul.f32 %v315, %v315
      %v332 = vmul.f32 %v316, %v316
      %v333 = vmul.f32 %v317, %v317
      %v334 = vmul.f32 %v318, %v318
      %v335 = vmul.f32 %v319, %v319
      %v336 = vmul.f32 %v320, %v320
      %v337 = vmul.f32 %v321, %v321
      %v338 = vmul.f32 %v322, %v322
      %v339 = vmul.f32 %v323, %v323
      %v340 = vmul.f32 %v324, %v324
      %v341 = vmul.f32 %v325, %v325
      %v342 = vmul.f32 %v326, %v326
      %v343 = vsel %vm245, %v327, 0.0
      %344 = vadd.xlane.f32.xlu0 %v343
      %v345 = vpop.xlane.xlu0 %344
      %v346 = vsel %vm245, %v328, 0.0
      %347 = vadd.xlane.f32.xlu0 %v346
      %v348 = vpop.xlane.xlu0 %347
      %v349 = vsel %vm245, %v329, 0.0
      %350 = vadd.xlane.f32.xlu0 %v349
      %v351 = vpop.xlane.xlu0 %350
      %v352 = vsel %vm245, %v330, 0.0
      %353 = vadd.xlane.f32.xlu0 %v352
      %v354 = vpop.xlane.xlu0 %353
      %v355 = vsel %vm245, %v331, 0.0
      %356 = vadd.xlane.f32.xlu0 %v355
      %v357 = vpop.xlane.xlu0 %356
      %v358 = vsel %vm245, %v332, 0.0
      %359 = vadd.xlane.f32.xlu0 %v358
      %v360 = vpop.xlane.xlu0 %359
      %v361 = vsel %vm245, %v333, 0.0
      %362 = vadd.xlane.f32.xlu0 %v361
      %v363 = vpop.xlane.xlu0 %362
      %v364 = vsel %vm245, %v334, 0.0
      %365 = vadd.xlane.f32.xlu0 %v364
      %v366 = vpop.xlane.xlu0 %365
      %v367 = vsel %vm245, %v335, 0.0
      %368 = vadd.xlane.f32.xlu0 %v367
      %v369 = vpop.xlane.xlu0 %368
      %v370 = vsel %vm245, %v336, 0.0
      %371 = vadd.xlane.f32.xlu0 %v370
      %v372 = vpop.xlane.xlu0 %371
      %v373 = vsel %vm245, %v337, 0.0
      %374 = vadd.xlane.f32.xlu0 %v373
      %v375 = vpop.xlane.xlu0 %374
      %v376 = vsel %vm245, %v338, 0.0
      %377 = vadd.xlane.f32.xlu0 %v376
      %v378 = vpop.xlane.xlu0 %377
      %v379 = vsel %vm245, %v339, 0.0
      %380 = vadd.xlane.f32.xlu0 %v379
      %v381 = vpop.xlane.xlu0 %380
      %v382 = vsel %vm245, %v340, 0.0
      %383 = vadd.xlane.f32.xlu0 %v382
      %v384 = vpop.xlane.xlu0 %383
      %v385 = vsel %vm245, %v341, 0.0
      %386 = vadd.xlane.f32.xlu0 %v385
      %v387 = vpop.xlane.xlu0 %386
      %v388 = vsel %vm245, %v342, 0.0
      %389 = vadd.xlane.f32.xlu0 %v388
      %v390 = vpop.xlane.xlu0 %389
      %v391 = vmul.f32 %v345, %v294
      %v392 = vmul.f32 %v348, %v294
      %v393 = vmul.f32 %v351, %v294
      %v394 = vmul.f32 %v354, %v294
      %v395 = vmul.f32 %v357, %v294
      %v396 = vmul.f32 %v360, %v294
      %v397 = vmul.f32 %v363, %v294
      %v398 = vmul.f32 %v366, %v294
      %v399 = vmul.f32 %v369, %v294
      %v400 = vmul.f32 %v372, %v294
      %v401 = vmul.f32 %v375, %v294
      %v402 = vmul.f32 %v378, %v294
      %v403 = vmul.f32 %v381, %v294
      %v404 = vmul.f32 %v384, %v294
      %v405 = vmul.f32 %v387, %v294
      %v406 = vmul.f32 %v390, %v294
      %v407 = vadd.f32 %v391, 1e-05
      %v408 = vadd.f32 %v392, 1e-05
      %v409 = vadd.f32 %v393, 1e-05
      %v410 = vadd.f32 %v394, 1e-05
      %v411 = vadd.f32 %v395, 1e-05
      %v412 = vadd.f32 %v396, 1e-05
      %v413 = vadd.f32 %v397, 1e-05
      %v414 = vadd.f32 %v398, 1e-05
      %v415 = vadd.f32 %v399, 1e-05
      %v416 = vadd.f32 %v400, 1e-05
      %v417 = vadd.f32 %v401, 1e-05
      %v418 = vadd.f32 %v402, 1e-05
      %v419 = vadd.f32 %v403, 1e-05
      %v420 = vadd.f32 %v404, 1e-05
      %v421 = vadd.f32 %v405, 1e-05
      %v422 = vadd.f32 %v406, 1e-05
      %v423 = vrsqrt.pop %v407
      %v424 = vrsqrt.pop %v408
      %v425 = vrsqrt.pop %v409
      %v426 = vrsqrt.pop %v410
      %v427 = vrsqrt.pop %v411
      %v428 = vrsqrt.pop %v412
      %v429 = vrsqrt.pop %v413
      %v430 = vrsqrt.pop %v414
      %v431 = vrsqrt.pop %v415
      %v432 = vrsqrt.pop %v416
      %v433 = vrsqrt.pop %v417
      %v434 = vrsqrt.pop %v418
      %v435 = vrsqrt.pop %v419
      %v436 = vrsqrt.pop %v420
      %v437 = vrsqrt.pop %v421
      %v438 = vrsqrt.pop %v422
      %v439 = vmul.f32 %v311, %v423
      %v440 = vmul.f32 %v312, %v424
      %v441 = vmul.f32 %v313, %v425
      %v442 = vmul.f32 %v314, %v426
      %v443 = vmul.f32 %v315, %v427
      %v444 = vmul.f32 %v316, %v428
      %v445 = vmul.f32 %v317, %v429
      %v446 = vmul.f32 %v318, %v430
      %v447 = vmul.f32 %v319, %v431
      %v448 = vmul.f32 %v320, %v432
      %v449 = vmul.f32 %v321, %v433
      %v450 = vmul.f32 %v322, %v434
      %v451 = vmul.f32 %v323, %v435
      %v452 = vmul.f32 %v324, %v436
      %v453 = vmul.f32 %v325, %v437
      %v454 = vmul.f32 %v326, %v438
      %v455 = vld [vmem:[%s1] sm:$0x1]
      %v457 = vlaneseq
      %v458 = vshrl.u32 %v457, 7
      %v459 = vsub.s32 0, %v458
      %v460 = vrot.slane %v455, %v459
      %v462 = vmul.f32 %v439, %v460
      %v463 = vmul.f32 %v440, %v460
      %v464 = vmul.f32 %v441, %v460
      %v465 = vmul.f32 %v442, %v460
      %v466 = vmul.f32 %v443, %v460
      %v467 = vmul.f32 %v444, %v460
      %v468 = vmul.f32 %v445, %v460
      %v469 = vmul.f32 %v446, %v460
      %v470 = vmul.f32 %v447, %v460
      %v471 = vmul.f32 %v448, %v460
      %v472 = vmul.f32 %v449, %v460
      %v473 = vmul.f32 %v450, %v460
      %v474 = vmul.f32 %v451, %v460
      %v475 = vmul.f32 %v452, %v460
      %v476 = vmul.f32 %v453, %v460
      %v477 = vmul.f32 %v454, %v460
      %v478 = vld [vmem:[%s2] sm:$0x1]
      %v480 = vlaneseq
      %v481 = vshrl.u32 %v480, 7
      %v482 = vsub.s32 0, %v481
      %v483 = vrot.slane %v478, %v482
      %v485 = vadd.f32 %v462, %v483
      %v486 = vadd.f32 %v463, %v483
      %v487 = vadd.f32 %v464, %v483
      %v488 = vadd.f32 %v465, %v483
      %v489 = vadd.f32 %v466, %v483
      %v490 = vadd.f32 %v467, %v483
      %v491 = vadd.f32 %v468, %v483
      %v492 = vadd.f32 %v469, %v483
      %v493 = vadd.f32 %v470, %v483
      %v494 = vadd.f32 %v471, %v483
      %v495 = vadd.f32 %v472, %v483
      %v496 = vadd.f32 %v473, %v483
      %v497 = vadd.f32 %v474, %v483
      %v498 = vadd.f32 %v475, %v483
      %v499 = vadd.f32 %v476, %v483
      %v500 = vadd.f32 %v477, %v483
      %v501 = vpack.c.bf16 %v486, %v485
      %v502 = vpack.c.bf16 %v488, %v487
      %v503 = vpack.c.bf16 %v490, %v489
      %v504 = vpack.c.bf16 %v492, %v491
      %v505 = vpack.c.bf16 %v494, %v493
      %v506 = vpack.c.bf16 %v496, %v495
      %v507 = vpack.c.bf16 %v498, %v497
      %v508 = vpack.c.bf16 %v500, %v499
      %v509 = vld [vmem:[%s3] sm:$0xf]
      %v510 = vld [vmem:[%s3 + $0x4] sm:$0xf]
      %v511 = vld [vmem:[%s3 + $0x8] sm:$0xf]
      %v512 = vld [vmem:[%s3 + $0xc] sm:$0xf]
      %v513 = vld [vmem:[%s4] sm:$0x1]
      %v515 = vlaneseq
      %v516 = vshrl.u32 %v515, 7
      %v517 = vsub.s32 0, %v516
      %v518 = vrot.slane %v513, %v517
      %v524 = vunpack.c.l.b16 %v509
      %v525 = vunpack.c.l.b16 %v510
      %v526 = vunpack.c.l.b16 %v511
      %v527 = vunpack.c.l.b16 %v512
      %v528 = vpack.c.b16 %v525, %v524
      %v529 = vpack.c.b16 %v527, %v526
      %v533 = vsel %vm245, %v501, 0
      %v536 = vsel %vm245, %v502, 0
      %v539 = vsel %vm245, %v503, 0
      %v542 = vsel %vm245, %v504, 0
      %v545 = vsel %vm245, %v505, 0
      %v548 = vsel %vm245, %v506, 0
      %v551 = vsel %vm245, %v507, 0
      %v554 = vsel %vm245, %v508, 0
      %556 = vmatprep.subr.bf16.mxu0 0
      %557 = vmatpush1.bf16.msra.mxu0 0
      %558 = vmatprep.subr.bf16.mxu0 0
      %559 = vmatpush1.bf16.msra.mxu0 0
      %560 = vmatprep.subr.bf16.mxu0 0
      %561 = vmatpush1.bf16.msra.mxu0 0
      %562 = vmatprep.subr.bf16.mxu0 0
      %563 = vmatpush1.bf16.msra.mxu0 0
      %564 = vmatprep.subr.bf16.mxu0 0
      %565 = vmatpush1.bf16.msra.mxu0 0
      %566 = vmatprep.subr.bf16.mxu0 0
      %567 = vmatpush1.bf16.msra.mxu0 0
      %568 = vmatprep.subr.bf16.mxu0 0
      %569 = vmatpush1.bf16.msra.mxu0 %v529
      %570 = vmatprep.subr.bf16.mxu0 0
      %571 = vmatpush1.bf16.msra.mxu0 %v528
      %572 = vmatprep.subr.bf16.mxu0 0
      %573 = vmatpush2.bf16.msra.mxu0 0
      %574 = vmatprep.subr.bf16.mxu0 0
      %575 = vmatpush2.bf16.msra.mxu0 0
      %576 = vmatprep.subr.bf16.mxu0 0
      %577 = vmatpush2.bf16.msra.mxu0 0
      %578 = vmatprep.subr.bf16.mxu0 0
      %579 = vmatpush2.bf16.msra.mxu0 0
      %580 = vmatprep.subr.bf16.mxu0 0
      %581 = vmatpush2.bf16.msra.mxu0 0
      %582 = vmatprep.subr.bf16.mxu0 0
      %583 = vmatpush2.bf16.msra.mxu0 0
      %584 = vmatprep.subr.bf16.mxu0 0
      %585 = vmatpush2.bf16.msra.mxu0 0
      %586 = vmatprep.subr.bf16.mxu0 0
      %587 = vmatpush2.bf16.msra.mxu0 0
      %588 = vmatprep.mubr.bf16.mxu0 0
      %589 = vmatmul.mubr.bf16.gmra.mxu0 %v533
      %v590 = vpop.f32.mrf.mxu0
      %v591 = vadd.f32 %v518, %v590
      %v592 = vpop.f32.mrf.mxu0
      %v593 = vpop.f32.mrf.mxu0
      %v594 = vadd.f32 %v518, %v593
      %v595 = vpop.f32.mrf.mxu0
      %596 = vmatprep.mubr.bf16.mxu0 0
      %597 = vmatmul.mubr.bf16.gmra.mxu0 %v536
      %v598 = vpop.f32.mrf.mxu0
      %v599 = vadd.f32 %v518, %v598
      %v600 = vpop.f32.mrf.mxu0
      %v601 = vpop.f32.mrf.mxu0
      %v602 = vadd.f32 %v518, %v601
      %v603 = vpop.f32.mrf.mxu0
      %604 = vmatprep.mubr.bf16.mxu0 0
      %605 = vmatmul.mubr.bf16.gmra.mxu0 %v539
      %v606 = vpop.f32.mrf.mxu0
      %v607 = vadd.f32 %v518, %v606
      %v608 = vpop.f32.mrf.mxu0
      %v609 = vpop.f32.mrf.mxu0
      %v610 = vadd.f32 %v518, %v609
      %v611 = vpop.f32.mrf.mxu0
      %612 = vmatprep.mubr.bf16.mxu0 0
      %613 = vmatmul.mubr.bf16.gmra.mxu0 %v542
      %v614 = vpop.f32.mrf.mxu0
      %v615 = vadd.f32 %v518, %v614
      %v616 = vpop.f32.mrf.mxu0
      %v617 = vpop.f32.mrf.mxu0
      %v618 = vadd.f32 %v518, %v617
      %v619 = vpop.f32.mrf.mxu0
      %620 = vmatprep.mubr.bf16.mxu0 0
      %621 = vmatmul.mubr.bf16.gmra.mxu0 %v545
      %v622 = vpop.f32.mrf.mxu0
      %v623 = vadd.f32 %v518, %v622
      %v624 = vpop.f32.mrf.mxu0
      %v625 = vpop.f32.mrf.mxu0
      %v626 = vadd.f32 %v518, %v625
      %v627 = vpop.f32.mrf.mxu0
      %628 = vmatprep.mubr.bf16.mxu0 0
      %629 = vmatmul.mubr.bf16.gmra.mxu0 %v548
      %v630 = vpop.f32.mrf.mxu0
      %v631 = vadd.f32 %v518, %v630
      %v632 = vpop.f32.mrf.mxu0
      %v633 = vpop.f32.mrf.mxu0
      %v634 = vadd.f32 %v518, %v633
      %v635 = vpop.f32.mrf.mxu0
      %636 = vmatprep.mubr.bf16.mxu0 0
      %637 = vmatmul.mubr.bf16.gmra.mxu0 %v551
      %v638 = vpop.f32.mrf.mxu0
      %v639 = vadd.f32 %v518, %v638
      %v640 = vpop.f32.mrf.mxu0
      %v641 = vpop.f32.mrf.mxu0
      %v642 = vadd.f32 %v518, %v641
      %v643 = vpop.f32.mrf.mxu0
      %644 = vmatprep.mubr.bf16.mxu0 0
      %645 = vmatmul.mubr.bf16.gmra.mxu0 %v554
      %v646 = vpop.f32.mrf.mxu0
      %v647 = vadd.f32 %v518, %v646
      %v648 = vpop.f32.mrf.mxu0
      %v649 = vpop.f32.mrf.mxu0
      %v650 = vadd.f32 %v518, %v649
      %v651 = vpop.f32.mrf.mxu0
      %652 = vdwg.mxu0
      %v653 = vpack.c.bf16 %v594, %v591
      %v654 = vpack.c.bf16 %v602, %v599
      %v655 = vpack.c.bf16 %v610, %v607
      %v656 = vpack.c.bf16 %v618, %v615
      %v657 = vpack.c.bf16 %v626, %v623
      %v658 = vpack.c.bf16 %v634, %v631
      %v659 = vpack.c.bf16 %v642, %v639
      %v660 = vpack.c.bf16 %v650, %v647
      %v669 = vunpack.c.l.b16 %v653
      %v670 = vunpack.c.h.b16 %v653
      %v671 = vunpack.c.l.b16 %v654
      %v672 = vunpack.c.h.b16 %v654
      %v673 = vunpack.c.l.b16 %v655
      %v674 = vunpack.c.h.b16 %v655
      %v675 = vunpack.c.l.b16 %v656
      %v676 = vunpack.c.h.b16 %v656
      %v677 = vunpack.c.l.b16 %v657
      %v678 = vunpack.c.h.b16 %v657
      %v679 = vunpack.c.l.b16 %v658
      %v680 = vunpack.c.h.b16 %v658
      %v681 = vunpack.c.l.b16 %v659
      %v682 = vunpack.c.h.b16 %v659
      %v683 = vunpack.c.l.b16 %v660
      %v684 = vunpack.c.h.b16 %v660
      %v685 = vpack.c.b16 %v669, %v669
      %v686 = vpack.c.b16 %v670, %v670
      %v687 = vpack.c.b16 %v671, %v671
      %v688 = vpack.c.b16 %v672, %v672
      %v689 = vpack.c.b16 %v673, %v673
      %v690 = vpack.c.b16 %v674, %v674
      %v691 = vpack.c.b16 %v675, %v675
      %v692 = vpack.c.b16 %v676, %v676
      %v693 = vpack.c.b16 %v677, %v677
      %v694 = vpack.c.b16 %v678, %v678
      %v695 = vpack.c.b16 %v679, %v679
      %v696 = vpack.c.b16 %v680, %v680
      %v697 = vpack.c.b16 %v681, %v681
      %v698 = vpack.c.b16 %v682, %v682
      %v699 = vpack.c.b16 %v683, %v683
      %v700 = vpack.c.b16 %v684, %v684
      %vm717 = vcmask 781312
      %718 = vst.msk [vmem:[%s226] sm:$0xf] %vm717, %v685
      %719 = vst.msk [vmem:[%s226 + $0x4] sm:$0xf] %vm717, %v686
      %720 = vst.msk [vmem:[%s226 + $0x8] sm:$0xf] %vm717, %v687
      %721 = vst.msk [vmem:[%s226 + $0xc] sm:$0xf] %vm717, %v688
      %722 = vst.msk [vmem:[%s226 + $0x10] sm:$0xf] %vm717, %v689
      %723 = vst.msk [vmem:[%s226 + $0x14] sm:$0xf] %vm717, %v690
      %724 = vst.msk [vmem:[%s226 + $0x18] sm:$0xf] %vm717, %v691
      %725 = vst.msk [vmem:[%s226 + $0x1c] sm:$0xf] %vm717, %v692
      %726 = vst.msk [vmem:[%s226 + $0x20] sm:$0xf] %vm717, %v693
      %727 = vst.msk [vmem:[%s226 + $0x24] sm:$0xf] %vm717, %v694
      %728 = vst.msk [vmem:[%s226 + $0x28] sm:$0xf] %vm717, %v695
      %729 = vst.msk [vmem:[%s226 + $0x2c] sm:$0xf] %vm717, %v696
      %730 = vst.msk [vmem:[%s226 + $0x30] sm:$0xf] %vm717, %v697
      %731 = vst.msk [vmem:[%s226 + $0x34] sm:$0xf] %vm717, %v698
      %732 = vst.msk [vmem:[%s226 + $0x38] sm:$0xf] %vm717, %v699
      %733 = vst.msk [vmem:[%s226 + $0x3c] sm:$0xf] %vm717, %v700
      %s734 = smul.u32 16, %s16
      %p735 = scmp.lt.s32.totalorder %s734, 31
      %s736 = scalar_select %p735, %s734, 31
      %s737 = smul.addr %s736, 4
      %s738 = scalar_lea.vmem %s5, %s737
      // Predicated region
      $region41: #{natten3d_transformer_block.5} parent=39 // pred_check
        %p739 = pneg %p144
      $region42: #{natten3d_transformer_block.5} parent=39 // pred_check_branch
        %741 = sbr.rel (%p739) target = $region44
      $region43: #{natten3d_transformer_block.5} parent=39 // pred_region
        %s742 = smul.u32 16, %s16
      $region44: #{natten3d_transformer_block.5} parent=39 // pred_fallthru
        _
    $region40: #{natten3d_transformer_block.5} parent=5 // pred_fallthru
      _
    %p743 = scmp.le.s32.totalorder 2, %s11
    // Predicated region
    $region45: #{natten3d_transformer_block.5} parent=5 // pred_check
      %p744 = pneg %p743
    $region46: #{natten3d_transformer_block.5} parent=5 // pred_check_branch
      %746 = sbr.rel (%p744) target = $region48
    $region47: #{natten3d_transformer_block.5} parent=5 // pred_region
      %s747 = ssub.s32 %s11, 2
      // Predicated region
      $region49: #{natten3d_transformer_block.5} parent=47 // pred_check
        %p748 = pneg %p150
      $region50: #{natten3d_transformer_block.5} parent=47 // pred_check_branch
        %750 = sbr.rel (%p748) target = $region52
      $region51: #{natten3d_transformer_block.5} parent=47 // pred_region
        %s751 = smul.u32 16, %s17
        %p752 = scmp.lt.s32.totalorder %s751, 31
        %s753 = scalar_select %p752, %s751, 31
        %s754 = smul.addr %s753, 4
        %s755 = scalar_lea.vmem %s5, %s754
      $region52: #{natten3d_transformer_block.5} parent=47 // pred_fallthru
        _
    $region48: #{natten3d_transformer_block.5} parent=5 // pred_fallthru
      _
  $region6: #{natten3d_transformer_block.5} parent=0 // loop_footer
    %s15 = sadd.s32 1, %s11
  $region7: #{natten3d_transformer_block.5} parent=0 // loop_footer_branch
    %10 = sbr.rel target = $region3
  $region8: #{natten3d_transformer_block.5} parent=0 // loop_exit
    _

// kernel: natten3d_transformer_block.7
$region0: #{natten3d_transformer_block.7}
  #allocation0 [shape = 'u32[]', space=smem, size = 0x4, offset = 0x4, fixed_abs, tag = 'smem constant byte address 0x4 - core index']
  #allocation1 [shape = 'u32[144,128]{1,0:T(1,128)}', space=vmem, size = 0x12000, scoped, tag = 'internal scratch']
  %s0 = inlined_call_operand.vmem [shape: bf16[256,32], index: 0, kind: input, shape index: {}]
  %s1 = inlined_call_operand.vmem [shape: f32[256,32], index: 1, kind: input, shape index: {}]
  %s2 = inlined_call_operand.vmem [shape: bf16[32,32], index: 2, kind: input, shape index: {}]
  %s3 = inlined_call_operand.vmem [shape: f32[1,32], index: 3, kind: input, shape index: {}]
  %s4 = inlined_call_operand.vmem [shape: f32[256,32], index: 4, kind: output, shape index: {}]
  %s5 = sld [smem:[#allocation0]]
  $region49: #{natten3d_transformer_block.7} parent=0
    _
  %s7 = ssub.s32 1, %s5
  %s8 = scalar_select 0, %s7, %s5
  loop: start=0, step=1, limit=4
  $region2: #{natten3d_transformer_block.7} parent=0 // loop_pre_header
    _
  $region3: #{natten3d_transformer_block.7} parent=0 // loop_header
    %s10 = sphi 0, %s14
    %p11 = scmp.ge.s32.totalorder %s10, 4
    %s20 = sphi 0, %s22
    %s23 = sphi 0, %s20
    %s24 = sphi 0, %s23
    %s40 = sphi 0, %s24
    %s46 = sphi 0, %s48
    %s49 = sphi 0, %s46
    %s50 = sphi 0, %s49
    %s66 = sphi 0, %s50
    %s70 = sphi 0, %s70
    %s72 = sphi 0, %s70
    %s73 = sphi 0, %s72
    %s87 = sphi 0, %s73
    %s91 = sphi 0, %s91
    %s93 = sphi 0, %s91
    %s94 = sphi 0, %s93
    %s108 = sphi 0, %s94
    %s114 = sphi 0, %s116
    %s117 = sphi 0, %s114
    %s118 = sphi 0, %s117
    %s134 = sphi 0, %s118
  $region4: #{natten3d_transformer_block.7} parent=0 // loop_header_branch
    %13 = sbr.rel (%p11) target = $region8
  $region5: #{natten3d_transformer_block.7} parent=0 // loop_body
    %s15 = ssub.s32 %s10, 1
    %s16 = ssub.s32 %s10, 2
    %s17 = sadd.s32 %s10, 1
    %s18 = ssub.s32 %s10, %s17
    %p19 = scmp.eq.s32.totalorder %s18, 0
    %s21 = sadd.s32 %s20, 1
    %s22 = scalar_select %p19, %s20, %s21
    %p25 = pneg %p19
    %p26 = scmp.eq.s32.totalorder %s10, 1
    %p27 = por %p25, %p26
    %p28 = scmp.ne.s32.totalorder %s20, %s23
    %p29 = scmp.eq.s32.totalorder %s10, 0
    %p30 = por %p28, %p29
    %p31 = scmp.ne.s32.totalorder %s20, %s23
    %p32 = scmp.eq.s32.totalorder %s15, 1
    %p33 = por %p31, %p32
    %p34 = scmp.ne.s32.totalorder %s23, %s24
    %p35 = scmp.eq.s32.totalorder %s15, 0
    %p36 = por %p34, %p35
    %p37 = scmp.ne.s32.totalorder %s23, %s24
    %p38 = scmp.eq.s32.totalorder %s16, 1
    %p39 = por %p37, %p38
    %p41 = scmp.ne.s32.totalorder %s24, %s40
    %p42 = scmp.eq.s32.totalorder %s16, 0
    %p43 = por %p41, %p42
    %s44 = ssub.s32 %s10, %s17
    %p45 = scmp.eq.s32.totalorder %s44, 0
    %s47 = sadd.s32 %s46, 1
    %s48 = scalar_select %p45, %s46, %s47
    %p51 = pneg %p45
    %p52 = scmp.eq.s32.totalorder %s10, 1
    %p53 = por %p51, %p52
    %p54 = scmp.ne.s32.totalorder %s46, %s49
    %p55 = scmp.eq.s32.totalorder %s10, 0
    %p56 = por %p54, %p55
    %p57 = scmp.ne.s32.totalorder %s46, %s49
    %p58 = scmp.eq.s32.totalorder %s15, 1
    %p59 = por %p57, %p58
    %p60 = scmp.ne.s32.totalorder %s49, %s50
    %p61 = scmp.eq.s32.totalorder %s15, 0
    %p62 = por %p60, %p61
    %p63 = scmp.ne.s32.totalorder %s49, %s50
    %p64 = scmp.eq.s32.totalorder %s16, 1
    %p65 = por %p63, %p64
    %p67 = scmp.ne.s32.totalorder %s50, %s66
    %p68 = scmp.eq.s32.totalorder %s16, 0
    %p69 = por %p67, %p68
    %s71 = sadd.s32 %s70, 1
    %p74 = scmp.eq.s32.totalorder %s10, 1
    %p75 = scmp.ne.s32.totalorder %s70, %s72
    %p76 = scmp.eq.s32.totalorder %s10, 0
    %p77 = por %p75, %p76
    %p78 = scmp.ne.s32.totalorder %s70, %s72
    %p79 = scmp.eq.s32.totalorder %s15, 1
    %p80 = por %p78, %p79
    %p81 = scmp.ne.s32.totalorder %s72, %s73
    %p82 = scmp.eq.s32.totalorder %s15, 0
    %p83 = por %p81, %p82
    %p84 = scmp.ne.s32.totalorder %s72, %s73
    %p85 = scmp.eq.s32.totalorder %s16, 1
    %p86 = por %p84, %p85
    %p88 = scmp.ne.s32.totalorder %s73, %s87
    %p89 = scmp.eq.s32.totalorder %s16, 0
    %p90 = por %p88, %p89
    %s92 = sadd.s32 %s91, 1
    %p95 = scmp.eq.s32.totalorder %s10, 1
    %p96 = scmp.ne.s32.totalorder %s91, %s93
    %p97 = scmp.eq.s32.totalorder %s10, 0
    %p98 = por %p96, %p97
    %p99 = scmp.ne.s32.totalorder %s91, %s93
    %p100 = scmp.eq.s32.totalorder %s15, 1
    %p101 = por %p99, %p100
    %p102 = scmp.ne.s32.totalorder %s93, %s94
    %p103 = scmp.eq.s32.totalorder %s15, 0
    %p104 = por %p102, %p103
    %p105 = scmp.ne.s32.totalorder %s93, %s94
    %p106 = scmp.eq.s32.totalorder %s16, 1
    %p107 = por %p105, %p106
    %p109 = scmp.ne.s32.totalorder %s94, %s108
    %p110 = scmp.eq.s32.totalorder %s16, 0
    %p111 = por %p109, %p110
    %s112 = ssub.s32 %s10, %s17
    %p113 = scmp.eq.s32.totalorder %s112, 0
    %s115 = sadd.s32 %s114, 1
    %s116 = scalar_select %p113, %s114, %s115
    %p119 = pneg %p113
    %p120 = scmp.eq.s32.totalorder %s10, 1
    %p121 = por %p119, %p120
    %p122 = scmp.ne.s32.totalorder %s114, %s117
    %p123 = scmp.eq.s32.totalorder %s10, 0
    %p124 = por %p122, %p123
    %p125 = scmp.ne.s32.totalorder %s114, %s117
    %p126 = scmp.eq.s32.totalorder %s15, 1
    %p127 = por %p125, %p126
    %p128 = scmp.ne.s32.totalorder %s117, %s118
    %p129 = scmp.eq.s32.totalorder %s15, 0
    %p130 = por %p128, %p129
    %p131 = scmp.ne.s32.totalorder %s117, %s118
    %p132 = scmp.eq.s32.totalorder %s16, 1
    %p133 = por %p131, %p132
    %p135 = scmp.ne.s32.totalorder %s118, %s134
    %p136 = scmp.eq.s32.totalorder %s16, 0
    %p137 = por %p135, %p136
    %p138 = scmp.le.s32.totalorder 1, %s10
    %p139 = scmp.lt.s32.totalorder %s10, 3
    %p140 = pnand %p138, %p139
    %p141 = pneg %p140
    // Predicated region
    $region9: #{natten3d_transformer_block.7} parent=5 // pred_check
      _
    $region10: #{natten3d_transformer_block.7} parent=5 // pred_check_branch
      %143 = sbr.rel (%p140) target = $region12
    $region11: #{natten3d_transformer_block.7} parent=5 // pred_region
      %s144 = ssub.s32 %s10, 1
      // Predicated region
      $region13: #{natten3d_transformer_block.7} parent=11 // pred_check
        %p145 = pneg %p83
      $region14: #{natten3d_transformer_block.7} parent=11 // pred_check_branch
        %147 = sbr.rel (%p145) target = $region16
      $region15: #{natten3d_transformer_block.7} parent=11 // pred_region
        _
      $region16: #{natten3d_transformer_block.7} parent=11 // pred_fallthru
        _
      // Predicated region
      $region17: #{natten3d_transformer_block.7} parent=11 // pred_check
        %p148 = pneg %p104
      $region18: #{natten3d_transformer_block.7} parent=11 // pred_check_branch
        %150 = sbr.rel (%p148) target = $region20
      $region19: #{natten3d_transformer_block.7} parent=11 // pred_region
        _
      $region20: #{natten3d_transformer_block.7} parent=11 // pred_fallthru
        _
    $region12: #{natten3d_transformer_block.7} parent=5 // pred_fallthru
      _
    %p151 = scmp.lt.s32.totalorder %s10, 2
    // Predicated region
    $region21: #{natten3d_transformer_block.7} parent=5 // pred_check
      %p152 = pneg %p151
    $region22: #{natten3d_transformer_block.7} parent=5 // pred_check_branch
      %154 = sbr.rel (%p152) target = $region24
    $region23: #{natten3d_transformer_block.7} parent=5 // pred_region
      // Predicated region
      $region25: #{natten3d_transformer_block.7} parent=23 // pred_check
        %p155 = pneg %p30
      $region26: #{natten3d_transformer_block.7} parent=23 // pred_check_branch
        %157 = sbr.rel (%p155) target = $region28
      $region27: #{natten3d_transformer_block.7} parent=23 // pred_region
        %s158 = smul.u32 16, %s10
        %p159 = scmp.lt.s32.totalorder %s158, 31
        %s160 = scalar_select %p159, %s158, 31
        %s161 = smul.addr %s160, 4
        %s162 = scalar_lea.vmem %s0, %s161
        %s163 = smul.u32 16, %s10
      $region28: #{natten3d_transformer_block.7} parent=23 // pred_fallthru
        _
      // Predicated region
      $region29: #{natten3d_transformer_block.7} parent=23 // pred_check
        %p164 = pneg %p56
      $region30: #{natten3d_transformer_block.7} parent=23 // pred_check_branch
        %166 = sbr.rel (%p164) target = $region32
      $region31: #{natten3d_transformer_block.7} parent=23 // pred_region
        %s167 = smul.u32 16, %s10
        %p168 = scmp.lt.s32.totalorder %s167, 31
        %s169 = scalar_select %p168, %s167, 31
        %s170 = smul.addr %s169, 8
        %s171 = scalar_lea.vmem %s1, %s170
        %s172 = smul.u32 16, %s10
      $region32: #{natten3d_transformer_block.7} parent=23 // pred_fallthru
        _
    $region24: #{natten3d_transformer_block.7} parent=5 // pred_fallthru
      _
    %p173 = scmp.le.s32.totalorder 1, %s10
    %p174 = scmp.lt.s32.totalorder %s10, 3
    %p175 = pnand %p173, %p174
    %p176 = pneg %p175
    // Predicated region
    $region33: #{natten3d_transformer_block.7} parent=5 // pred_check
      _
    $region34: #{natten3d_transformer_block.7} parent=5 // pred_check_branch
      %178 = sbr.rel (%p175) target = $region36
    $region35: #{natten3d_transformer_block.7} parent=5 // pred_region
      %s179 = ssub.s32 %s10, 1
      %s180 = smul.u32 16, %s15
      %p181 = scmp.lt.s32.totalorder %s180, 31
      %s182 = scalar_select %p181, %s180, 31
      %s183 = smul.addr %s182, 4
      %s184 = scalar_lea.vmem %s0, %s183
      %p185 = pneg %p36
      %p186 = pneg %p33
      %s187 = smul.u32 16, %s15
      %p188 = scmp.lt.s32.totalorder %s187, 31
      %s189 = scalar_select %p188, %s187, 31
      %s190 = smul.addr %s189, 8
      %s191 = scalar_lea.vmem %s1, %s190
      %p192 = pneg %p62
      %p193 = pneg %p59
      %p194 = pneg %p83
      %p195 = pneg %p80
      %p196 = pneg %p104
      %p197 = pneg %p101
      %p198 = pneg %p130
      %p199 = pneg %p127
      %s200 = smul.u32 16, %s15
      %p201 = scmp.lt.s32.totalorder %s200, 31
      %s202 = scalar_select %p201, %s200, 31
      %s203 = smul.addr %s202, 8
      %s204 = scalar_lea.vmem %s4, %s203
      %s205 = smul.u32 16, %s15
      %p206 = scmp.lt.s32.totalorder %s205, 31
      %s207 = scalar_select %p206, %s205, 31
      %s208 = smul.addr %s207, 4
      %s209 = scalar_lea.vmem %s0, %s208
      %s210 = smul.u32 16, %s15
      %s211 = smul.u32 16, %s15
      %p212 = scmp.lt.s32.totalorder %s211, 31
      %s213 = scalar_select %p212, %s211, 31
      %s214 = smul.addr %s213, 8
      %s215 = scalar_lea.vmem %s1, %s214
      %s216 = smul.u32 16, %s15
      %s217 = smul.u32 16, %s15
      %p218 = scmp.lt.s32.totalorder %s217, 31
      %s219 = scalar_select %p218, %s217, 31
      %s220 = smul.addr %s219, 8
      %s221 = scalar_lea.vmem %s4, %s220
      %s222 = smul.u32 16, %s15
      %v224 = vld [vmem:[%s209] sm:$0xf]
      %v225 = vld [vmem:[%s209 + $0x4] sm:$0xf]
      %v226 = vld [vmem:[%s209 + $0x8] sm:$0xf]
      %v227 = vld [vmem:[%s209 + $0xc] sm:$0xf]
      %v228 = vld [vmem:[%s209 + $0x10] sm:$0xf]
      %v229 = vld [vmem:[%s209 + $0x14] sm:$0xf]
      %v230 = vld [vmem:[%s209 + $0x18] sm:$0xf]
      %v231 = vld [vmem:[%s209 + $0x1c] sm:$0xf]
      %v232 = vld [vmem:[%s209 + $0x20] sm:$0xf]
      %v233 = vld [vmem:[%s209 + $0x24] sm:$0xf]
      %v234 = vld [vmem:[%s209 + $0x28] sm:$0xf]
      %v235 = vld [vmem:[%s209 + $0x2c] sm:$0xf]
      %v236 = vld [vmem:[%s209 + $0x30] sm:$0xf]
      %v237 = vld [vmem:[%s209 + $0x34] sm:$0xf]
      %v238 = vld [vmem:[%s209 + $0x38] sm:$0xf]
      %v239 = vld [vmem:[%s209 + $0x3c] sm:$0xf]
      %v240 = vld [vmem:[%s2] sm:$0xf]
      %v241 = vld [vmem:[%s2 + $0x4] sm:$0xf]
      %v242 = vld [vmem:[%s2 + $0x8] sm:$0xf]
      %v243 = vld [vmem:[%s2 + $0xc] sm:$0xf]
      %v244 = vld [vmem:[%s3] sm:$0x1]
      %v246 = vlaneseq
      %v247 = vshrl.u32 %v246, 7
      %v248 = vsub.s32 0, %v247
      %v249 = vrot.slane %v244, %v248
      %v267 = vunpack.c.l.b16 %v224
      %v268 = vunpack.c.l.b16 %v225
      %v269 = vunpack.c.l.b16 %v226
      %v270 = vunpack.c.l.b16 %v227
      %v271 = vunpack.c.l.b16 %v228
      %v272 = vunpack.c.l.b16 %v229
      %v273 = vunpack.c.l.b16 %v230
      %v274 = vunpack.c.l.b16 %v231
      %v275 = vunpack.c.l.b16 %v232
      %v276 = vunpack.c.l.b16 %v233
      %v277 = vunpack.c.l.b16 %v234
      %v278 = vunpack.c.l.b16 %v235
      %v279 = vunpack.c.l.b16 %v236
      %v280 = vunpack.c.l.b16 %v237
      %v281 = vunpack.c.l.b16 %v238
      %v282 = vunpack.c.l.b16 %v239
      %v283 = vpack.c.b16 %v268, %v267
      %v284 = vpack.c.b16 %v270, %v269
      %v285 = vpack.c.b16 %v272, %v271
      %v286 = vpack.c.b16 %v274, %v273
      %v287 = vpack.c.b16 %v276, %v275
      %v288 = vpack.c.b16 %v278, %v277
      %v289 = vpack.c.b16 %v280, %v279
      %v290 = vpack.c.b16 %v282, %v281
      %v295 = vunpack.c.l.b16 %v240
      %v296 = vunpack.c.l.b16 %v241
      %v297 = vunpack.c.l.b16 %v242
      %v298 = vunpack.c.l.b16 %v243
      %v299 = vpack.c.b16 %v296, %v295
      %v300 = vpack.c.b16 %v298, %v297
      %vm303 = vcmask 261120
      %v305 = vsel %vm303, %v283, 0
      %v308 = vsel %vm303, %v284, 0
      %v311 = vsel %vm303, %v285, 0
      %v314 = vsel %vm303, %v286, 0
      %v317 = vsel %vm303, %v287, 0
      %v320 = vsel %vm303, %v288, 0
      %v323 = vsel %vm303, %v289, 0
      %v326 = vsel %vm303, %v290, 0
      %328 = vmatprep.subr.bf16.mxu0 0
      %329 = vmatpush1.bf16.msra.mxu0 0
      %330 = vmatprep.subr.bf16.mxu0 0
      %331 = vmatpush1.bf16.msra.mxu0 0
      %332 = vmatprep.subr.bf16.mxu0 0
      %333 = vmatpush1.bf16.msra.mxu0 0
      %334 = vmatprep.subr.bf16.mxu0 0
      %335 = vmatpush1.bf16.msra.mxu0 0
      %336 = vmatprep.subr.bf16.mxu0 0
      %337 = vmatpush1.bf16.msra.mxu0 0
      %338 = vmatprep.subr.bf16.mxu0 0
      %339 = vmatpush1.bf16.msra.mxu0 0
      %340 = vmatprep.subr.bf16.mxu0 0
      %341 = vmatpush1.bf16.msra.mxu0 %v300
      %342 = vmatprep.subr.bf16.mxu0 0
      %343 = vmatpush1.bf16.msra.mxu0 %v299
      %344 = vmatprep.subr.bf16.mxu0 0
      %345 = vmatpush2.bf16.msra.mxu0 0
      %346 = vmatprep.subr.bf16.mxu0 0
      %347 = vmatpush2.bf16.msra.mxu0 0
      %348 = vmatprep.subr.bf16.mxu0 0
      %349 = vmatpush2.bf16.msra.mxu0 0
      %350 = vmatprep.subr.bf16.mxu0 0
      %351 = vmatpush2.bf16.msra.mxu0 0
      %352 = vmatprep.subr.bf16.mxu0 0
      %353 = vmatpush2.bf16.msra.mxu0 0
      %354 = vmatprep.subr.bf16.mxu0 0
      %355 = vmatpush2.bf16.msra.mxu0 0
      %356 = vmatprep.subr.bf16.mxu0 0
      %357 = vmatpush2.bf16.msra.mxu0 0
      %358 = vmatprep.subr.bf16.mxu0 0
      %359 = vmatpush2.bf16.msra.mxu0 0
      %360 = vmatprep.mubr.bf16.mxu0 0
      %361 = vmatmul.mubr.bf16.gmra.mxu0 %v305
      %v362 = vpop.f32.mrf.mxu0
      %v363 = vadd.f32 %v249, %v362
      %v364 = vpop.f32.mrf.mxu0
      %v365 = vpop.f32.mrf.mxu0
      %v366 = vadd.f32 %v249, %v365
      %v367 = vpop.f32.mrf.mxu0
      %368 = vmatprep.mubr.bf16.mxu0 0
      %369 = vmatmul.mubr.bf16.gmra.mxu0 %v308
      %v370 = vpop.f32.mrf.mxu0
      %v371 = vadd.f32 %v249, %v370
      %v372 = vpop.f32.mrf.mxu0
      %v373 = vpop.f32.mrf.mxu0
      %v374 = vadd.f32 %v249, %v373
      %v375 = vpop.f32.mrf.mxu0
      %376 = vmatprep.mubr.bf16.mxu0 0
      %377 = vmatmul.mubr.bf16.gmra.mxu0 %v311
      %v378 = vpop.f32.mrf.mxu0
      %v379 = vadd.f32 %v249, %v378
      %v380 = vpop.f32.mrf.mxu0
      %v381 = vpop.f32.mrf.mxu0
      %v382 = vadd.f32 %v249, %v381
      %v383 = vpop.f32.mrf.mxu0
      %384 = vmatprep.mubr.bf16.mxu0 0
      %385 = vmatmul.mubr.bf16.gmra.mxu0 %v314
      %v386 = vpop.f32.mrf.mxu0
      %v387 = vadd.f32 %v249, %v386
      %v388 = vpop.f32.mrf.mxu0
      %v389 = vpop.f32.mrf.mxu0
      %v390 = vadd.f32 %v249, %v389
      %v391 = vpop.f32.mrf.mxu0
      %392 = vmatprep.mubr.bf16.mxu0 0
      %393 = vmatmul.mubr.bf16.gmra.mxu0 %v317
      %v394 = vpop.f32.mrf.mxu0
      %v395 = vadd.f32 %v249, %v394
      %v396 = vpop.f32.mrf.mxu0
      %v397 = vpop.f32.mrf.mxu0
      %v398 = vadd.f32 %v249, %v397
      %v399 = vpop.f32.mrf.mxu0
      %400 = vmatprep.mubr.bf16.mxu0 0
      %401 = vmatmul.mubr.bf16.gmra.mxu0 %v320
      %v402 = vpop.f32.mrf.mxu0
      %v403 = vadd.f32 %v249, %v402
      %v404 = vpop.f32.mrf.mxu0
      %v405 = vpop.f32.mrf.mxu0
      %v406 = vadd.f32 %v249, %v405
      %v407 = vpop.f32.mrf.mxu0
      %408 = vmatprep.mubr.bf16.mxu0 0
      %409 = vmatmul.mubr.bf16.gmra.mxu0 %v323
      %v410 = vpop.f32.mrf.mxu0
      %v411 = vadd.f32 %v249, %v410
      %v412 = vpop.f32.mrf.mxu0
      %v413 = vpop.f32.mrf.mxu0
      %v414 = vadd.f32 %v249, %v413
      %v415 = vpop.f32.mrf.mxu0
      %416 = vmatprep.mubr.bf16.mxu0 0
      %417 = vmatmul.mubr.bf16.gmra.mxu0 %v326
      %v418 = vpop.f32.mrf.mxu0
      %v419 = vadd.f32 %v249, %v418
      %v420 = vpop.f32.mrf.mxu0
      %v421 = vpop.f32.mrf.mxu0
      %v422 = vadd.f32 %v249, %v421
      %v423 = vpop.f32.mrf.mxu0
      %424 = vdwg.mxu0
      %v425 = vld [vmem:[%s215] sm:$0xff]
      %v426 = vld [vmem:[%s215 + $0x8] sm:$0xff]
      %v427 = vld [vmem:[%s215 + $0x10] sm:$0xff]
      %v428 = vld [vmem:[%s215 + $0x18] sm:$0xff]
      %v429 = vld [vmem:[%s215 + $0x20] sm:$0xff]
      %v430 = vld [vmem:[%s215 + $0x28] sm:$0xff]
      %v431 = vld [vmem:[%s215 + $0x30] sm:$0xff]
      %v432 = vld [vmem:[%s215 + $0x38] sm:$0xff]
      %v433 = vld [vmem:[%s215 + $0x40] sm:$0xff]
      %v434 = vld [vmem:[%s215 + $0x48] sm:$0xff]
      %v435 = vld [vmem:[%s215 + $0x50] sm:$0xff]
      %v436 = vld [vmem:[%s215 + $0x58] sm:$0xff]
      %v437 = vld [vmem:[%s215 + $0x60] sm:$0xff]
      %v438 = vld [vmem:[%s215 + $0x68] sm:$0xff]
      %v439 = vld [vmem:[%s215 + $0x70] sm:$0xff]
      %v440 = vld [vmem:[%s215 + $0x78] sm:$0xff]
      %v441 = vadd.f32 %v363, %v425
      %v442 = vadd.f32 %v366, %v426
      %v443 = vadd.f32 %v371, %v427
      %v444 = vadd.f32 %v374, %v428
      %v445 = vadd.f32 %v379, %v429
      %v446 = vadd.f32 %v382, %v430
      %v447 = vadd.f32 %v387, %v431
      %v448 = vadd.f32 %v390, %v432
      %v449 = vadd.f32 %v395, %v433
      %v450 = vadd.f32 %v398, %v434
      %v451 = vadd.f32 %v403, %v435
      %v452 = vadd.f32 %v406, %v436
      %v453 = vadd.f32 %v411, %v437
      %v454 = vadd.f32 %v414, %v438
      %v455 = vadd.f32 %v419, %v439
      %v456 = vadd.f32 %v422, %v440
      %457 = vst.msk [vmem:[%s221] sm:$0xff] %vm303, %v441
      %458 = vst.msk [vmem:[%s221 + $0x8] sm:$0xff] %vm303, %v442
      %459 = vst.msk [vmem:[%s221 + $0x10] sm:$0xff] %vm303, %v443
      %460 = vst.msk [vmem:[%s221 + $0x18] sm:$0xff] %vm303, %v444
      %461 = vst.msk [vmem:[%s221 + $0x20] sm:$0xff] %vm303, %v445
      %462 = vst.msk [vmem:[%s221 + $0x28] sm:$0xff] %vm303, %v446
      %463 = vst.msk [vmem:[%s221 + $0x30] sm:$0xff] %vm303, %v447
      %464 = vst.msk [vmem:[%s221 + $0x38] sm:$0xff] %vm303, %v448
      %465 = vst.msk [vmem:[%s221 + $0x40] sm:$0xff] %vm303, %v449
      %466 = vst.msk [vmem:[%s221 + $0x48] sm:$0xff] %vm303, %v450
      %467 = vst.msk [vmem:[%s221 + $0x50] sm:$0xff] %vm303, %v451
      %468 = vst.msk [vmem:[%s221 + $0x58] sm:$0xff] %vm303, %v452
      %469 = vst.msk [vmem:[%s221 + $0x60] sm:$0xff] %vm303, %v453
      %470 = vst.msk [vmem:[%s221 + $0x68] sm:$0xff] %vm303, %v454
      %471 = vst.msk [vmem:[%s221 + $0x70] sm:$0xff] %vm303, %v455
      %472 = vst.msk [vmem:[%s221 + $0x78] sm:$0xff] %vm303, %v456
      %s473 = smul.u32 16, %s15
      %p474 = scmp.lt.s32.totalorder %s473, 31
      %s475 = scalar_select %p474, %s473, 31
      %s476 = smul.addr %s475, 8
      %s477 = scalar_lea.vmem %s4, %s476
      // Predicated region
      $region37: #{natten3d_transformer_block.7} parent=35 // pred_check
        %p478 = pneg %p127
      $region38: #{natten3d_transformer_block.7} parent=35 // pred_check_branch
        %480 = sbr.rel (%p478) target = $region40
      $region39: #{natten3d_transformer_block.7} parent=35 // pred_region
        %s481 = smul.u32 16, %s15
      $region40: #{natten3d_transformer_block.7} parent=35 // pred_fallthru
        _
    $region36: #{natten3d_transformer_block.7} parent=5 // pred_fallthru
      _
    %p482 = scmp.le.s32.totalorder 2, %s10
    // Predicated region
    $region41: #{natten3d_transformer_block.7} parent=5 // pred_check
      %p483 = pneg %p482
    $region42: #{natten3d_transformer_block.7} parent=5 // pred_check_branch
      %485 = sbr.rel (%p483) target = $region44
    $region43: #{natten3d_transformer_block.7} parent=5 // pred_region
      %s486 = ssub.s32 %s10, 2
      // Predicated region
      $region45: #{natten3d_transformer_block.7} parent=43 // pred_check
        %p487 = pneg %p133
      $region46: #{natten3d_transformer_block.7} parent=43 // pred_check_branch
        %489 = sbr.rel (%p487) target = $region48
      $region47: #{natten3d_transformer_block.7} parent=43 // pred_region
        %s490 = smul.u32 16, %s16
        %p491 = scmp.lt.s32.totalorder %s490, 31
        %s492 = scalar_select %p491, %s490, 31
        %s493 = smul.addr %s492, 8
        %s494 = scalar_lea.vmem %s4, %s493
      $region48: #{natten3d_transformer_block.7} parent=43 // pred_fallthru
        _
    $region44: #{natten3d_transformer_block.7} parent=5 // pred_fallthru
      _
  $region6: #{natten3d_transformer_block.7} parent=0 // loop_footer
    %s14 = sadd.s32 1, %s10
  $region7: #{natten3d_transformer_block.7} parent=0 // loop_footer_branch
    %9 = sbr.rel target = $region3
  $region8: #{natten3d_transformer_block.7} parent=0 // loop_exit
    _

// kernel: natten3d_transformer_block.8
$region0: #{natten3d_transformer_block.8}
  #allocation0 [shape = 'u32[]', space=smem, size = 0x4, offset = 0x4, fixed_abs, tag = 'smem constant byte address 0x4 - core index']
  #allocation1 [shape = 'u32[144,128]{1,0:T(1,128)}', space=vmem, size = 0x12000, scoped, tag = 'internal scratch']
  %s0 = inlined_call_operand.vmem [shape: f32[256,32], index: 0, kind: input, shape index: {}]
  %s1 = inlined_call_operand.vmem [shape: f32[1,32], index: 1, kind: input, shape index: {}]
  %s2 = inlined_call_operand.vmem [shape: f32[1,32], index: 2, kind: input, shape index: {}]
  %s3 = inlined_call_operand.vmem [shape: bf16[32,128], index: 3, kind: input, shape index: {}]
  %s4 = inlined_call_operand.vmem [shape: f32[1,128], index: 4, kind: input, shape index: {}]
  %s5 = inlined_call_operand.vmem [shape: bf16[256,128], index: 5, kind: output, shape index: {}]
  %s6 = sld [smem:[#allocation0]]
  $region53: #{natten3d_transformer_block.8} parent=0
    _
  %s8 = ssub.s32 1, %s6
  %s9 = scalar_select 0, %s8, %s6
  loop: start=0, step=1, limit=4
  $region2: #{natten3d_transformer_block.8} parent=0 // loop_pre_header
    _
  $region3: #{natten3d_transformer_block.8} parent=0 // loop_header
    %s11 = sphi 0, %s15
    %p12 = scmp.ge.s32.totalorder %s11, 4
    %s21 = sphi 0, %s23
    %s24 = sphi 0, %s21
    %s25 = sphi 0, %s24
    %s41 = sphi 0, %s25
    %s45 = sphi 0, %s45
    %s47 = sphi 0, %s45
    %s48 = sphi 0, %s47
    %s62 = sphi 0, %s48
    %s66 = sphi 0, %s66
    %s68 = sphi 0, %s66
    %s69 = sphi 0, %s68
    %s83 = sphi 0, %s69
    %s87 = sphi 0, %s87
    %s89 = sphi 0, %s87
    %s90 = sphi 0, %s89
    %s104 = sphi 0, %s90
    %s108 = sphi 0, %s108
    %s110 = sphi 0, %s108
    %s111 = sphi 0, %s110
    %s125 = sphi 0, %s111
    %s131 = sphi 0, %s133
    %s134 = sphi 0, %s131
    %s135 = sphi 0, %s134
    %s151 = sphi 0, %s135
  $region4: #{natten3d_transformer_block.8} parent=0 // loop_header_branch
    %14 = sbr.rel (%p12) target = $region8
  $region5: #{natten3d_transformer_block.8} parent=0 // loop_body
    %s16 = ssub.s32 %s11, 1
    %s17 = ssub.s32 %s11, 2
    %s18 = sadd.s32 %s11, 1
    %s19 = ssub.s32 %s11, %s18
    %p20 = scmp.eq.s32.totalorder %s19, 0
    %s22 = sadd.s32 %s21, 1
    %s23 = scalar_select %p20, %s21, %s22
    %p26 = pneg %p20
    %p27 = scmp.eq.s32.totalorder %s11, 1
    %p28 = por %p26, %p27
    %p29 = scmp.ne.s32.totalorder %s21, %s24
    %p30 = scmp.eq.s32.totalorder %s11, 0
    %p31 = por %p29, %p30
    %p32 = scmp.ne.s32.totalorder %s21, %s24
    %p33 = scmp.eq.s32.totalorder %s16, 1
    %p34 = por %p32, %p33
    %p35 = scmp.ne.s32.totalorder %s24, %s25
    %p36 = scmp.eq.s32.totalorder %s16, 0
    %p37 = por %p35, %p36
    %p38 = scmp.ne.s32.totalorder %s24, %s25
    %p39 = scmp.eq.s32.totalorder %s17, 1
    %p40 = por %p38, %p39
    %p42 = scmp.ne.s32.totalorder %s25, %s41
    %p43 = scmp.eq.s32.totalorder %s17, 0
    %p44 = por %p42, %p43
    %s46 = sadd.s32 %s45, 1
    %p49 = scmp.eq.s32.totalorder %s11, 1
    %p50 = scmp.ne.s32.totalorder %s45, %s47
    %p51 = scmp.eq.s32.totalorder %s11, 0
    %p52 = por %p50, %p51
    %p53 = scmp.ne.s32.totalorder %s45, %s47
    %p54 = scmp.eq.s32.totalorder %s16, 1
    %p55 = por %p53, %p54
    %p56 = scmp.ne.s32.totalorder %s47, %s48
    %p57 = scmp.eq.s32.totalorder %s16, 0
    %p58 = por %p56, %p57
    %p59 = scmp.ne.s32.totalorder %s47, %s48
    %p60 = scmp.eq.s32.totalorder %s17, 1
    %p61 = por %p59, %p60
    %p63 = scmp.ne.s32.totalorder %s48, %s62
    %p64 = scmp.eq.s32.totalorder %s17, 0
    %p65 = por %p63, %p64
    %s67 = sadd.s32 %s66, 1
    %p70 = scmp.eq.s32.totalorder %s11, 1
    %p71 = scmp.ne.s32.totalorder %s66, %s68
    %p72 = scmp.eq.s32.totalorder %s11, 0
    %p73 = por %p71, %p72
    %p74 = scmp.ne.s32.totalorder %s66, %s68
    %p75 = scmp.eq.s32.totalorder %s16, 1
    %p76 = por %p74, %p75
    %p77 = scmp.ne.s32.totalorder %s68, %s69
    %p78 = scmp.eq.s32.totalorder %s16, 0
    %p79 = por %p77, %p78
    %p80 = scmp.ne.s32.totalorder %s68, %s69
    %p81 = scmp.eq.s32.totalorder %s17, 1
    %p82 = por %p80, %p81
    %p84 = scmp.ne.s32.totalorder %s69, %s83
    %p85 = scmp.eq.s32.totalorder %s17, 0
    %p86 = por %p84, %p85
    %s88 = sadd.s32 %s87, 1
    %p91 = scmp.eq.s32.totalorder %s11, 1
    %p92 = scmp.ne.s32.totalorder %s87, %s89
    %p93 = scmp.eq.s32.totalorder %s11, 0
    %p94 = por %p92, %p93
    %p95 = scmp.ne.s32.totalorder %s87, %s89
    %p96 = scmp.eq.s32.totalorder %s16, 1
    %p97 = por %p95, %p96
    %p98 = scmp.ne.s32.totalorder %s89, %s90
    %p99 = scmp.eq.s32.totalorder %s16, 0
    %p100 = por %p98, %p99
    %p101 = scmp.ne.s32.totalorder %s89, %s90
    %p102 = scmp.eq.s32.totalorder %s17, 1
    %p103 = por %p101, %p102
    %p105 = scmp.ne.s32.totalorder %s90, %s104
    %p106 = scmp.eq.s32.totalorder %s17, 0
    %p107 = por %p105, %p106
    %s109 = sadd.s32 %s108, 1
    %p112 = scmp.eq.s32.totalorder %s11, 1
    %p113 = scmp.ne.s32.totalorder %s108, %s110
    %p114 = scmp.eq.s32.totalorder %s11, 0
    %p115 = por %p113, %p114
    %p116 = scmp.ne.s32.totalorder %s108, %s110
    %p117 = scmp.eq.s32.totalorder %s16, 1
    %p118 = por %p116, %p117
    %p119 = scmp.ne.s32.totalorder %s110, %s111
    %p120 = scmp.eq.s32.totalorder %s16, 0
    %p121 = por %p119, %p120
    %p122 = scmp.ne.s32.totalorder %s110, %s111
    %p123 = scmp.eq.s32.totalorder %s17, 1
    %p124 = por %p122, %p123
    %p126 = scmp.ne.s32.totalorder %s111, %s125
    %p127 = scmp.eq.s32.totalorder %s17, 0
    %p128 = por %p126, %p127
    %s129 = ssub.s32 %s11, %s18
    %p130 = scmp.eq.s32.totalorder %s129, 0
    %s132 = sadd.s32 %s131, 1
    %s133 = scalar_select %p130, %s131, %s132
    %p136 = pneg %p130
    %p137 = scmp.eq.s32.totalorder %s11, 1
    %p138 = por %p136, %p137
    %p139 = scmp.ne.s32.totalorder %s131, %s134
    %p140 = scmp.eq.s32.totalorder %s11, 0
    %p141 = por %p139, %p140
    %p142 = scmp.ne.s32.totalorder %s131, %s134
    %p143 = scmp.eq.s32.totalorder %s16, 1
    %p144 = por %p142, %p143
    %p145 = scmp.ne.s32.totalorder %s134, %s135
    %p146 = scmp.eq.s32.totalorder %s16, 0
    %p147 = por %p145, %p146
    %p148 = scmp.ne.s32.totalorder %s134, %s135
    %p149 = scmp.eq.s32.totalorder %s17, 1
    %p150 = por %p148, %p149
    %p152 = scmp.ne.s32.totalorder %s135, %s151
    %p153 = scmp.eq.s32.totalorder %s17, 0
    %p154 = por %p152, %p153
    %p155 = scmp.le.s32.totalorder 1, %s11
    %p156 = scmp.lt.s32.totalorder %s11, 3
    %p157 = pnand %p155, %p156
    %p158 = pneg %p157
    // Predicated region
    $region9: #{natten3d_transformer_block.8} parent=5 // pred_check
      _
    $region10: #{natten3d_transformer_block.8} parent=5 // pred_check_branch
      %160 = sbr.rel (%p157) target = $region12
    $region11: #{natten3d_transformer_block.8} parent=5 // pred_region
      %s161 = ssub.s32 %s11, 1
      // Predicated region
      $region13: #{natten3d_transformer_block.8} parent=11 // pred_check
        %p162 = pneg %p58
      $region14: #{natten3d_transformer_block.8} parent=11 // pred_check_branch
        %164 = sbr.rel (%p162) target = $region16
      $region15: #{natten3d_transformer_block.8} parent=11 // pred_region
        _
      $region16: #{natten3d_transformer_block.8} parent=11 // pred_fallthru
        _
      // Predicated region
      $region17: #{natten3d_transformer_block.8} parent=11 // pred_check
        %p165 = pneg %p79
      $region18: #{natten3d_transformer_block.8} parent=11 // pred_check_branch
        %167 = sbr.rel (%p165) target = $region20
      $region19: #{natten3d_transformer_block.8} parent=11 // pred_region
        _
      $region20: #{natten3d_transformer_block.8} parent=11 // pred_fallthru
        _
      // Predicated region
      $region21: #{natten3d_transformer_block.8} parent=11 // pred_check
        %p168 = pneg %p100
      $region22: #{natten3d_transformer_block.8} parent=11 // pred_check_branch
        %170 = sbr.rel (%p168) target = $region24
      $region23: #{natten3d_transformer_block.8} parent=11 // pred_region
        _
      $region24: #{natten3d_transformer_block.8} parent=11 // pred_fallthru
        _
      // Predicated region
      $region25: #{natten3d_transformer_block.8} parent=11 // pred_check
        %p171 = pneg %p121
      $region26: #{natten3d_transformer_block.8} parent=11 // pred_check_branch
        %173 = sbr.rel (%p171) target = $region28
      $region27: #{natten3d_transformer_block.8} parent=11 // pred_region
        _
      $region28: #{natten3d_transformer_block.8} parent=11 // pred_fallthru
        _
    $region12: #{natten3d_transformer_block.8} parent=5 // pred_fallthru
      _
    %p174 = scmp.lt.s32.totalorder %s11, 2
    // Predicated region
    $region29: #{natten3d_transformer_block.8} parent=5 // pred_check
      %p175 = pneg %p174
    $region30: #{natten3d_transformer_block.8} parent=5 // pred_check_branch
      %177 = sbr.rel (%p175) target = $region32
    $region31: #{natten3d_transformer_block.8} parent=5 // pred_region
      // Predicated region
      $region33: #{natten3d_transformer_block.8} parent=31 // pred_check
        %p178 = pneg %p31
      $region34: #{natten3d_transformer_block.8} parent=31 // pred_check_branch
        %180 = sbr.rel (%p178) target = $region36
      $region35: #{natten3d_transformer_block.8} parent=31 // pred_region
        %s181 = smul.u32 16, %s11
        %p182 = scmp.lt.s32.totalorder %s181, 31
        %s183 = scalar_select %p182, %s181, 31
        %s184 = smul.addr %s183, 8
        %s185 = scalar_lea.vmem %s0, %s184
        %s186 = smul.u32 16, %s11
      $region36: #{natten3d_transformer_block.8} parent=31 // pred_fallthru
        _
    $region32: #{natten3d_transformer_block.8} parent=5 // pred_fallthru
      _
    %p187 = scmp.le.s32.totalorder 1, %s11
    %p188 = scmp.lt.s32.totalorder %s11, 3
    %p189 = pnand %p187, %p188
    %p190 = pneg %p189
    // Predicated region
    $region37: #{natten3d_transformer_block.8} parent=5 // pred_check
      _
    $region38: #{natten3d_transformer_block.8} parent=5 // pred_check_branch
      %192 = sbr.rel (%p189) target = $region40
    $region39: #{natten3d_transformer_block.8} parent=5 // pred_region
      %s193 = ssub.s32 %s11, 1
      %s194 = smul.u32 16, %s16
      %p195 = scmp.lt.s32.totalorder %s194, 31
      %s196 = scalar_select %p195, %s194, 31
      %s197 = smul.addr %s196, 8
      %s198 = scalar_lea.vmem %s0, %s197
      %p199 = pneg %p37
      %p200 = pneg %p34
      %p201 = pneg %p58
      %p202 = pneg %p55
      %p203 = pneg %p79
      %p204 = pneg %p76
      %p205 = pneg %p100
      %p206 = pneg %p97
      %p207 = pneg %p121
      %p208 = pneg %p118
      %p209 = pneg %p147
      %p210 = pneg %p144
      %s211 = smul.u32 16, %s16
      %p212 = scmp.lt.s32.totalorder %s211, 31
      %s213 = scalar_select %p212, %s211, 31
      %s214 = smul.addr %s213, 4
      %s215 = scalar_lea.vmem %s5, %s214
      %s216 = smul.u32 16, %s16
      %p217 = scmp.lt.s32.totalorder %s216, 31
      %s218 = scalar_select %p217, %s216, 31
      %s219 = smul.addr %s218, 8
      %s220 = scalar_lea.vmem %s0, %s219
      %s221 = smul.u32 16, %s16
      %s222 = smul.u32 16, %s16
      %p223 = scmp.lt.s32.totalorder %s222, 31
      %s224 = scalar_select %p223, %s222, 31
      %s225 = smul.addr %s224, 4
      %s226 = scalar_lea.vmem %s5, %s225
      %s227 = smul.u32 16, %s16
      %v229 = vld [vmem:[%s220] sm:$0xff]
      %v230 = vld [vmem:[%s220 + $0x8] sm:$0xff]
      %v231 = vld [vmem:[%s220 + $0x10] sm:$0xff]
      %v232 = vld [vmem:[%s220 + $0x18] sm:$0xff]
      %v233 = vld [vmem:[%s220 + $0x20] sm:$0xff]
      %v234 = vld [vmem:[%s220 + $0x28] sm:$0xff]
      %v235 = vld [vmem:[%s220 + $0x30] sm:$0xff]
      %v236 = vld [vmem:[%s220 + $0x38] sm:$0xff]
      %v237 = vld [vmem:[%s220 + $0x40] sm:$0xff]
      %v238 = vld [vmem:[%s220 + $0x48] sm:$0xff]
      %v239 = vld [vmem:[%s220 + $0x50] sm:$0xff]
      %v240 = vld [vmem:[%s220 + $0x58] sm:$0xff]
      %v241 = vld [vmem:[%s220 + $0x60] sm:$0xff]
      %v242 = vld [vmem:[%s220 + $0x68] sm:$0xff]
      %v243 = vld [vmem:[%s220 + $0x70] sm:$0xff]
      %v244 = vld [vmem:[%s220 + $0x78] sm:$0xff]
      %vm245 = vcmask 261120
      %v246 = vsel %vm245, %v229, 0.0
      %247 = vadd.xlane.f32.xlu0 %v246
      %v248 = vpop.xlane.xlu0 %247
      %v249 = vsel %vm245, %v230, 0.0
      %250 = vadd.xlane.f32.xlu0 %v249
      %v251 = vpop.xlane.xlu0 %250
      %v252 = vsel %vm245, %v231, 0.0
      %253 = vadd.xlane.f32.xlu0 %v252
      %v254 = vpop.xlane.xlu0 %253
      %v255 = vsel %vm245, %v232, 0.0
      %256 = vadd.xlane.f32.xlu0 %v255
      %v257 = vpop.xlane.xlu0 %256
      %v258 = vsel %vm245, %v233, 0.0
      %259 = vadd.xlane.f32.xlu0 %v258
      %v260 = vpop.xlane.xlu0 %259
      %v261 = vsel %vm245, %v234, 0.0
      %262 = vadd.xlane.f32.xlu0 %v261
      %v263 = vpop.xlane.xlu0 %262
      %v264 = vsel %vm245, %v235, 0.0
      %265 = vadd.xlane.f32.xlu0 %v264
      %v266 = vpop.xlane.xlu0 %265
      %v267 = vsel %vm245, %v236, 0.0
      %268 = vadd.xlane.f32.xlu0 %v267
      %v269 = vpop.xlane.xlu0 %268
      %v270 = vsel %vm245, %v237, 0.0
      %271 = vadd.xlane.f32.xlu0 %v270
      %v272 = vpop.xlane.xlu0 %271
      %v273 = vsel %vm245, %v238, 0.0
      %274 = vadd.xlane.f32.xlu0 %v273
      %v275 = vpop.xlane.xlu0 %274
      %v276 = vsel %vm245, %v239, 0.0
      %277 = vadd.xlane.f32.xlu0 %v276
      %v278 = vpop.xlane.xlu0 %277
      %v279 = vsel %vm245, %v240, 0.0
      %280 = vadd.xlane.f32.xlu0 %v279
      %v281 = vpop.xlane.xlu0 %280
      %v282 = vsel %vm245, %v241, 0.0
      %283 = vadd.xlane.f32.xlu0 %v282
      %v284 = vpop.xlane.xlu0 %283
      %v285 = vsel %vm245, %v242, 0.0
      %286 = vadd.xlane.f32.xlu0 %v285
      %v287 = vpop.xlane.xlu0 %286
      %v288 = vsel %vm245, %v243, 0.0
      %289 = vadd.xlane.f32.xlu0 %v288
      %v290 = vpop.xlane.xlu0 %289
      %v291 = vsel %vm245, %v244, 0.0
      %292 = vadd.xlane.f32.xlu0 %v291
      %v293 = vpop.xlane.xlu0 %292
      %v294 = vrcp.pop 32.0
      %v295 = vmul.f32 %v248, %v294
      %v296 = vmul.f32 %v251, %v294
      %v297 = vmul.f32 %v254, %v294
      %v298 = vmul.f32 %v257, %v294
      %v299 = vmul.f32 %v260, %v294
      %v300 = vmul.f32 %v263, %v294
      %v301 = vmul.f32 %v266, %v294
      %v302 = vmul.f32 %v269, %v294
      %v303 = vmul.f32 %v272, %v294
      %v304 = vmul.f32 %v275, %v294
      %v305 = vmul.f32 %v278, %v294
      %v306 = vmul.f32 %v281, %v294
      %v307 = vmul.f32 %v284, %v294
      %v308 = vmul.f32 %v287, %v294
      %v309 = vmul.f32 %v290, %v294
      %v310 = vmul.f32 %v293, %v294
      %v311 = vsub.f32 %v229, %v295
      %v312 = vsub.f32 %v230, %v296
      %v313 = vsub.f32 %v231, %v297
      %v314 = vsub.f32 %v232, %v298
      %v315 = vsub.f32 %v233, %v299
      %v316 = vsub.f32 %v234, %v300
      %v317 = vsub.f32 %v235, %v301
      %v318 = vsub.f32 %v236, %v302
      %v319 = vsub.f32 %v237, %v303
      %v320 = vsub.f32 %v238, %v304
      %v321 = vsub.f32 %v239, %v305
      %v322 = vsub.f32 %v240, %v306
      %v323 = vsub.f32 %v241, %v307
      %v324 = vsub.f32 %v242, %v308
      %v325 = vsub.f32 %v243, %v309
      %v326 = vsub.f32 %v244, %v310
      %v327 = vmul.f32 %v311, %v311
      %v328 = vmul.f32 %v312, %v312
      %v329 = vmul.f32 %v313, %v313
      %v330 = vmul.f32 %v314, %v314
      %v331 = vmul.f32 %v315, %v315
      %v332 = vmul.f32 %v316, %v316
      %v333 = vmul.f32 %v317, %v317
      %v334 = vmul.f32 %v318, %v318
      %v335 = vmul.f32 %v319, %v319
      %v336 = vmul.f32 %v320, %v320
      %v337 = vmul.f32 %v321, %v321
      %v338 = vmul.f32 %v322, %v322
      %v339 = vmul.f32 %v323, %v323
      %v340 = vmul.f32 %v324, %v324
      %v341 = vmul.f32 %v325, %v325
      %v342 = vmul.f32 %v326, %v326
      %v343 = vsel %vm245, %v327, 0.0
      %344 = vadd.xlane.f32.xlu0 %v343
      %v345 = vpop.xlane.xlu0 %344
      %v346 = vsel %vm245, %v328, 0.0
      %347 = vadd.xlane.f32.xlu0 %v346
      %v348 = vpop.xlane.xlu0 %347
      %v349 = vsel %vm245, %v329, 0.0
      %350 = vadd.xlane.f32.xlu0 %v349
      %v351 = vpop.xlane.xlu0 %350
      %v352 = vsel %vm245, %v330, 0.0
      %353 = vadd.xlane.f32.xlu0 %v352
      %v354 = vpop.xlane.xlu0 %353
      %v355 = vsel %vm245, %v331, 0.0
      %356 = vadd.xlane.f32.xlu0 %v355
      %v357 = vpop.xlane.xlu0 %356
      %v358 = vsel %vm245, %v332, 0.0
      %359 = vadd.xlane.f32.xlu0 %v358
      %v360 = vpop.xlane.xlu0 %359
      %v361 = vsel %vm245, %v333, 0.0
      %362 = vadd.xlane.f32.xlu0 %v361
      %v363 = vpop.xlane.xlu0 %362
      %v364 = vsel %vm245, %v334, 0.0
      %365 = vadd.xlane.f32.xlu0 %v364
      %v366 = vpop.xlane.xlu0 %365
      %v367 = vsel %vm245, %v335, 0.0
      %368 = vadd.xlane.f32.xlu0 %v367
      %v369 = vpop.xlane.xlu0 %368
      %v370 = vsel %vm245, %v336, 0.0
      %371 = vadd.xlane.f32.xlu0 %v370
      %v372 = vpop.xlane.xlu0 %371
      %v373 = vsel %vm245, %v337, 0.0
      %374 = vadd.xlane.f32.xlu0 %v373
      %v375 = vpop.xlane.xlu0 %374
      %v376 = vsel %vm245, %v338, 0.0
      %377 = vadd.xlane.f32.xlu0 %v376
      %v378 = vpop.xlane.xlu0 %377
      %v379 = vsel %vm245, %v339, 0.0
      %380 = vadd.xlane.f32.xlu0 %v379
      %v381 = vpop.xlane.xlu0 %380
      %v382 = vsel %vm245, %v340, 0.0
      %383 = vadd.xlane.f32.xlu0 %v382
      %v384 = vpop.xlane.xlu0 %383
      %v385 = vsel %vm245, %v341, 0.0
      %386 = vadd.xlane.f32.xlu0 %v385
      %v387 = vpop.xlane.xlu0 %386
      %v388 = vsel %vm245, %v342, 0.0
      %389 = vadd.xlane.f32.xlu0 %v388
      %v390 = vpop.xlane.xlu0 %389
      %v391 = vmul.f32 %v345, %v294
      %v392 = vmul.f32 %v348, %v294
      %v393 = vmul.f32 %v351, %v294
      %v394 = vmul.f32 %v354, %v294
      %v395 = vmul.f32 %v357, %v294
      %v396 = vmul.f32 %v360, %v294
      %v397 = vmul.f32 %v363, %v294
      %v398 = vmul.f32 %v366, %v294
      %v399 = vmul.f32 %v369, %v294
      %v400 = vmul.f32 %v372, %v294
      %v401 = vmul.f32 %v375, %v294
      %v402 = vmul.f32 %v378, %v294
      %v403 = vmul.f32 %v381, %v294
      %v404 = vmul.f32 %v384, %v294
      %v405 = vmul.f32 %v387, %v294
      %v406 = vmul.f32 %v390, %v294
      %v407 = vadd.f32 %v391, 1e-05
      %v408 = vadd.f32 %v392, 1e-05
      %v409 = vadd.f32 %v393, 1e-05
      %v410 = vadd.f32 %v394, 1e-05
      %v411 = vadd.f32 %v395, 1e-05
      %v412 = vadd.f32 %v396, 1e-05
      %v413 = vadd.f32 %v397, 1e-05
      %v414 = vadd.f32 %v398, 1e-05
      %v415 = vadd.f32 %v399, 1e-05
      %v416 = vadd.f32 %v400, 1e-05
      %v417 = vadd.f32 %v401, 1e-05
      %v418 = vadd.f32 %v402, 1e-05
      %v419 = vadd.f32 %v403, 1e-05
      %v420 = vadd.f32 %v404, 1e-05
      %v421 = vadd.f32 %v405, 1e-05
      %v422 = vadd.f32 %v406, 1e-05
      %v423 = vrsqrt.pop %v407
      %v424 = vrsqrt.pop %v408
      %v425 = vrsqrt.pop %v409
      %v426 = vrsqrt.pop %v410
      %v427 = vrsqrt.pop %v411
      %v428 = vrsqrt.pop %v412
      %v429 = vrsqrt.pop %v413
      %v430 = vrsqrt.pop %v414
      %v431 = vrsqrt.pop %v415
      %v432 = vrsqrt.pop %v416
      %v433 = vrsqrt.pop %v417
      %v434 = vrsqrt.pop %v418
      %v435 = vrsqrt.pop %v419
      %v436 = vrsqrt.pop %v420
      %v437 = vrsqrt.pop %v421
      %v438 = vrsqrt.pop %v422
      %v439 = vmul.f32 %v311, %v423
      %v440 = vmul.f32 %v312, %v424
      %v441 = vmul.f32 %v313, %v425
      %v442 = vmul.f32 %v314, %v426
      %v443 = vmul.f32 %v315, %v427
      %v444 = vmul.f32 %v316, %v428
      %v445 = vmul.f32 %v317, %v429
      %v446 = vmul.f32 %v318, %v430
      %v447 = vmul.f32 %v319, %v431
      %v448 = vmul.f32 %v320, %v432
      %v449 = vmul.f32 %v321, %v433
      %v450 = vmul.f32 %v322, %v434
      %v451 = vmul.f32 %v323, %v435
      %v452 = vmul.f32 %v324, %v436
      %v453 = vmul.f32 %v325, %v437
      %v454 = vmul.f32 %v326, %v438
      %v455 = vld [vmem:[%s1] sm:$0x1]
      %v457 = vlaneseq
      %v458 = vshrl.u32 %v457, 7
      %v459 = vsub.s32 0, %v458
      %v460 = vrot.slane %v455, %v459
      %v462 = vmul.f32 %v439, %v460
      %v463 = vmul.f32 %v440, %v460
      %v464 = vmul.f32 %v441, %v460
      %v465 = vmul.f32 %v442, %v460
      %v466 = vmul.f32 %v443, %v460
      %v467 = vmul.f32 %v444, %v460
      %v468 = vmul.f32 %v445, %v460
      %v469 = vmul.f32 %v446, %v460
      %v470 = vmul.f32 %v447, %v460
      %v471 = vmul.f32 %v448, %v460
      %v472 = vmul.f32 %v449, %v460
      %v473 = vmul.f32 %v450, %v460
      %v474 = vmul.f32 %v451, %v460
      %v475 = vmul.f32 %v452, %v460
      %v476 = vmul.f32 %v453, %v460
      %v477 = vmul.f32 %v454, %v460
      %v478 = vld [vmem:[%s2] sm:$0x1]
      %v480 = vlaneseq
      %v481 = vshrl.u32 %v480, 7
      %v482 = vsub.s32 0, %v481
      %v483 = vrot.slane %v478, %v482
      %v485 = vadd.f32 %v462, %v483
      %v486 = vadd.f32 %v463, %v483
      %v487 = vadd.f32 %v464, %v483
      %v488 = vadd.f32 %v465, %v483
      %v489 = vadd.f32 %v466, %v483
      %v490 = vadd.f32 %v467, %v483
      %v491 = vadd.f32 %v468, %v483
      %v492 = vadd.f32 %v469, %v483
      %v493 = vadd.f32 %v470, %v483
      %v494 = vadd.f32 %v471, %v483
      %v495 = vadd.f32 %v472, %v483
      %v496 = vadd.f32 %v473, %v483
      %v497 = vadd.f32 %v474, %v483
      %v498 = vadd.f32 %v475, %v483
      %v499 = vadd.f32 %v476, %v483
      %v500 = vadd.f32 %v477, %v483
      %v501 = vpack.c.bf16 %v486, %v485
      %v502 = vpack.c.bf16 %v488, %v487
      %v503 = vpack.c.bf16 %v490, %v489
      %v504 = vpack.c.bf16 %v492, %v491
      %v505 = vpack.c.bf16 %v494, %v493
      %v506 = vpack.c.bf16 %v496, %v495
      %v507 = vpack.c.bf16 %v498, %v497
      %v508 = vpack.c.bf16 %v500, %v499
      %v509 = vld [vmem:[%s3] sm:$0xf]
      %v510 = vld [vmem:[%s3 + $0x4] sm:$0xf]
      %v511 = vld [vmem:[%s3 + $0x8] sm:$0xf]
      %v512 = vld [vmem:[%s3 + $0xc] sm:$0xf]
      %v513 = vld [vmem:[%s4] sm:$0x1]
      %v515 = vlaneseq
      %v516 = vshrl.u32 %v515, 7
      %v517 = vsub.s32 0, %v516
      %v518 = vrot.slane %v513, %v517
      %v524 = vunpack.c.l.b16 %v509
      %v525 = vunpack.c.l.b16 %v510
      %v526 = vunpack.c.l.b16 %v511
      %v527 = vunpack.c.l.b16 %v512
      %v528 = vpack.c.b16 %v525, %v524
      %v529 = vpack.c.b16 %v527, %v526
      %v533 = vsel %vm245, %v501, 0
      %v536 = vsel %vm245, %v502, 0
      %v539 = vsel %vm245, %v503, 0
      %v542 = vsel %vm245, %v504, 0
      %v545 = vsel %vm245, %v505, 0
      %v548 = vsel %vm245, %v506, 0
      %v551 = vsel %vm245, %v507, 0
      %v554 = vsel %vm245, %v508, 0
      %556 = vmatprep.subr.bf16.mxu0 0
      %557 = vmatpush1.bf16.msra.mxu0 0
      %558 = vmatprep.subr.bf16.mxu0 0
      %559 = vmatpush1.bf16.msra.mxu0 0
      %560 = vmatprep.subr.bf16.mxu0 0
      %561 = vmatpush1.bf16.msra.mxu0 0
      %562 = vmatprep.subr.bf16.mxu0 0
      %563 = vmatpush1.bf16.msra.mxu0 0
      %564 = vmatprep.subr.bf16.mxu0 0
      %565 = vmatpush1.bf16.msra.mxu0 0
      %566 = vmatprep.subr.bf16.mxu0 0
      %567 = vmatpush1.bf16.msra.mxu0 0
      %568 = vmatprep.subr.bf16.mxu0 0
      %569 = vmatpush1.bf16.msra.mxu0 %v529
      %570 = vmatprep.subr.bf16.mxu0 0
      %571 = vmatpush1.bf16.msra.mxu0 %v528
      %572 = vmatprep.subr.bf16.mxu0 0
      %573 = vmatpush2.bf16.msra.mxu0 0
      %574 = vmatprep.subr.bf16.mxu0 0
      %575 = vmatpush2.bf16.msra.mxu0 0
      %576 = vmatprep.subr.bf16.mxu0 0
      %577 = vmatpush2.bf16.msra.mxu0 0
      %578 = vmatprep.subr.bf16.mxu0 0
      %579 = vmatpush2.bf16.msra.mxu0 0
      %580 = vmatprep.subr.bf16.mxu0 0
      %581 = vmatpush2.bf16.msra.mxu0 0
      %582 = vmatprep.subr.bf16.mxu0 0
      %583 = vmatpush2.bf16.msra.mxu0 0
      %584 = vmatprep.subr.bf16.mxu0 0
      %585 = vmatpush2.bf16.msra.mxu0 0
      %586 = vmatprep.subr.bf16.mxu0 0
      %587 = vmatpush2.bf16.msra.mxu0 0
      %588 = vmatprep.mubr.bf16.mxu0 0
      %589 = vmatmul.mubr.bf16.gmra.mxu0 %v533
      %v590 = vpop.f32.mrf.mxu0
      %v591 = vadd.f32 %v518, %v590
      %v592 = vpop.f32.mrf.mxu0
      %v593 = vpop.f32.mrf.mxu0
      %v594 = vadd.f32 %v518, %v593
      %v595 = vpop.f32.mrf.mxu0
      %596 = vmatprep.mubr.bf16.mxu0 0
      %597 = vmatmul.mubr.bf16.gmra.mxu0 %v536
      %v598 = vpop.f32.mrf.mxu0
      %v599 = vadd.f32 %v518, %v598
      %v600 = vpop.f32.mrf.mxu0
      %v601 = vpop.f32.mrf.mxu0
      %v602 = vadd.f32 %v518, %v601
      %v603 = vpop.f32.mrf.mxu0
      %604 = vmatprep.mubr.bf16.mxu0 0
      %605 = vmatmul.mubr.bf16.gmra.mxu0 %v539
      %v606 = vpop.f32.mrf.mxu0
      %v607 = vadd.f32 %v518, %v606
      %v608 = vpop.f32.mrf.mxu0
      %v609 = vpop.f32.mrf.mxu0
      %v610 = vadd.f32 %v518, %v609
      %v611 = vpop.f32.mrf.mxu0
      %612 = vmatprep.mubr.bf16.mxu0 0
      %613 = vmatmul.mubr.bf16.gmra.mxu0 %v542
      %v614 = vpop.f32.mrf.mxu0
      %v615 = vadd.f32 %v518, %v614
      %v616 = vpop.f32.mrf.mxu0
      %v617 = vpop.f32.mrf.mxu0
      %v618 = vadd.f32 %v518, %v617
      %v619 = vpop.f32.mrf.mxu0
      %620 = vmatprep.mubr.bf16.mxu0 0
      %621 = vmatmul.mubr.bf16.gmra.mxu0 %v545
      %v622 = vpop.f32.mrf.mxu0
      %v623 = vadd.f32 %v518, %v622
      %v624 = vpop.f32.mrf.mxu0
      %v625 = vpop.f32.mrf.mxu0
      %v626 = vadd.f32 %v518, %v625
      %v627 = vpop.f32.mrf.mxu0
      %628 = vmatprep.mubr.bf16.mxu0 0
      %629 = vmatmul.mubr.bf16.gmra.mxu0 %v548
      %v630 = vpop.f32.mrf.mxu0
      %v631 = vadd.f32 %v518, %v630
      %v632 = vpop.f32.mrf.mxu0
      %v633 = vpop.f32.mrf.mxu0
      %v634 = vadd.f32 %v518, %v633
      %v635 = vpop.f32.mrf.mxu0
      %636 = vmatprep.mubr.bf16.mxu0 0
      %637 = vmatmul.mubr.bf16.gmra.mxu0 %v551
      %v638 = vpop.f32.mrf.mxu0
      %v639 = vadd.f32 %v518, %v638
      %v640 = vpop.f32.mrf.mxu0
      %v641 = vpop.f32.mrf.mxu0
      %v642 = vadd.f32 %v518, %v641
      %v643 = vpop.f32.mrf.mxu0
      %644 = vmatprep.mubr.bf16.mxu0 0
      %645 = vmatmul.mubr.bf16.gmra.mxu0 %v554
      %v646 = vpop.f32.mrf.mxu0
      %v647 = vadd.f32 %v518, %v646
      %v648 = vpop.f32.mrf.mxu0
      %v649 = vpop.f32.mrf.mxu0
      %v650 = vadd.f32 %v518, %v649
      %v651 = vpop.f32.mrf.mxu0
      %652 = vdwg.mxu0
      %v653 = vmul.f32 %v591, 0.5
      %v654 = vmul.f32 %v594, 0.5
      %v655 = vmul.f32 %v599, 0.5
      %v656 = vmul.f32 %v602, 0.5
      %v657 = vmul.f32 %v607, 0.5
      %v658 = vmul.f32 %v610, 0.5
      %v659 = vmul.f32 %v615, 0.5
      %v660 = vmul.f32 %v618, 0.5
      %v661 = vmul.f32 %v623, 0.5
      %v662 = vmul.f32 %v626, 0.5
      %v663 = vmul.f32 %v631, 0.5
      %v664 = vmul.f32 %v634, 0.5
      %v665 = vmul.f32 %v639, 0.5
      %v666 = vmul.f32 %v642, 0.5
      %v667 = vmul.f32 %v647, 0.5
      %v668 = vmul.f32 %v650, 0.5
      %v669 = vmul.f32 %v591, 0.70710677
      %v670 = vmul.f32 %v594, 0.70710677
      %v671 = vmul.f32 %v599, 0.70710677
      %v672 = vmul.f32 %v602, 0.70710677
      %v673 = vmul.f32 %v607, 0.70710677
      %v674 = vmul.f32 %v610, 0.70710677
      %v675 = vmul.f32 %v615, 0.70710677
      %v676 = vmul.f32 %v618, 0.70710677
      %v677 = vmul.f32 %v623, 0.70710677
      %v678 = vmul.f32 %v626, 0.70710677
      %v679 = vmul.f32 %v631, 0.70710677
      %v680 = vmul.f32 %v634, 0.70710677
      %v681 = vmul.f32 %v639, 0.70710677
      %v682 = vmul.f32 %v642, 0.70710677
      %v683 = vmul.f32 %v647, 0.70710677
      %v684 = vmul.f32 %v650, 0.70710677
      %v685 = vand.u32 2147483647, %v669
      %v686 = vand.u32 2147483647, %v670
      %v687 = vand.u32 2147483647, %v671
      %v688 = vand.u32 2147483647, %v672
      %v689 = vand.u32 2147483647, %v673
      %v690 = vand.u32 2147483647, %v674
      %v691 = vand.u32 2147483647, %v675
      %v692 = vand.u32 2147483647, %v676
      %v693 = vand.u32 2147483647, %v677
      %v694 = vand.u32 2147483647, %v678
      %v695 = vand.u32 2147483647, %v679
      %v696 = vand.u32 2147483647, %v680
      %v697 = vand.u32 2147483647, %v681
      %v698 = vand.u32 2147483647, %v682
      %v699 = vand.u32 2147483647, %v683
      %v700 = vand.u32 2147483647, %v684
      %v701 = vmul.f32 %v685, 0.3275911
      %v702 = vmul.f32 %v686, 0.3275911
      %v703 = vmul.f32 %v687, 0.3275911
      %v704 = vmul.f32 %v688, 0.3275911
      %v705 = vmul.f32 %v689, 0.3275911
      %v706 = vmul.f32 %v690, 0.3275911
      %v707 = vmul.f32 %v691, 0.3275911
      %v708 = vmul.f32 %v692, 0.3275911
      %v709 = vmul.f32 %v693, 0.3275911
      %v710 = vmul.f32 %v694, 0.3275911
      %v711 = vmul.f32 %v695, 0.3275911
      %v712 = vmul.f32 %v696, 0.3275911
      %v713 = vmul.f32 %v697, 0.3275911
      %v714 = vmul.f32 %v698, 0.3275911
      %v715 = vmul.f32 %v699, 0.3275911
      %v716 = vmul.f32 %v700, 0.3275911
      %v717 = vadd.f32 %v701, 1.0
      %v718 = vadd.f32 %v702, 1.0
      %v719 = vadd.f32 %v703, 1.0
      %v720 = vadd.f32 %v704, 1.0
      %v721 = vadd.f32 %v705, 1.0
      %v722 = vadd.f32 %v706, 1.0
      %v723 = vadd.f32 %v707, 1.0
      %v724 = vadd.f32 %v708, 1.0
      %v725 = vadd.f32 %v709, 1.0
      %v726 = vadd.f32 %v710, 1.0
      %v727 = vadd.f32 %v711, 1.0
      %v728 = vadd.f32 %v712, 1.0
      %v729 = vadd.f32 %v713, 1.0
      %v730 = vadd.f32 %v714, 1.0
      %v731 = vadd.f32 %v715, 1.0
      %v732 = vadd.f32 %v716, 1.0
      %v733 = vrcp.pop %v717
      %v734 = vmul.f32 1.0, %v733
      %v735 = vrcp.pop %v718
      %v736 = vmul.f32 1.0, %v735
      %v737 = vrcp.pop %v719
      %v738 = vmul.f32 1.0, %v737
      %v739 = vrcp.pop %v720
      %v740 = vmul.f32 1.0, %v739
      %v741 = vrcp.pop %v721
      %v742 = vmul.f32 1.0, %v741
      %v743 = vrcp.pop %v722
      %v744 = vmul.f32 1.0, %v743
      %v745 = vrcp.pop %v723
      %v746 = vmul.f32 1.0, %v745
      %v747 = vrcp.pop %v724
      %v748 = vmul.f32 1.0, %v747
      %v749 = vrcp.pop %v725
      %v750 = vmul.f32 1.0, %v749
      %v751 = vrcp.pop %v726
      %v752 = vmul.f32 1.0, %v751
      %v753 = vrcp.pop %v727
      %v754 = vmul.f32 1.0, %v753
      %v755 = vrcp.pop %v728
      %v756 = vmul.f32 1.0, %v755
      %v757 = vrcp.pop %v729
      %v758 = vmul.f32 1.0, %v757
      %v759 = vrcp.pop %v730
      %v760 = vmul.f32 1.0, %v759
      %v761 = vrcp.pop %v731
      %v762 = vmul.f32 1.0, %v761
      %v763 = vrcp.pop %v732
      %v764 = vmul.f32 1.0, %v763
      %v765 = vmul.f32 %v734, 1.0614054
      %v766 = vmul.f32 %v736, 1.0614054
      %v767 = vmul.f32 %v738, 1.0614054
      %v768 = vmul.f32 %v740, 1.0614054
      %v769 = vmul.f32 %v742, 1.0614054
      %v770 = vmul.f32 %v744, 1.0614054
      %v771 = vmul.f32 %v746, 1.0614054
      %v772 = vmul.f32 %v748, 1.0614054
      %v773 = vmul.f32 %v750, 1.0614054
      %v774 = vmul.f32 %v752, 1.0614054
      %v775 = vmul.f32 %v754, 1.0614054
      %v776 = vmul.f32 %v756, 1.0614054
      %v777 = vmul.f32 %v758, 1.0614054
      %v778 = vmul.f32 %v760, 1.0614054
      %v779 = vmul.f32 %v762, 1.0614054
      %v780 = vmul.f32 %v764, 1.0614054
      %v781 = vadd.f32 %v765, -1.4531521
      %v782 = vadd.f32 %v766, -1.4531521
      %v783 = vadd.f32 %v767, -1.4531521
      %v784 = vadd.f32 %v768, -1.4531521
      %v785 = vadd.f32 %v769, -1.4531521
      %v786 = vadd.f32 %v770, -1.4531521
      %v787 = vadd.f32 %v771, -1.4531521
      %v788 = vadd.f32 %v772, -1.4531521
      %v789 = vadd.f32 %v773, -1.4531521
      %v790 = vadd.f32 %v774, -1.4531521
      %v791 = vadd.f32 %v775, -1.4531521
      %v792 = vadd.f32 %v776, -1.4531521
      %v793 = vadd.f32 %v777, -1.4531521
      %v794 = vadd.f32 %v778, -1.4531521
      %v795 = vadd.f32 %v779, -1.4531521
      %v796 = vadd.f32 %v780, -1.4531521
      %v797 = vmul.f32 %v781, %v734
      %v798 = vmul.f32 %v782, %v736
      %v799 = vmul.f32 %v783, %v738
      %v800 = vmul.f32 %v784, %v740
      %v801 = vmul.f32 %v785, %v742
      %v802 = vmul.f32 %v786, %v744
      %v803 = vmul.f32 %v787, %v746
      %v804 = vmul.f32 %v788, %v748
      %v805 = vmul.f32 %v789, %v750
      %v806 = vmul.f32 %v790, %v752
      %v807 = vmul.f32 %v791, %v754
      %v808 = vmul.f32 %v792, %v756
      %v809 = vmul.f32 %v793, %v758
      %v810 = vmul.f32 %v794, %v760
      %v811 = vmul.f32 %v795, %v762
      %v812 = vmul.f32 %v796, %v764
      %v813 = vadd.f32 %v797, 1.4214138
      %v814 = vadd.f32 %v798, 1.4214138
      %v815 = vadd.f32 %v799, 1.4214138
      %v816 = vadd.f32 %v800, 1.4214138
      %v817 = vadd.f32 %v801, 1.4214138
      %v818 = vadd.f32 %v802, 1.4214138
      %v819 = vadd.f32 %v803, 1.4214138
      %v820 = vadd.f32 %v804, 1.4214138
      %v821 = vadd.f32 %v805, 1.4214138
      %v822 = vadd.f32 %v806, 1.4214138
      %v823 = vadd.f32 %v807, 1.4214138
      %v824 = vadd.f32 %v808, 1.4214138
      %v825 = vadd.f32 %v809, 1.4214138
      %v826 = vadd.f32 %v810, 1.4214138
      %v827 = vadd.f32 %v811, 1.4214138
      %v828 = vadd.f32 %v812, 1.4214138
      %v829 = vmul.f32 %v813, %v734
      %v830 = vmul.f32 %v814, %v736
      %v831 = vmul.f32 %v815, %v738
      %v832 = vmul.f32 %v816, %v740
      %v833 = vmul.f32 %v817, %v742
      %v834 = vmul.f32 %v818, %v744
      %v835 = vmul.f32 %v819, %v746
      %v836 = vmul.f32 %v820, %v748
      %v837 = vmul.f32 %v821, %v750
      %v838 = vmul.f32 %v822, %v752
      %v839 = vmul.f32 %v823, %v754
      %v840 = vmul.f32 %v824, %v756
      %v841 = vmul.f32 %v825, %v758
      %v842 = vmul.f32 %v826, %v760
      %v843 = vmul.f32 %v827, %v762
      %v844 = vmul.f32 %v828, %v764
      %v845 = vadd.f32 %v829, -0.28449672
      %v846 = vadd.f32 %v830, -0.28449672
      %v847 = vadd.f32 %v831, -0.28449672
      %v848 = vadd.f32 %v832, -0.28449672
      %v849 = vadd.f32 %v833, -0.28449672
      %v850 = vadd.f32 %v834, -0.28449672
      %v851 = vadd.f32 %v835, -0.28449672
      %v852 = vadd.f32 %v836, -0.28449672
      %v853 = vadd.f32 %v837, -0.28449672
      %v854 = vadd.f32 %v838, -0.28449672
      %v855 = vadd.f32 %v839, -0.28449672
      %v856 = vadd.f32 %v840, -0.28449672
      %v857 = vadd.f32 %v841, -0.28449672
      %v858 = vadd.f32 %v842, -0.28449672
      %v859 = vadd.f32 %v843, -0.28449672
      %v860 = vadd.f32 %v844, -0.28449672
      %v861 = vmul.f32 %v845, %v734
      %v862 = vmul.f32 %v846, %v736
      %v863 = vmul.f32 %v847, %v738
      %v864 = vmul.f32 %v848, %v740
      %v865 = vmul.f32 %v849, %v742
      %v866 = vmul.f32 %v850, %v744
      %v867 = vmul.f32 %v851, %v746
      %v868 = vmul.f32 %v852, %v748
      %v869 = vmul.f32 %v853, %v750
      %v870 = vmul.f32 %v854, %v752
      %v871 = vmul.f32 %v855, %v754
      %v872 = vmul.f32 %v856, %v756
      %v873 = vmul.f32 %v857, %v758
      %v874 = vmul.f32 %v858, %v760
      %v875 = vmul.f32 %v859, %v762
      %v876 = vmul.f32 %v860, %v764
      %v877 = vadd.f32 %v861, 0.2548296
      %v878 = vadd.f32 %v862, 0.2548296
      %v879 = vadd.f32 %v863, 0.2548296
      %v880 = vadd.f32 %v864, 0.2548296
      %v881 = vadd.f32 %v865, 0.2548296
      %v882 = vadd.f32 %v866, 0.2548296
      %v883 = vadd.f32 %v867, 0.2548296
      %v884 = vadd.f32 %v868, 0.2548296
      %v885 = vadd.f32 %v869, 0.2548296
      %v886 = vadd.f32 %v870, 0.2548296
      %v887 = vadd.f32 %v871, 0.2548296
      %v888 = vadd.f32 %v872, 0.2548296
      %v889 = vadd.f32 %v873, 0.2548296
      %v890 = vadd.f32 %v874, 0.2548296
      %v891 = vadd.f32 %v875, 0.2548296
      %v892 = vadd.f32 %v876, 0.2548296
      %v893 = vmul.f32 %v877, %v734
      %v894 = vmul.f32 %v878, %v736
      %v895 = vmul.f32 %v879, %v738
      %v896 = vmul.f32 %v880, %v740
      %v897 = vmul.f32 %v881, %v742
      %v898 = vmul.f32 %v882, %v744
      %v899 = vmul.f32 %v883, %v746
      %v900 = vmul.f32 %v884, %v748
      %v901 = vmul.f32 %v885, %v750
      %v902 = vmul.f32 %v886, %v752
      %v903 = vmul.f32 %v887, %v754
      %v904 = vmul.f32 %v888, %v756
      %v905 = vmul.f32 %v889, %v758
      %v906 = vmul.f32 %v890, %v760
      %v907 = vmul.f32 %v891, %v762
      %v908 = vmul.f32 %v892, %v764
      %v909 = vsub.f32 0.0, %v685
      %v910 = vsub.f32 0.0, %v686
      %v911 = vsub.f32 0.0, %v687
      %v912 = vsub.f32 0.0, %v688
      %v913 = vsub.f32 0.0, %v689
      %v914 = vsub.f32 0.0, %v690
      %v915 = vsub.f32 0.0, %v691
      %v916 = vsub.f32 0.0, %v692
      %v917 = vsub.f32 0.0, %v693
      %v918 = vsub.f32 0.0, %v694
      %v919 = vsub.f32 0.0, %v695
      %v920 = vsub.f32 0.0, %v696
      %v921 = vsub.f32 0.0, %v697
      %v922 = vsub.f32 0.0, %v698
      %v923 = vsub.f32 0.0, %v699
      %v924 = vsub.f32 0.0, %v700
      %v925 = vmul.f32 %v909, %v685
      %v926 = vmul.f32 %v910, %v686
      %v927 = vmul.f32 %v911, %v687
      %v928 = vmul.f32 %v912, %v688
      %v929 = vmul.f32 %v913, %v689
      %v930 = vmul.f32 %v914, %v690
      %v931 = vmul.f32 %v915, %v691
      %v932 = vmul.f32 %v916, %v692
      %v933 = vmul.f32 %v917, %v693
      %v934 = vmul.f32 %v918, %v694
      %v935 = vmul.f32 %v919, %v695
      %v936 = vmul.f32 %v920, %v696
      %v937 = vmul.f32 %v921, %v697
      %v938 = vmul.f32 %v922, %v698
      %v939 = vmul.f32 %v923, %v699
      %v940 = vmul.f32 %v924, %v700
      %v941 = vmul.f32 %v925, 1.442695
      %v942 = vpow.pop %v941
      %v943 = vmul.f32 %v926, 1.442695
      %v944 = vpow.pop %v943
      %v945 = vmul.f32 %v927, 1.442695
      %v946 = vpow.pop %v945
      %v947 = vmul.f32 %v928, 1.442695
      %v948 = vpow.pop %v947
      %v949 = vmul.f32 %v929, 1.442695
      %v950 = vpow.pop %v949
      %v951 = vmul.f32 %v930, 1.442695
      %v952 = vpow.pop %v951
      %v953 = vmul.f32 %v931, 1.442695
      %v954 = vpow.pop %v953
      %v955 = vmul.f32 %v932, 1.442695
      %v956 = vpow.pop %v955
      %v957 = vmul.f32 %v933, 1.442695
      %v958 = vpow.pop %v957
      %v959 = vmul.f32 %v934, 1.442695
      %v960 = vpow.pop %v959
      %v961 = vmul.f32 %v935, 1.442695
      %v962 = vpow.pop %v961
      %v963 = vmul.f32 %v936, 1.442695
      %v964 = vpow.pop %v963
      %v965 = vmul.f32 %v937, 1.442695
      %v966 = vpow.pop %v965
      %v967 = vmul.f32 %v938, 1.442695
      %v968 = vpow.pop %v967
      %v969 = vmul.f32 %v939, 1.442695
      %v970 = vpow.pop %v969
      %v971 = vmul.f32 %v940, 1.442695
      %v972 = vpow.pop %v971
      %v973 = vmul.f32 %v893, %v942
      %v974 = vmul.f32 %v894, %v944
      %v975 = vmul.f32 %v895, %v946
      %v976 = vmul.f32 %v896, %v948
      %v977 = vmul.f32 %v897, %v950
      %v978 = vmul.f32 %v898, %v952
      %v979 = vmul.f32 %v899, %v954
      %v980 = vmul.f32 %v900, %v956
      %v981 = vmul.f32 %v901, %v958
      %v982 = vmul.f32 %v902, %v960
      %v983 = vmul.f32 %v903, %v962
      %v984 = vmul.f32 %v904, %v964
      %v985 = vmul.f32 %v905, %v966
      %v986 = vmul.f32 %v906, %v968
      %v987 = vmul.f32 %v907, %v970
      %v988 = vmul.f32 %v908, %v972
      %v989 = vsub.f32 1.0, %v973
      %v990 = vsub.f32 1.0, %v974
      %v991 = vsub.f32 1.0, %v975
      %v992 = vsub.f32 1.0, %v976
      %v993 = vsub.f32 1.0, %v977
      %v994 = vsub.f32 1.0, %v978
      %v995 = vsub.f32 1.0, %v979
      %v996 = vsub.f32 1.0, %v980
      %v997 = vsub.f32 1.0, %v981
      %v998 = vsub.f32 1.0, %v982
      %v999 = vsub.f32 1.0, %v983
      %v1000 = vsub.f32 1.0, %v984
      %v1001 = vsub.f32 1.0, %v985
      %v1002 = vsub.f32 1.0, %v986
      %v1003 = vsub.f32 1.0, %v987
      %v1004 = vsub.f32 1.0, %v988
      %vm1005 = vcmp.ge.f32.partialorder %v669, 0.0
      %vm1006 = vcmp.ge.f32.partialorder %v670, 0.0
      %vm1007 = vcmp.ge.f32.partialorder %v671, 0.0
      %vm1008 = vcmp.ge.f32.partialorder %v672, 0.0
      %vm1009 = vcmp.ge.f32.partialorder %v673, 0.0
      %vm1010 = vcmp.ge.f32.partialorder %v674, 0.0
      %vm1011 = vcmp.ge.f32.partialorder %v675, 0.0
      %vm1012 = vcmp.ge.f32.partialorder %v676, 0.0
      %vm1013 = vcmp.ge.f32.partialorder %v677, 0.0
      %vm1014 = vcmp.ge.f32.partialorder %v678, 0.0
      %vm1015 = vcmp.ge.f32.partialorder %v679, 0.0
      %vm1016 = vcmp.ge.f32.partialorder %v680, 0.0
      %vm1017 = vcmp.ge.f32.partialorder %v681, 0.0
      %vm1018 = vcmp.ge.f32.partialorder %v682, 0.0
      %vm1019 = vcmp.ge.f32.partialorder %v683, 0.0
      %vm1020 = vcmp.ge.f32.partialorder %v684, 0.0
      %v1021 = vsub.f32 0.0, %v989
      %v1022 = vsub.f32 0.0, %v990
      %v1023 = vsub.f32 0.0, %v991
      %v1024 = vsub.f32 0.0, %v992
      %v1025 = vsub.f32 0.0, %v993
      %v1026 = vsub.f32 0.0, %v994
      %v1027 = vsub.f32 0.0, %v995
      %v1028 = vsub.f32 0.0, %v996
      %v1029 = vsub.f32 0.0, %v997
      %v1030 = vsub.f32 0.0, %v998
      %v1031 = vsub.f32 0.0, %v999
      %v1032 = vsub.f32 0.0, %v1000
      %v1033 = vsub.f32 0.0, %v1001
      %v1034 = vsub.f32 0.0, %v1002
      %v1035 = vsub.f32 0.0, %v1003
      %v1036 = vsub.f32 0.0, %v1004
      %v1037 = vsel %vm1005, %v989, %v1021
      %v1038 = vsel %vm1006, %v990, %v1022
      %v1039 = vsel %vm1007, %v991, %v1023
      %v1040 = vsel %vm1008, %v992, %v1024
      %v1041 = vsel %vm1009, %v993, %v1025
      %v1042 = vsel %vm1010, %v994, %v1026
      %v1043 = vsel %vm1011, %v995, %v1027
      %v1044 = vsel %vm1012, %v996, %v1028
      %v1045 = vsel %vm1013, %v997, %v1029
      %v1046 = vsel %vm1014, %v998, %v1030
      %v1047 = vsel %vm1015, %v999, %v1031
      %v1048 = vsel %vm1016, %v1000, %v1032
      %v1049 = vsel %vm1017, %v1001, %v1033
      %v1050 = vsel %vm1018, %v1002, %v1034
      %v1051 = vsel %vm1019, %v1003, %v1035
      %v1052 = vsel %vm1020, %v1004, %v1036
      %v1053 = vadd.f32 %v1037, 1.0
      %v1054 = vadd.f32 %v1038, 1.0
      %v1055 = vadd.f32 %v1039, 1.0
      %v1056 = vadd.f32 %v1040, 1.0
      %v1057 = vadd.f32 %v1041, 1.0
      %v1058 = vadd.f32 %v1042, 1.0
      %v1059 = vadd.f32 %v1043, 1.0
      %v1060 = vadd.f32 %v1044, 1.0
      %v1061 = vadd.f32 %v1045, 1.0
      %v1062 = vadd.f32 %v1046, 1.0
      %v1063 = vadd.f32 %v1047, 1.0
      %v1064 = vadd.f32 %v1048, 1.0
      %v1065 = vadd.f32 %v1049, 1.0
      %v1066 = vadd.f32 %v1050, 1.0
      %v1067 = vadd.f32 %v1051, 1.0
      %v1068 = vadd.f32 %v1052, 1.0
      %v1069 = vmul.f32 %v653, %v1053
      %v1070 = vmul.f32 %v654, %v1054
      %v1071 = vmul.f32 %v655, %v1055
      %v1072 = vmul.f32 %v656, %v1056
      %v1073 = vmul.f32 %v657, %v1057
      %v1074 = vmul.f32 %v658, %v1058
      %v1075 = vmul.f32 %v659, %v1059
      %v1076 = vmul.f32 %v660, %v1060
      %v1077 = vmul.f32 %v661, %v1061
      %v1078 = vmul.f32 %v662, %v1062
      %v1079 = vmul.f32 %v663, %v1063
      %v1080 = vmul.f32 %v664, %v1064
      %v1081 = vmul.f32 %v665, %v1065
      %v1082 = vmul.f32 %v666, %v1066
      %v1083 = vmul.f32 %v667, %v1067
      %v1084 = vmul.f32 %v668, %v1068
      %v1085 = vpack.c.bf16 %v1070, %v1069
      %v1086 = vpack.c.bf16 %v1072, %v1071
      %v1087 = vpack.c.bf16 %v1074, %v1073
      %v1088 = vpack.c.bf16 %v1076, %v1075
      %v1089 = vpack.c.bf16 %v1078, %v1077
      %v1090 = vpack.c.bf16 %v1080, %v1079
      %v1091 = vpack.c.bf16 %v1082, %v1081
      %v1092 = vpack.c.bf16 %v1084, %v1083
      %v1101 = vunpack.c.l.b16 %v1085
      %v1102 = vunpack.c.h.b16 %v1085
      %v1103 = vunpack.c.l.b16 %v1086
      %v1104 = vunpack.c.h.b16 %v1086
      %v1105 = vunpack.c.l.b16 %v1087
      %v1106 = vunpack.c.h.b16 %v1087
      %v1107 = vunpack.c.l.b16 %v1088
      %v1108 = vunpack.c.h.b16 %v1088
      %v1109 = vunpack.c.l.b16 %v1089
      %v1110 = vunpack.c.h.b16 %v1089
      %v1111 = vunpack.c.l.b16 %v1090
      %v1112 = vunpack.c.h.b16 %v1090
      %v1113 = vunpack.c.l.b16 %v1091
      %v1114 = vunpack.c.h.b16 %v1091
      %v1115 = vunpack.c.l.b16 %v1092
      %v1116 = vunpack.c.h.b16 %v1092
      %v1117 = vpack.c.b16 %v1101, %v1101
      %v1118 = vpack.c.b16 %v1102, %v1102
      %v1119 = vpack.c.b16 %v1103, %v1103
      %v1120 = vpack.c.b16 %v1104, %v1104
      %v1121 = vpack.c.b16 %v1105, %v1105
      %v1122 = vpack.c.b16 %v1106, %v1106
      %v1123 = vpack.c.b16 %v1107, %v1107
      %v1124 = vpack.c.b16 %v1108, %v1108
      %v1125 = vpack.c.b16 %v1109, %v1109
      %v1126 = vpack.c.b16 %v1110, %v1110
      %v1127 = vpack.c.b16 %v1111, %v1111
      %v1128 = vpack.c.b16 %v1112, %v1112
      %v1129 = vpack.c.b16 %v1113, %v1113
      %v1130 = vpack.c.b16 %v1114, %v1114
      %v1131 = vpack.c.b16 %v1115, %v1115
      %v1132 = vpack.c.b16 %v1116, %v1116
      %1149 = vst [vmem:[%s226] sm:$0xf] %v1117
      %1150 = vst [vmem:[%s226 + $0x4] sm:$0xf] %v1118
      %1151 = vst [vmem:[%s226 + $0x8] sm:$0xf] %v1119
      %1152 = vst [vmem:[%s226 + $0xc] sm:$0xf] %v1120
      %1153 = vst [vmem:[%s226 + $0x10] sm:$0xf] %v1121
      %1154 = vst [vmem:[%s226 + $0x14] sm:$0xf] %v1122
      %1155 = vst [vmem:[%s226 + $0x18] sm:$0xf] %v1123
      %1156 = vst [vmem:[%s226 + $0x1c] sm:$0xf] %v1124
      %1157 = vst [vmem:[%s226 + $0x20] sm:$0xf] %v1125
      %1158 = vst [vmem:[%s226 + $0x24] sm:$0xf] %v1126
      %1159 = vst [vmem:[%s226 + $0x28] sm:$0xf] %v1127
      %1160 = vst [vmem:[%s226 + $0x2c] sm:$0xf] %v1128
      %1161 = vst [vmem:[%s226 + $0x30] sm:$0xf] %v1129
      %1162 = vst [vmem:[%s226 + $0x34] sm:$0xf] %v1130
      %1163 = vst [vmem:[%s226 + $0x38] sm:$0xf] %v1131
      %1164 = vst [vmem:[%s226 + $0x3c] sm:$0xf] %v1132
      %s1165 = smul.u32 16, %s16
      %p1166 = scmp.lt.s32.totalorder %s1165, 31
      %s1167 = scalar_select %p1166, %s1165, 31
      %s1168 = smul.addr %s1167, 4
      %s1169 = scalar_lea.vmem %s5, %s1168
      // Predicated region
      $region41: #{natten3d_transformer_block.8} parent=39 // pred_check
        %p1170 = pneg %p144
      $region42: #{natten3d_transformer_block.8} parent=39 // pred_check_branch
        %1172 = sbr.rel (%p1170) target = $region44
      $region43: #{natten3d_transformer_block.8} parent=39 // pred_region
        %s1173 = smul.u32 16, %s16
      $region44: #{natten3d_transformer_block.8} parent=39 // pred_fallthru
        _
    $region40: #{natten3d_transformer_block.8} parent=5 // pred_fallthru
      _
    %p1174 = scmp.le.s32.totalorder 2, %s11
    // Predicated region
    $region45: #{natten3d_transformer_block.8} parent=5 // pred_check
      %p1175 = pneg %p1174
    $region46: #{natten3d_transformer_block.8} parent=5 // pred_check_branch
      %1177 = sbr.rel (%p1175) target = $region48
    $region47: #{natten3d_transformer_block.8} parent=5 // pred_region
      %s1178 = ssub.s32 %s11, 2
      // Predicated region
      $region49: #{natten3d_transformer_block.8} parent=47 // pred_check
        %p1179 = pneg %p150
      $region50: #{natten3d_transformer_block.8} parent=47 // pred_check_branch
        %1181 = sbr.rel (%p1179) target = $region52
      $region51: #{natten3d_transformer_block.8} parent=47 // pred_region
        %s1182 = smul.u32 16, %s17
        %p1183 = scmp.lt.s32.totalorder %s1182, 31
        %s1184 = scalar_select %p1183, %s1182, 31
        %s1185 = smul.addr %s1184, 4
        %s1186 = scalar_lea.vmem %s5, %s1185
      $region52: #{natten3d_transformer_block.8} parent=47 // pred_fallthru
        _
    $region48: #{natten3d_transformer_block.8} parent=5 // pred_fallthru
      _
  $region6: #{natten3d_transformer_block.8} parent=0 // loop_footer
    %s15 = sadd.s32 1, %s11
  $region7: #{natten3d_transformer_block.8} parent=0 // loop_footer_branch
    %10 = sbr.rel target = $region3
  $region8: #{natten3d_transformer_block.8} parent=0 // loop_exit
    _

// kernel: natten3d_transformer_block.6
$region0: #{natten3d_transformer_block.6}
  #allocation0 [shape = 'u32[]', space=smem, size = 0x4, offset = 0x4, fixed_abs, tag = 'smem constant byte address 0x4 - core index']
  #allocation1 [shape = 'u32[144,128]{1,0:T(1,128)}', space=vmem, size = 0x12000, scoped, tag = 'internal scratch']
  %s0 = inlined_call_operand.vmem [shape: s32[128,3], index: 0, kind: input, shape index: {}]
  %s1 = inlined_call_operand.vmem [shape: s32[3,128], index: 1, kind: input, shape index: {}]
  %s2 = inlined_call_operand.vmem [shape: bf16[2,128,96], index: 2, kind: input, shape index: {}]
  %s3 = inlined_call_operand.vmem [shape: bf16[2,128,32], index: 3, kind: output, shape index: {}]
  %s4 = sld [smem:[#allocation0]]
  $region45: #{natten3d_transformer_block.6} parent=0
    _
  %s6 = ssub.s32 1, %s4
  %s7 = scalar_select 0, %s6, %s4
  loop: start=0, step=1, limit=6
  $region2: #{natten3d_transformer_block.6} parent=0 // loop_pre_header
    _
  $region3: #{natten3d_transformer_block.6} parent=0 // loop_header
    %s9 = sphi 0, %s13
    %p10 = scmp.ge.s32.totalorder %s9, 6
    %s16 = sphi 0, %s28
    %s17 = sphi 0, %s24
    %s18 = sphi 0, %s16
    %s19 = sphi 0, %s17
    %s20 = sphi 0, %s18
    %s21 = sphi 0, %s19
    %s31 = sphi 0, %s33
    %s34 = sphi 0, %s31
    %s35 = sphi 0, %s34
    %s51 = sphi 0, %s35
    %s55 = sphi 0, %s55
    %s57 = sphi 0, %s55
    %s58 = sphi 0, %s57
    %s72 = sphi 0, %s58
    %s78 = sphi 0, %s80
    %s81 = sphi 0, %s78
    %s82 = sphi 0, %s81
    %s98 = sphi 0, %s82
    %s106 = sphi 0, %s108
    %s109 = sphi 0, %s106
    %s110 = sphi 0, %s109
    %s126 = sphi 0, %s110
  $region4: #{natten3d_transformer_block.6} parent=0 // loop_header_branch
    %12 = sbr.rel (%p10) target = $region8
  $region5: #{natten3d_transformer_block.6} parent=0 // loop_body
    %s14 = ssub.s32 %s9, 1
    %s15 = ssub.s32 %s9, 2
    %s22 = sadd.s32 1, %s17
    %p23 = scmp.ge.s32.totalorder %s22, 2
    %s24 = scalar_select %p23, 0, %s22
    %s25 = sadd.s32 1, %s16
    %s26 = scalar_select %p23, %s25, %s16
    %p27 = scmp.ge.s32.totalorder %s26, 2
    %s28 = scalar_select %p27, 0, %s26
    %s29 = ssub.s32 %s17, %s24
    %p30 = scmp.eq.s32.totalorder %s29, 0
    %s32 = sadd.s32 %s31, 1
    %s33 = scalar_select %p30, %s31, %s32
    %p36 = pneg %p30
    %p37 = scmp.eq.s32.totalorder %s9, 3
    %p38 = por %p36, %p37
    %p39 = scmp.ne.s32.totalorder %s31, %s34
    %p40 = scmp.eq.s32.totalorder %s9, 0
    %p41 = por %p39, %p40
    %p42 = scmp.ne.s32.totalorder %s31, %s34
    %p43 = scmp.eq.s32.totalorder %s14, 3
    %p44 = por %p42, %p43
    %p45 = scmp.ne.s32.totalorder %s34, %s35
    %p46 = scmp.eq.s32.totalorder %s14, 0
    %p47 = por %p45, %p46
    %p48 = scmp.ne.s32.totalorder %s34, %s35
    %p49 = scmp.eq.s32.totalorder %s15, 3
    %p50 = por %p48, %p49
    %p52 = scmp.ne.s32.totalorder %s35, %s51
    %p53 = scmp.eq.s32.totalorder %s15, 0
    %p54 = por %p52, %p53
    %s56 = sadd.s32 %s55, 1
    %p59 = scmp.eq.s32.totalorder %s9, 3
    %p60 = scmp.ne.s32.totalorder %s55, %s57
    %p61 = scmp.eq.s32.totalorder %s9, 0
    %p62 = por %p60, %p61
    %p63 = scmp.ne.s32.totalorder %s55, %s57
    %p64 = scmp.eq.s32.totalorder %s14, 3
    %p65 = por %p63, %p64
    %p66 = scmp.ne.s32.totalorder %s57, %s58
    %p67 = scmp.eq.s32.totalorder %s14, 0
    %p68 = por %p66, %p67
    %p69 = scmp.ne.s32.totalorder %s57, %s58
    %p70 = scmp.eq.s32.totalorder %s15, 3
    %p71 = por %p69, %p70
    %p73 = scmp.ne.s32.totalorder %s58, %s72
    %p74 = scmp.eq.s32.totalorder %s15, 0
    %p75 = por %p73, %p74
    %s76 = ssub.s32 %s16, %s28
    %p77 = scmp.eq.s32.totalorder %s76, 0
    %s79 = sadd.s32 %s78, 1
    %s80 = scalar_select %p77, %s78, %s79
    %p83 = pneg %p77
    %p84 = scmp.eq.s32.totalorder %s9, 3
    %p85 = por %p83, %p84
    %p86 = scmp.ne.s32.totalorder %s78, %s81
    %p87 = scmp.eq.s32.totalorder %s9, 0
    %p88 = por %p86, %p87
    %p89 = scmp.ne.s32.totalorder %s78, %s81
    %p90 = scmp.eq.s32.totalorder %s14, 3
    %p91 = por %p89, %p90
    %p92 = scmp.ne.s32.totalorder %s81, %s82
    %p93 = scmp.eq.s32.totalorder %s14, 0
    %p94 = por %p92, %p93
    %p95 = scmp.ne.s32.totalorder %s81, %s82
    %p96 = scmp.eq.s32.totalorder %s15, 3
    %p97 = por %p95, %p96
    %p99 = scmp.ne.s32.totalorder %s82, %s98
    %p100 = scmp.eq.s32.totalorder %s15, 0
    %p101 = por %p99, %p100
    %s102 = ssub.s32 %s16, %s28
    %s103 = ssub.s32 %s17, %s24
    %s104 = sor.u32 %s102, %s103
    %p105 = scmp.eq.s32.totalorder %s104, 0
    %s107 = sadd.s32 %s106, 1
    %s108 = scalar_select %p105, %s106, %s107
    %p111 = pneg %p105
    %p112 = scmp.eq.s32.totalorder %s9, 3
    %p113 = por %p111, %p112
    %p114 = scmp.ne.s32.totalorder %s106, %s109
    %p115 = scmp.eq.s32.totalorder %s9, 0
    %p116 = por %p114, %p115
    %p117 = scmp.ne.s32.totalorder %s106, %s109
    %p118 = scmp.eq.s32.totalorder %s14, 3
    %p119 = por %p117, %p118
    %p120 = scmp.ne.s32.totalorder %s109, %s110
    %p121 = scmp.eq.s32.totalorder %s14, 0
    %p122 = por %p120, %p121
    %p123 = scmp.ne.s32.totalorder %s109, %s110
    %p124 = scmp.eq.s32.totalorder %s15, 3
    %p125 = por %p123, %p124
    %p127 = scmp.ne.s32.totalorder %s110, %s126
    %p128 = scmp.eq.s32.totalorder %s15, 0
    %p129 = por %p127, %p128
    %p130 = scmp.le.s32.totalorder 1, %s9
    %p131 = scmp.lt.s32.totalorder %s9, 5
    %p132 = pnand %p130, %p131
    %p133 = pneg %p132
    // Predicated region
    $region9: #{natten3d_transformer_block.6} parent=5 // pred_check
      _
    $region10: #{natten3d_transformer_block.6} parent=5 // pred_check_branch
      %135 = sbr.rel (%p132) target = $region12
    $region11: #{natten3d_transformer_block.6} parent=5 // pred_region
      %s136 = ssub.s32 %s9, 1
      // Predicated region
      $region13: #{natten3d_transformer_block.6} parent=11 // pred_check
        %p137 = pneg %p68
      $region14: #{natten3d_transformer_block.6} parent=11 // pred_check_branch
        %139 = sbr.rel (%p137) target = $region16
      $region15: #{natten3d_transformer_block.6} parent=11 // pred_region
        _
      $region16: #{natten3d_transformer_block.6} parent=11 // pred_fallthru
        _
    $region12: #{natten3d_transformer_block.6} parent=5 // pred_fallthru
      _
    %p140 = scmp.lt.s32.totalorder %s9, 4
    // Predicated region
    $region17: #{natten3d_transformer_block.6} parent=5 // pred_check
      %p141 = pneg %p140
    $region18: #{natten3d_transformer_block.6} parent=5 // pred_check_branch
      %143 = sbr.rel (%p141) target = $region20
    $region19: #{natten3d_transformer_block.6} parent=5 // pred_region
      // Predicated region
      $region21: #{natten3d_transformer_block.6} parent=19 // pred_check
        %p144 = pneg %p41
      $region22: #{natten3d_transformer_block.6} parent=19 // pred_check_branch
        %146 = sbr.rel (%p144) target = $region24
      $region23: #{natten3d_transformer_block.6} parent=19 // pred_region
        %s147 = smul.u32 8, %s17
        %p148 = scmp.lt.s32.totalorder %s147, 15
        %s149 = scalar_select %p148, %s147, 15
        %s150 = smul.addr %s149, 8
        %s151 = scalar_lea.vmem %s0, %s150
        %s152 = smul.u32 8, %s17
      $region24: #{natten3d_transformer_block.6} parent=19 // pred_fallthru
        _
      // Predicated region
      $region25: #{natten3d_transformer_block.6} parent=19 // pred_check
        %p153 = pneg %p88
      $region26: #{natten3d_transformer_block.6} parent=19 // pred_check_branch
        %155 = sbr.rel (%p153) target = $region28
      $region27: #{natten3d_transformer_block.6} parent=19 // pred_region
        %p156 = scmp.lt.s32.totalorder %s16, 1
        %s157 = scalar_select %p156, %s16, 1
        %s158 = smul.addr %s157, 16
        %s159 = smul.addr %s158, 4
        %s160 = scalar_lea.vmem %s2, %s159
      $region28: #{natten3d_transformer_block.6} parent=19 // pred_fallthru
        _
    $region20: #{natten3d_transformer_block.6} parent=5 // pred_fallthru
      _
    %p161 = scmp.le.s32.totalorder 1, %s9
    %p162 = scmp.lt.s32.totalorder %s9, 5
    %p163 = pnand %p161, %p162
    %p164 = pneg %p163
    // Predicated region
    $region29: #{natten3d_transformer_block.6} parent=5 // pred_check
      _
    $region30: #{natten3d_transformer_block.6} parent=5 // pred_check_branch
      %166 = sbr.rel (%p163) target = $region32
    $region31: #{natten3d_transformer_block.6} parent=5 // pred_region
      %s167 = ssub.s32 %s9, 1
      %s168 = smul.u32 8, %s19
      %p169 = scmp.lt.s32.totalorder %s168, 15
      %s170 = scalar_select %p169, %s168, 15
      %s171 = smul.addr %s170, 8
      %s172 = scalar_lea.vmem %s0, %s171
      %p173 = pneg %p47
      %p174 = pneg %p44
      %p175 = pneg %p68
      %p176 = pneg %p65
      %p177 = scmp.lt.s32.totalorder %s18, 1
      %s178 = scalar_select %p177, %s18, 1
      %s179 = smul.addr %s178, 16
      %s180 = smul.addr %s179, 4
      %s181 = scalar_lea.vmem %s2, %s180
      %p182 = pneg %p94
      %p183 = pneg %p91
      %p184 = pneg %p122
      %p185 = pneg %p119
      %s186 = smul.u32 8, %s19
      %p187 = scmp.lt.s32.totalorder %s18, 1
      %s188 = scalar_select %p187, %s18, 1
      %p189 = scmp.lt.s32.totalorder %s186, 15
      %s190 = scalar_select %p189, %s186, 15
      %s191 = smul.addr %s188, 16
      %s192 = sadd.s32 %s190, %s191
      %s193 = smul.addr %s192, 4
      %s194 = scalar_lea.vmem %s3, %s193
      %s195 = smul.u32 8, %s19
      %p196 = scmp.lt.s32.totalorder %s195, 15
      %s197 = scalar_select %p196, %s195, 15
      %s198 = smul.addr %s197, 8
      %s199 = scalar_lea.vmem %s0, %s198
      %s200 = smul.u32 8, %s19
      %p201 = scmp.lt.s32.totalorder %s18, 1
      %s202 = scalar_select %p201, %s18, 1
      %s203 = smul.addr %s202, 16
      %s204 = smul.addr %s203, 4
      %s205 = scalar_lea.vmem %s2, %s204
      %s206 = smul.u32 8, %s19
      %p207 = scmp.lt.s32.totalorder %s18, 1
      %s208 = scalar_select %p207, %s18, 1
      %p209 = scmp.lt.s32.totalorder %s206, 15
      %s210 = scalar_select %p209, %s206, 15
      %s211 = smul.addr %s208, 16
      %s212 = sadd.s32 %s210, %s211
      %s213 = smul.addr %s212, 4
      %s214 = scalar_lea.vmem %s3, %s213
      %s215 = smul.u32 8, %s19
      %v217 = vld [vmem:[%s199] sm:$0xff]
      %v218 = vld [vmem:[%s199 + $0x8] sm:$0xff]
      %v219 = vld [vmem:[%s199 + $0x10] sm:$0xff]
      %v220 = vld [vmem:[%s199 + $0x18] sm:$0xff]
      %v221 = vld [vmem:[%s199 + $0x20] sm:$0xff]
      %v222 = vld [vmem:[%s199 + $0x28] sm:$0xff]
      %v223 = vld [vmem:[%s199 + $0x30] sm:$0xff]
      %v224 = vld [vmem:[%s199 + $0x38] sm:$0xff]
      %v225 = vld [vmem:[%s1] sm:$0x1]
      %v226 = vld [vmem:[%s1 + $0x1] sm:$0x1]
      %v227 = vld [vmem:[%s1 + $0x2] sm:$0x1]
      %v228 = vlaneseq
      %v229 = vshrl.u32 %v228, 7
      %v230 = vsub.s32 0, %v229
      %v231 = vrot.slane %v225, %v230
      %232 = vset.pattern.permute.xlu0 0
      %233 = vperm.xlu0 %232, %v217
      %v234 = vpop.permute.xlu0 %233
      %235 = vset.pattern.permute.xlu0 0
      %236 = vperm.xlu0 %235, %v218
      %v237 = vpop.permute.xlu0 %236
      %238 = vset.pattern.permute.xlu0 0
      %239 = vperm.xlu0 %238, %v219
      %v240 = vpop.permute.xlu0 %239
      %241 = vset.pattern.permute.xlu0 0
      %242 = vperm.xlu0 %241, %v220
      %v243 = vpop.permute.xlu0 %242
      %244 = vset.pattern.permute.xlu0 0
      %245 = vperm.xlu0 %244, %v221
      %v246 = vpop.permute.xlu0 %245
      %247 = vset.pattern.permute.xlu0 0
      %248 = vperm.xlu0 %247, %v222
      %v249 = vpop.permute.xlu0 %248
      %250 = vset.pattern.permute.xlu0 0
      %251 = vperm.xlu0 %250, %v223
      %v252 = vpop.permute.xlu0 %251
      %253 = vset.pattern.permute.xlu0 0
      %254 = vperm.xlu0 %253, %v224
      %v255 = vpop.permute.xlu0 %254
      %vm256 = vcmp.ge.s32.totalorder %v231, %v234
      %vm257 = vcmp.ge.s32.totalorder %v231, %v237
      %vm258 = vcmp.ge.s32.totalorder %v231, %v240
      %vm259 = vcmp.ge.s32.totalorder %v231, %v243
      %vm260 = vcmp.ge.s32.totalorder %v231, %v246
      %vm261 = vcmp.ge.s32.totalorder %v231, %v249
      %vm262 = vcmp.ge.s32.totalorder %v231, %v252
      %vm263 = vcmp.ge.s32.totalorder %v231, %v255
      %v264 = vadd.s32 %v217, 3
      %v265 = vadd.s32 %v218, 3
      %v266 = vadd.s32 %v219, 3
      %v267 = vadd.s32 %v220, 3
      %v268 = vadd.s32 %v221, 3
      %v269 = vadd.s32 %v222, 3
      %v270 = vadd.s32 %v223, 3
      %v271 = vadd.s32 %v224, 3
      %272 = vset.pattern.permute.xlu0 0
      %273 = vperm.xlu0 %272, %v264
      %v274 = vpop.permute.xlu0 %273
      %275 = vset.pattern.permute.xlu0 0
      %276 = vperm.xlu0 %275, %v265
      %v277 = vpop.permute.xlu0 %276
      %278 = vset.pattern.permute.xlu0 0
      %279 = vperm.xlu0 %278, %v266
      %v280 = vpop.permute.xlu0 %279
      %281 = vset.pattern.permute.xlu0 0
      %282 = vperm.xlu0 %281, %v267
      %v283 = vpop.permute.xlu0 %282
      %284 = vset.pattern.permute.xlu0 0
      %285 = vperm.xlu0 %284, %v268
      %v286 = vpop.permute.xlu0 %285
      %287 = vset.pattern.permute.xlu0 0
      %288 = vperm.xlu0 %287, %v269
      %v289 = vpop.permute.xlu0 %288
      %290 = vset.pattern.permute.xlu0 0
      %291 = vperm.xlu0 %290, %v270
      %v292 = vpop.permute.xlu0 %291
      %293 = vset.pattern.permute.xlu0 0
      %294 = vperm.xlu0 %293, %v271
      %v295 = vpop.permute.xlu0 %294
      %vm296 = vcmp.lt.s32.totalorder %v231, %v274
      %vm297 = vcmp.lt.s32.totalorder %v231, %v277
      %vm298 = vcmp.lt.s32.totalorder %v231, %v280
      %vm299 = vcmp.lt.s32.totalorder %v231, %v283
      %vm300 = vcmp.lt.s32.totalorder %v231, %v286
      %vm301 = vcmp.lt.s32.totalorder %v231, %v289
      %vm302 = vcmp.lt.s32.totalorder %v231, %v292
      %vm303 = vcmp.lt.s32.totalorder %v231, %v295
      %vm304 = vmand %vm256, %vm296
      %vm305 = vmand %vm257, %vm297
      %vm306 = vmand %vm258, %vm298
      %vm307 = vmand %vm259, %vm299
      %vm308 = vmand %vm260, %vm300
      %vm309 = vmand %vm261, %vm301
      %vm310 = vmand %vm262, %vm302
      %vm311 = vmand %vm263, %vm303
      %v312 = vlaneseq
      %v313 = vshrl.u32 %v312, 7
      %v314 = vsub.s32 0, %v313
      %v315 = vrot.slane %v226, %v314
      %316 = vset.pattern.permute.xlu0 1
      %317 = vperm.xlu0 %316, %v217
      %v318 = vpop.permute.xlu0 %317
      %319 = vset.pattern.permute.xlu0 1
      %320 = vperm.xlu0 %319, %v218
      %v321 = vpop.permute.xlu0 %320
      %322 = vset.pattern.permute.xlu0 1
      %323 = vperm.xlu0 %322, %v219
      %v324 = vpop.permute.xlu0 %323
      %325 = vset.pattern.permute.xlu0 1
      %326 = vperm.xlu0 %325, %v220
      %v327 = vpop.permute.xlu0 %326
      %328 = vset.pattern.permute.xlu0 1
      %329 = vperm.xlu0 %328, %v221
      %v330 = vpop.permute.xlu0 %329
      %331 = vset.pattern.permute.xlu0 1
      %332 = vperm.xlu0 %331, %v222
      %v333 = vpop.permute.xlu0 %332
      %334 = vset.pattern.permute.xlu0 1
      %335 = vperm.xlu0 %334, %v223
      %v336 = vpop.permute.xlu0 %335
      %337 = vset.pattern.permute.xlu0 1
      %338 = vperm.xlu0 %337, %v224
      %v339 = vpop.permute.xlu0 %338
      %vm340 = vcmp.ge.s32.totalorder %v315, %v318
      %vm341 = vcmp.ge.s32.totalorder %v315, %v321
      %vm342 = vcmp.ge.s32.totalorder %v315, %v324
      %vm343 = vcmp.ge.s32.totalorder %v315, %v327
      %vm344 = vcmp.ge.s32.totalorder %v315, %v330
      %vm345 = vcmp.ge.s32.totalorder %v315, %v333
      %vm346 = vcmp.ge.s32.totalorder %v315, %v336
      %vm347 = vcmp.ge.s32.totalorder %v315, %v339
      %vm348 = vmand %vm304, %vm340
      %vm349 = vmand %vm305, %vm341
      %vm350 = vmand %vm306, %vm342
      %vm351 = vmand %vm307, %vm343
      %vm352 = vmand %vm308, %vm344
      %vm353 = vmand %vm309, %vm345
      %vm354 = vmand %vm310, %vm346
      %vm355 = vmand %vm311, %vm347
      %356 = vset.pattern.permute.xlu0 1
      %357 = vperm.xlu0 %356, %v264
      %v358 = vpop.permute.xlu0 %357
      %359 = vset.pattern.permute.xlu0 1
      %360 = vperm.xlu0 %359, %v265
      %v361 = vpop.permute.xlu0 %360
      %362 = vset.pattern.permute.xlu0 1
      %363 = vperm.xlu0 %362, %v266
      %v364 = vpop.permute.xlu0 %363
      %365 = vset.pattern.permute.xlu0 1
      %366 = vperm.xlu0 %365, %v267
      %v367 = vpop.permute.xlu0 %366
      %368 = vset.pattern.permute.xlu0 1
      %369 = vperm.xlu0 %368, %v268
      %v370 = vpop.permute.xlu0 %369
      %371 = vset.pattern.permute.xlu0 1
      %372 = vperm.xlu0 %371, %v269
      %v373 = vpop.permute.xlu0 %372
      %374 = vset.pattern.permute.xlu0 1
      %375 = vperm.xlu0 %374, %v270
      %v376 = vpop.permute.xlu0 %375
      %377 = vset.pattern.permute.xlu0 1
      %378 = vperm.xlu0 %377, %v271
      %v379 = vpop.permute.xlu0 %378
      %vm380 = vcmp.lt.s32.totalorder %v315, %v358
      %vm381 = vcmp.lt.s32.totalorder %v315, %v361
      %vm382 = vcmp.lt.s32.totalorder %v315, %v364
      %vm383 = vcmp.lt.s32.totalorder %v315, %v367
      %vm384 = vcmp.lt.s32.totalorder %v315, %v370
      %vm385 = vcmp.lt.s32.totalorder %v315, %v373
      %vm386 = vcmp.lt.s32.totalorder %v315, %v376
      %vm387 = vcmp.lt.s32.totalorder %v315, %v379
      %vm388 = vmand %vm348, %vm380
      %vm389 = vmand %vm349, %vm381
      %vm390 = vmand %vm350, %vm382
      %vm391 = vmand %vm351, %vm383
      %vm392 = vmand %vm352, %vm384
      %vm393 = vmand %vm353, %vm385
      %vm394 = vmand %vm354, %vm386
      %vm395 = vmand %vm355, %vm387
      %v396 = vlaneseq
      %v397 = vshrl.u32 %v396, 7
      %v398 = vsub.s32 0, %v397
      %v399 = vrot.slane %v227, %v398
      %400 = vset.pattern.permute.xlu0 2
      %401 = vperm.xlu0 %400, %v217
      %v402 = vpop.permute.xlu0 %401
      %403 = vset.pattern.permute.xlu0 2
      %404 = vperm.xlu0 %403, %v218
      %v405 = vpop.permute.xlu0 %404
      %406 = vset.pattern.permute.xlu0 2
      %407 = vperm.xlu0 %406, %v219
      %v408 = vpop.permute.xlu0 %407
      %409 = vset.pattern.permute.xlu0 2
      %410 = vperm.xlu0 %409, %v220
      %v411 = vpop.permute.xlu0 %410
      %412 = vset.pattern.permute.xlu0 2
      %413 = vperm.xlu0 %412, %v221
      %v414 = vpop.permute.xlu0 %413
      %415 = vset.pattern.permute.xlu0 2
      %416 = vperm.xlu0 %415, %v222
      %v417 = vpop.permute.xlu0 %416
      %418 = vset.pattern.permute.xlu0 2
      %419 = vperm.xlu0 %418, %v223
      %v420 = vpop.permute.xlu0 %419
      %421 = vset.pattern.permute.xlu0 2
      %422 = vperm.xlu0 %421, %v224
      %v423 = vpop.permute.xlu0 %422
      %vm424 = vcmp.ge.s32.totalorder %v399, %v402
      %vm425 = vcmp.ge.s32.totalorder %v399, %v405
      %vm426 = vcmp.ge.s32.totalorder %v399, %v408
      %vm427 = vcmp.ge.s32.totalorder %v399, %v411
      %vm428 = vcmp.ge.s32.totalorder %v399, %v414
      %vm429 = vcmp.ge.s32.totalorder %v399, %v417
      %vm430 = vcmp.ge.s32.totalorder %v399, %v420
      %vm431 = vcmp.ge.s32.totalorder %v399, %v423
      %vm432 = vmand %vm388, %vm424
      %vm433 = vmand %vm389, %vm425
      %vm434 = vmand %vm390, %vm426
      %vm435 = vmand %vm391, %vm427
      %vm436 = vmand %vm392, %vm428
      %vm437 = vmand %vm393, %vm429
      %vm438 = vmand %vm394, %vm430
      %vm439 = vmand %vm395, %vm431
      %440 = vset.pattern.permute.xlu0 2
      %441 = vperm.xlu0 %440, %v264
      %v442 = vpop.permute.xlu0 %441
      %443 = vset.pattern.permute.xlu0 2
      %444 = vperm.xlu0 %443, %v265
      %v445 = vpop.permute.xlu0 %444
      %446 = vset.pattern.permute.xlu0 2
      %447 = vperm.xlu0 %446, %v266
      %v448 = vpop.permute.xlu0 %447
      %449 = vset.pattern.permute.xlu0 2
      %450 = vperm.xlu0 %449, %v267
      %v451 = vpop.permute.xlu0 %450
      %452 = vset.pattern.permute.xlu0 2
      %453 = vperm.xlu0 %452, %v268
      %v454 = vpop.permute.xlu0 %453
      %455 = vset.pattern.permute.xlu0 2
      %456 = vperm.xlu0 %455, %v269
      %v457 = vpop.permute.xlu0 %456
      %458 = vset.pattern.permute.xlu0 2
      %459 = vperm.xlu0 %458, %v270
      %v460 = vpop.permute.xlu0 %459
      %461 = vset.pattern.permute.xlu0 2
      %462 = vperm.xlu0 %461, %v271
      %v463 = vpop.permute.xlu0 %462
      %vm464 = vcmp.lt.s32.totalorder %v399, %v442
      %vm465 = vcmp.lt.s32.totalorder %v399, %v445
      %vm466 = vcmp.lt.s32.totalorder %v399, %v448
      %vm467 = vcmp.lt.s32.totalorder %v399, %v451
      %vm468 = vcmp.lt.s32.totalorder %v399, %v454
      %vm469 = vcmp.lt.s32.totalorder %v399, %v457
      %vm470 = vcmp.lt.s32.totalorder %v399, %v460
      %vm471 = vcmp.lt.s32.totalorder %v399, %v463
      %vm472 = vmand %vm432, %vm464
      %vm473 = vmand %vm433, %vm465
      %vm474 = vmand %vm434, %vm466
      %vm475 = vmand %vm435, %vm467
      %vm476 = vmand %vm436, %vm468
      %vm477 = vmand %vm437, %vm469
      %vm478 = vmand %vm438, %vm470
      %vm479 = vmand %vm439, %vm471
      %s480 = smul.u32 %s19, 64
      %s481 = sshra.s32 %s480, 3
      %s482 = sand.u32 %s480, 7
      %s483 = smul.addr %s481, 4
      %s484 = scalar_lea.vmem %s205, %s483
      %v485 = vld [vmem:[%s484] sm:$0xf]
      %v486 = vld [vmem:[%s484 + $0x4] sm:$0xf]
      %v487 = vld [vmem:[%s484 + $0x8] sm:$0xf]
      %v488 = vld [vmem:[%s484 + $0xc] sm:$0xf]
      %v489 = vld [vmem:[%s484 + $0x10] sm:$0xf]
      %v490 = vld [vmem:[%s484 + $0x14] sm:$0xf]
      %v491 = vld [vmem:[%s484 + $0x18] sm:$0xf]
      %v492 = vld [vmem:[%s484 + $0x1c] sm:$0xf]
      %v493 = vld [vmem:[%s205] sm:$0xf]
      %v494 = vld [vmem:[%s205 + $0x4] sm:$0xf]
      %v495 = vld [vmem:[%s205 + $0x8] sm:$0xf]
      %v496 = vld [vmem:[%s205 + $0xc] sm:$0xf]
      %v497 = vld [vmem:[%s205 + $0x10] sm:$0xf]
      %v498 = vld [vmem:[%s205 + $0x14] sm:$0xf]
      %v499 = vld [vmem:[%s205 + $0x18] sm:$0xf]
      %v500 = vld [vmem:[%s205 + $0x1c] sm:$0xf]
      %v501 = vld [vmem:[%s205 + $0x20] sm:$0xf]
      %v502 = vld [vmem:[%s205 + $0x24] sm:$0xf]
      %v503 = vld [vmem:[%s205 + $0x28] sm:$0xf]
      %v504 = vld [vmem:[%s205 + $0x2c] sm:$0xf]
      %v505 = vld [vmem:[%s205 + $0x30] sm:$0xf]
      %v506 = vld [vmem:[%s205 + $0x34] sm:$0xf]
      %v507 = vld [vmem:[%s205 + $0x38] sm:$0xf]
      %v508 = vld [vmem:[%s205 + $0x3c] sm:$0xf]
      %v517 = vunpack.c.l.b16 %v485
      %v518 = vunpack.c.l.b16 %v486
      %v519 = vunpack.c.l.b16 %v487
      %v520 = vunpack.c.l.b16 %v488
      %v521 = vunpack.c.l.b16 %v489
      %v522 = vunpack.c.l.b16 %v490
      %v523 = vunpack.c.l.b16 %v491
      %v524 = vunpack.c.l.b16 %v492
      %v525 = vpack.c.b16 %v518, %v517
      %v526 = vpack.c.b16 %v520, %v519
      %v527 = vpack.c.b16 %v522, %v521
      %v528 = vpack.c.b16 %v524, %v523
      %v545 = vunpack.c.l.b16 %v493
      %v546 = vunpack.c.l.b16 %v494
      %v547 = vunpack.c.l.b16 %v495
      %v548 = vunpack.c.l.b16 %v496
      %v549 = vunpack.c.l.b16 %v497
      %v550 = vunpack.c.l.b16 %v498
      %v551 = vunpack.c.l.b16 %v499
      %v552 = vunpack.c.l.b16 %v500
      %v553 = vunpack.c.l.b16 %v501
      %v554 = vunpack.c.l.b16 %v502
      %v555 = vunpack.c.l.b16 %v503
      %v556 = vunpack.c.l.b16 %v504
      %v557 = vunpack.c.l.b16 %v505
      %v558 = vunpack.c.l.b16 %v506
      %v559 = vunpack.c.l.b16 %v507
      %v560 = vunpack.c.l.b16 %v508
      %v561 = vpack.c.b16 %v546, %v545
      %v562 = vpack.c.b16 %v548, %v547
      %v563 = vpack.c.b16 %v550, %v549
      %v564 = vpack.c.b16 %v552, %v551
      %v565 = vpack.c.b16 %v554, %v553
      %v566 = vpack.c.b16 %v556, %v555
      %v567 = vpack.c.b16 %v558, %v557
      %v568 = vpack.c.b16 %v560, %v559
      %569 = vrot.lane.b32.xlu0 %v561, 96
      %v570 = vpop.permute.xlu0 %569
      %571 = vrot.lane.b32.xlu0 %v562, 96
      %v572 = vpop.permute.xlu0 %571
      %573 = vrot.lane.b32.xlu0 %v563, 96
      %v574 = vpop.permute.xlu0 %573
      %575 = vrot.lane.b32.xlu0 %v564, 96
      %v576 = vpop.permute.xlu0 %575
      %577 = vrot.lane.b32.xlu0 %v565, 96
      %v578 = vpop.permute.xlu0 %577
      %579 = vrot.lane.b32.xlu0 %v566, 96
      %v580 = vpop.permute.xlu0 %579
      %581 = vrot.lane.b32.xlu0 %v567, 96
      %v582 = vpop.permute.xlu0 %581
      %583 = vrot.lane.b32.xlu0 %v568, 96
      %v584 = vpop.permute.xlu0 %583
      %vm585 = vcmask 64512
      %v587 = vsel %vm585, %v525, 0
      %v590 = vsel %vm585, %v526, 0
      %v593 = vsel %vm585, %v527, 0
      %v596 = vsel %vm585, %v528, 0
      %v599 = vsel %vm585, %v570, 0
      %v602 = vsel %vm585, %v572, 0
      %v605 = vsel %vm585, %v574, 0
      %v608 = vsel %vm585, %v576, 0
      %v611 = vsel %vm585, %v578, 0
      %v614 = vsel %vm585, %v580, 0
      %v617 = vsel %vm585, %v582, 0
      %v620 = vsel %vm585, %v584, 0
      %622 = vmatprep.subr.bf16.mxu0 0
      %623 = vmatpush1.bf16.xpose.msra.mxu0 %v620
      %624 = vmatprep.subr.bf16.mxu0 0
      %625 = vmatpush1.bf16.xpose.msra.mxu0 %v617
      %626 = vmatprep.subr.bf16.mxu0 0
      %627 = vmatpush1.bf16.xpose.msra.mxu0 %v614
      %628 = vmatprep.subr.bf16.mxu0 0
      %629 = vmatpush1.bf16.xpose.msra.mxu0 %v611
      %630 = vmatprep.subr.bf16.mxu0 0
      %631 = vmatpush1.bf16.xpose.msra.mxu0 %v608
      %632 = vmatprep.subr.bf16.mxu0 0
      %633 = vmatpush1.bf16.xpose.msra.mxu0 %v605
      %634 = vmatprep.subr.bf16.mxu0 0
      %635 = vmatpush1.bf16.xpose.msra.mxu0 %v602
      %636 = vmatprep.subr.bf16.mxu0 0
      %637 = vmatpush1.bf16.xpose.msra.mxu0 %v599
      %638 = vmatprep.subr.bf16.mxu0 0
      %639 = vmatpush2.bf16.xpose.msra.mxu0 0
      %640 = vmatprep.subr.bf16.mxu0 0
      %641 = vmatpush2.bf16.xpose.msra.mxu0 0
      %642 = vmatprep.subr.bf16.mxu0 0
      %643 = vmatpush2.bf16.xpose.msra.mxu0 0
      %644 = vmatprep.subr.bf16.mxu0 0
      %645 = vmatpush2.bf16.xpose.msra.mxu0 0
      %646 = vmatprep.subr.bf16.mxu0 0
      %647 = vmatpush2.bf16.xpose.msra.mxu0 0
      %648 = vmatprep.subr.bf16.mxu0 0
      %649 = vmatpush2.bf16.xpose.msra.mxu0 0
      %650 = vmatprep.subr.bf16.mxu0 0
      %651 = vmatpush2.bf16.xpose.msra.mxu0 0
      %652 = vmatprep.subr.bf16.mxu0 0
      %653 = vmatpush2.bf16.xpose.msra.mxu0 0
      %654 = vmatprep.mubr.bf16.mxu0 0
      %655 = vmatmul.mubr.bf16.gmra.mxu0 %v587
      %v656 = vpop.f32.mrf.mxu0
      %v657 = vadd.f32 0.0, %v656
      %v658 = vpop.f32.mrf.mxu0
      %v659 = vpop.f32.mrf.mxu0
      %v660 = vadd.f32 0.0, %v659
      %v661 = vpop.f32.mrf.mxu0
      %662 = vmatprep.mubr.bf16.mxu0 0
      %663 = vmatmul.mubr.bf16.gmra.mxu0 %v590
      %v664 = vpop.f32.mrf.mxu0
      %v665 = vadd.f32 0.0, %v664
      %v666 = vpop.f32.mrf.mxu0
      %v667 = vpop.f32.mrf.mxu0
      %v668 = vadd.f32 0.0, %v667
      %v669 = vpop.f32.mrf.mxu0
      %670 = vmatprep.mubr.bf16.mxu0 0
      %671 = vmatmul.mubr.bf16.gmra.mxu0 %v593
      %v672 = vpop.f32.mrf.mxu0
      %v673 = vadd.f32 0.0, %v672
      %v674 = vpop.f32.mrf.mxu0
      %v675 = vpop.f32.mrf.mxu0
      %v676 = vadd.f32 0.0, %v675
      %v677 = vpop.f32.mrf.mxu0
      %678 = vmatprep.mubr.bf16.mxu0 0
      %679 = vmatmul.mubr.bf16.gmra.mxu0 %v596
      %v680 = vpop.f32.mrf.mxu0
      %v681 = vadd.f32 0.0, %v680
      %v682 = vpop.f32.mrf.mxu0
      %v683 = vpop.f32.mrf.mxu0
      %v684 = vadd.f32 0.0, %v683
      %v685 = vpop.f32.mrf.mxu0
      %686 = vdwg.mxu0
      %v687 = vsel %vm472, %v657, -1e+30
      %v688 = vsel %vm473, %v660, -1e+30
      %v689 = vsel %vm474, %v665, -1e+30
      %v690 = vsel %vm475, %v668, -1e+30
      %v691 = vsel %vm476, %v673, -1e+30
      %v692 = vsel %vm477, %v676, -1e+30
      %v693 = vsel %vm478, %v681, -1e+30
      %v694 = vsel %vm479, %v684, -1e+30
      %695 = vmax.xlane.f32.xlu0 %v687
      %v696 = vpop.xlane.xlu0 %695
      %697 = vmax.xlane.f32.xlu0 %v688
      %v698 = vpop.xlane.xlu0 %697
      %699 = vmax.xlane.f32.xlu0 %v689
      %v700 = vpop.xlane.xlu0 %699
      %701 = vmax.xlane.f32.xlu0 %v690
      %v702 = vpop.xlane.xlu0 %701
      %703 = vmax.xlane.f32.xlu0 %v691
      %v704 = vpop.xlane.xlu0 %703
      %705 = vmax.xlane.f32.xlu0 %v692
      %v706 = vpop.xlane.xlu0 %705
      %707 = vmax.xlane.f32.xlu0 %v693
      %v708 = vpop.xlane.xlu0 %707
      %709 = vmax.xlane.f32.xlu0 %v694
      %v710 = vpop.xlane.xlu0 %709
      %v711 = vsub.f32 %v687, %v696
      %v712 = vsub.f32 %v688, %v698
      %v713 = vsub.f32 %v689, %v700
      %v714 = vsub.f32 %v690, %v702
      %v715 = vsub.f32 %v691, %v704
      %v716 = vsub.f32 %v692, %v706
      %v717 = vsub.f32 %v693, %v708
      %v718 = vsub.f32 %v694, %v710
      %v719 = vmul.f32 %v711, 1.442695
      %v720 = vpow.pop %v719
      %v721 = vmul.f32 %v712, 1.442695
      %v722 = vpow.pop %v721
      %v723 = vmul.f32 %v713, 1.442695
      %v724 = vpow.pop %v723
      %v725 = vmul.f32 %v714, 1.442695
      %v726 = vpow.pop %v725
      %v727 = vmul.f32 %v715, 1.442695
      %v728 = vpow.pop %v727
      %v729 = vmul.f32 %v716, 1.442695
      %v730 = vpow.pop %v729
      %v731 = vmul.f32 %v717, 1.442695
      %v732 = vpow.pop %v731
      %v733 = vmul.f32 %v718, 1.442695
      %v734 = vpow.pop %v733
      %735 = vadd.xlane.f32.xlu0 %v720
      %v736 = vpop.xlane.xlu0 %735
      %737 = vadd.xlane.f32.xlu0 %v722
      %v738 = vpop.xlane.xlu0 %737
      %739 = vadd.xlane.f32.xlu0 %v724
      %v740 = vpop.xlane.xlu0 %739
      %741 = vadd.xlane.f32.xlu0 %v726
      %v742 = vpop.xlane.xlu0 %741
      %743 = vadd.xlane.f32.xlu0 %v728
      %v744 = vpop.xlane.xlu0 %743
      %745 = vadd.xlane.f32.xlu0 %v730
      %v746 = vpop.xlane.xlu0 %745
      %747 = vadd.xlane.f32.xlu0 %v732
      %v748 = vpop.xlane.xlu0 %747
      %749 = vadd.xlane.f32.xlu0 %v734
      %v750 = vpop.xlane.xlu0 %749
      %v751 = vrcp.pop %v736
      %v752 = vrcp.pop %v738
      %v753 = vrcp.pop %v740
      %v754 = vrcp.pop %v742
      %v755 = vrcp.pop %v744
      %v756 = vrcp.pop %v746
      %v757 = vrcp.pop %v748
      %v758 = vrcp.pop %v750
      %v759 = vmul.f32 %v720, %v751
      %v760 = vmul.f32 %v722, %v752
      %v761 = vmul.f32 %v724, %v753
      %v762 = vmul.f32 %v726, %v754
      %v763 = vmul.f32 %v728, %v755
      %v764 = vmul.f32 %v730, %v756
      %v765 = vmul.f32 %v732, %v757
      %v766 = vmul.f32 %v734, %v758
      %v767 = vpack.c.bf16 %v760, %v759
      %v768 = vpack.c.bf16 %v762, %v761
      %v769 = vpack.c.bf16 %v764, %v763
      %v770 = vpack.c.bf16 %v766, %v765
      %771 = vrot.lane.b32.xlu0 %v561, 64
      %v772 = vpop.permute.xlu0 %771
      %773 = vrot.lane.b32.xlu0 %v562, 64
      %v774 = vpop.permute.xlu0 %773
      %775 = vrot.lane.b32.xlu0 %v563, 64
      %v776 = vpop.permute.xlu0 %775
      %777 = vrot.lane.b32.xlu0 %v564, 64
      %v778 = vpop.permute.xlu0 %777
      %779 = vrot.lane.b32.xlu0 %v565, 64
      %v780 = vpop.permute.xlu0 %779
      %781 = vrot.lane.b32.xlu0 %v566, 64
      %v782 = vpop.permute.xlu0 %781
      %783 = vrot.lane.b32.xlu0 %v567, 64
      %v784 = vpop.permute.xlu0 %783
      %785 = vrot.lane.b32.xlu0 %v568, 64
      %v786 = vpop.permute.xlu0 %785
      %795 = vmatprep.subr.bf16.mxu0 0
      %796 = vmatpush1.bf16.msra.mxu0 %v786
      %797 = vmatprep.subr.bf16.mxu0 0
      %798 = vmatpush1.bf16.msra.mxu0 %v784
      %799 = vmatprep.subr.bf16.mxu0 0
      %800 = vmatpush1.bf16.msra.mxu0 %v782
      %801 = vmatprep.subr.bf16.mxu0 0
      %802 = vmatpush1.bf16.msra.mxu0 %v780
      %803 = vmatprep.subr.bf16.mxu0 0
      %804 = vmatpush1.bf16.msra.mxu0 %v778
      %805 = vmatprep.subr.bf16.mxu0 0
      %806 = vmatpush1.bf16.msra.mxu0 %v776
      %807 = vmatprep.subr.bf16.mxu0 0
      %808 = vmatpush1.bf16.msra.mxu0 %v774
      %809 = vmatprep.subr.bf16.mxu0 0
      %810 = vmatpush1.bf16.msra.mxu0 %v772
      %811 = vmatprep.subr.bf16.mxu0 0
      %812 = vmatpush2.bf16.msra.mxu0 0
      %813 = vmatprep.subr.bf16.mxu0 0
      %814 = vmatpush2.bf16.msra.mxu0 0
      %815 = vmatprep.subr.bf16.mxu0 0
      %816 = vmatpush2.bf16.msra.mxu0 0
      %817 = vmatprep.subr.bf16.mxu0 0
      %818 = vmatpush2.bf16.msra.mxu0 0
      %819 = vmatprep.subr.bf16.mxu0 0
      %820 = vmatpush2.bf16.msra.mxu0 0
      %821 = vmatprep.subr.bf16.mxu0 0
      %822 = vmatpush2.bf16.msra.mxu0 0
      %823 = vmatprep.subr.bf16.mxu0 0
      %824 = vmatpush2.bf16.msra.mxu0 0
      %825 = vmatprep.subr.bf16.mxu0 0
      %826 = vmatpush2.bf16.msra.mxu0 0
      %827 = vmatprep.mubr.bf16.mxu0 0
      %828 = vmatmul.mubr.bf16.gmra.mxu0 %v767
      %v829 = vpop.f32.mrf.mxu0
      %v830 = vadd.f32 0.0, %v829
      %v831 = vpop.f32.mrf.mxu0
      %v832 = vpop.f32.mrf.mxu0
      %v833 = vadd.f32 0.0, %v832
      %v834 = vpop.f32.mrf.mxu0
      %835 = vmatprep.mubr.bf16.mxu0 0
      %836 = vmatmul.mubr.bf16.gmra.mxu0 %v768
      %v837 = vpop.f32.mrf.mxu0
      %v838 = vadd.f32 0.0, %v837
      %v839 = vpop.f32.mrf.mxu0
      %v840 = vpop.f32.mrf.mxu0
      %v841 = vadd.f32 0.0, %v840
      %v842 = vpop.f32.mrf.mxu0
      %843 = vmatprep.mubr.bf16.mxu0 0
      %844 = vmatmul.mubr.bf16.gmra.mxu0 %v769
      %v845 = vpop.f32.mrf.mxu0
      %v846 = vadd.f32 0.0, %v845
      %v847 = vpop.f32.mrf.mxu0
      %v848 = vpop.f32.mrf.mxu0
      %v849 = vadd.f32 0.0, %v848
      %v850 = vpop.f32.mrf.mxu0
      %851 = vmatprep.mubr.bf16.mxu0 0
      %852 = vmatmul.mubr.bf16.gmra.mxu0 %v770
      %v853 = vpop.f32.mrf.mxu0
      %v854 = vadd.f32 0.0, %v853
      %v855 = vpop.f32.mrf.mxu0
      %v856 = vpop.f32.mrf.mxu0
      %v857 = vadd.f32 0.0, %v856
      %v858 = vpop.f32.mrf.mxu0
      %859 = vdwg.mxu0
      %860 = vrot.lane.b32.xlu0 %v525, 120
      %v861 = vpop.permute.xlu0 %860
      %862 = vrot.lane.b32.xlu0 %v526, 120
      %v863 = vpop.permute.xlu0 %862
      %864 = vrot.lane.b32.xlu0 %v527, 120
      %v865 = vpop.permute.xlu0 %864
      %866 = vrot.lane.b32.xlu0 %v528, 120
      %v867 = vpop.permute.xlu0 %866
      %868 = vrot.lane.b32.xlu0 %v561, 88
      %v869 = vpop.permute.xlu0 %868
      %870 = vrot.lane.b32.xlu0 %v562, 88
      %v871 = vpop.permute.xlu0 %870
      %872 = vrot.lane.b32.xlu0 %v563, 88
      %v873 = vpop.permute.xlu0 %872
      %874 = vrot.lane.b32.xlu0 %v564, 88
      %v875 = vpop.permute.xlu0 %874
      %876 = vrot.lane.b32.xlu0 %v565, 88
      %v877 = vpop.permute.xlu0 %876
      %878 = vrot.lane.b32.xlu0 %v566, 88
      %v879 = vpop.permute.xlu0 %878
      %880 = vrot.lane.b32.xlu0 %v567, 88
      %v881 = vpop.permute.xlu0 %880
      %882 = vrot.lane.b32.xlu0 %v568, 88
      %v883 = vpop.permute.xlu0 %882
      %v885 = vsel %vm585, %v861, 0
      %v888 = vsel %vm585, %v863, 0
      %v891 = vsel %vm585, %v865, 0
      %v894 = vsel %vm585, %v867, 0
      %v897 = vsel %vm585, %v869, 0
      %v900 = vsel %vm585, %v871, 0
      %v903 = vsel %vm585, %v873, 0
      %v906 = vsel %vm585, %v875, 0
      %v909 = vsel %vm585, %v877, 0
      %v912 = vsel %vm585, %v879, 0
      %v915 = vsel %vm585, %v881, 0
      %v918 = vsel %vm585, %v883, 0
      %920 = vmatprep.subr.bf16.mxu0 0
      %921 = vmatpush1.bf16.xpose.msra.mxu0 %v918
      %922 = vmatprep.subr.bf16.mxu0 0
      %923 = vmatpush1.bf16.xpose.msra.mxu0 %v915
      %924 = vmatprep.subr.bf16.mxu0 0
      %925 = vmatpush1.bf16.xpose.msra.mxu0 %v912
      %926 = vmatprep.subr.bf16.mxu0 0
      %927 = vmatpush1.bf16.xpose.msra.mxu0 %v909
      %928 = vmatprep.subr.bf16.mxu0 0
      %929 = vmatpush1.bf16.xpose.msra.mxu0 %v906
      %930 = vmatprep.subr.bf16.mxu0 0
      %931 = vmatpush1.bf16.xpose.msra.mxu0 %v903
      %932 = vmatprep.subr.bf16.mxu0 0
      %933 = vmatpush1.bf16.xpose.msra.mxu0 %v900
      %934 = vmatprep.subr.bf16.mxu0 0
      %935 = vmatpush1.bf16.xpose.msra.mxu0 %v897
      %936 = vmatprep.subr.bf16.mxu0 0
      %937 = vmatpush2.bf16.xpose.msra.mxu0 0
      %938 = vmatprep.subr.bf16.mxu0 0
      %939 = vmatpush2.bf16.xpose.msra.mxu0 0
      %940 = vmatprep.subr.bf16.mxu0 0
      %941 = vmatpush2.bf16.xpose.msra.mxu0 0
      %942 = vmatprep.subr.bf16.mxu0 0
      %943 = vmatpush2.bf16.xpose.msra.mxu0 0
      %944 = vmatprep.subr.bf16.mxu0 0
      %945 = vmatpush2.bf16.xpose.msra.mxu0 0
      %946 = vmatprep.subr.bf16.mxu0 0
      %947 = vmatpush2.bf16.xpose.msra.mxu0 0
      %948 = vmatprep.subr.bf16.mxu0 0
      %949 = vmatpush2.bf16.xpose.msra.mxu0 0
      %950 = vmatprep.subr.bf16.mxu0 0
      %951 = vmatpush2.bf16.xpose.msra.mxu0 0
      %952 = vmatprep.mubr.bf16.mxu0 0
      %953 = vmatmul.mubr.bf16.gmra.mxu0 %v885
      %v954 = vpop.f32.mrf.mxu0
      %v955 = vadd.f32 0.0, %v954
      %v956 = vpop.f32.mrf.mxu0
      %v957 = vpop.f32.mrf.mxu0
      %v958 = vadd.f32 0.0, %v957
      %v959 = vpop.f32.mrf.mxu0
      %960 = vmatprep.mubr.bf16.mxu0 0
      %961 = vmatmul.mubr.bf16.gmra.mxu0 %v888
      %v962 = vpop.f32.mrf.mxu0
      %v963 = vadd.f32 0.0, %v962
      %v964 = vpop.f32.mrf.mxu0
      %v965 = vpop.f32.mrf.mxu0
      %v966 = vadd.f32 0.0, %v965
      %v967 = vpop.f32.mrf.mxu0
      %968 = vmatprep.mubr.bf16.mxu0 0
      %969 = vmatmul.mubr.bf16.gmra.mxu0 %v891
      %v970 = vpop.f32.mrf.mxu0
      %v971 = vadd.f32 0.0, %v970
      %v972 = vpop.f32.mrf.mxu0
      %v973 = vpop.f32.mrf.mxu0
      %v974 = vadd.f32 0.0, %v973
      %v975 = vpop.f32.mrf.mxu0
      %976 = vmatprep.mubr.bf16.mxu0 0
      %977 = vmatmul.mubr.bf16.gmra.mxu0 %v894
      %v978 = vpop.f32.mrf.mxu0
      %v979 = vadd.f32 0.0, %v978
      %v980 = vpop.f32.mrf.mxu0
      %v981 = vpop.f32.mrf.mxu0
      %v982 = vadd.f32 0.0, %v981
      %v983 = vpop.f32.mrf.mxu0
      %984 = vdwg.mxu0
      %v985 = vsel %vm472, %v955, -1e+30
      %v986 = vsel %vm473, %v958, -1e+30
      %v987 = vsel %vm474, %v963, -1e+30
      %v988 = vsel %vm475, %v966, -1e+30
      %v989 = vsel %vm476, %v971, -1e+30
      %v990 = vsel %vm477, %v974, -1e+30
      %v991 = vsel %vm478, %v979, -1e+30
      %v992 = vsel %vm479, %v982, -1e+30
      %993 = vmax.xlane.f32.xlu0 %v985
      %v994 = vpop.xlane.xlu0 %993
      %995 = vmax.xlane.f32.xlu0 %v986
      %v996 = vpop.xlane.xlu0 %995
      %997 = vmax.xlane.f32.xlu0 %v987
      %v998 = vpop.xlane.xlu0 %997
      %999 = vmax.xlane.f32.xlu0 %v988
      %v1000 = vpop.xlane.xlu0 %999
      %1001 = vmax.xlane.f32.xlu0 %v989
      %v1002 = vpop.xlane.xlu0 %1001
      %1003 = vmax.xlane.f32.xlu0 %v990
      %v1004 = vpop.xlane.xlu0 %1003
      %1005 = vmax.xlane.f32.xlu0 %v991
      %v1006 = vpop.xlane.xlu0 %1005
      %1007 = vmax.xlane.f32.xlu0 %v992
      %v1008 = vpop.xlane.xlu0 %1007
      %v1009 = vsub.f32 %v985, %v994
      %v1010 = vsub.f32 %v986, %v996
      %v1011 = vsub.f32 %v987, %v998
      %v1012 = vsub.f32 %v988, %v1000
      %v1013 = vsub.f32 %v989, %v1002
      %v1014 = vsub.f32 %v990, %v1004
      %v1015 = vsub.f32 %v991, %v1006
      %v1016 = vsub.f32 %v992, %v1008
      %v1017 = vmul.f32 %v1009, 1.442695
      %v1018 = vpow.pop %v1017
      %v1019 = vmul.f32 %v1010, 1.442695
      %v1020 = vpow.pop %v1019
      %v1021 = vmul.f32 %v1011, 1.442695
      %v1022 = vpow.pop %v1021
      %v1023 = vmul.f32 %v1012, 1.442695
      %v1024 = vpow.pop %v1023
      %v1025 = vmul.f32 %v1013, 1.442695
      %v1026 = vpow.pop %v1025
      %v1027 = vmul.f32 %v1014, 1.442695
      %v1028 = vpow.pop %v1027
      %v1029 = vmul.f32 %v1015, 1.442695
      %v1030 = vpow.pop %v1029
      %v1031 = vmul.f32 %v1016, 1.442695
      %v1032 = vpow.pop %v1031
      %1033 = vadd.xlane.f32.xlu0 %v1018
      %v1034 = vpop.xlane.xlu0 %1033
      %1035 = vadd.xlane.f32.xlu0 %v1020
      %v1036 = vpop.xlane.xlu0 %1035
      %1037 = vadd.xlane.f32.xlu0 %v1022
      %v1038 = vpop.xlane.xlu0 %1037
      %1039 = vadd.xlane.f32.xlu0 %v1024
      %v1040 = vpop.xlane.xlu0 %1039
      %1041 = vadd.xlane.f32.xlu0 %v1026
      %v1042 = vpop.xlane.xlu0 %1041
      %1043 = vadd.xlane.f32.xlu0 %v1028
      %v1044 = vpop.xlane.xlu0 %1043
      %1045 = vadd.xlane.f32.xlu0 %v1030
      %v1046 = vpop.xlane.xlu0 %1045
      %1047 = vadd.xlane.f32.xlu0 %v1032
      %v1048 = vpop.xlane.xlu0 %1047
      %v1049 = vrcp.pop %v1034
      %v1050 = vrcp.pop %v1036
      %v1051 = vrcp.pop %v1038
      %v1052 = vrcp.pop %v1040
      %v1053 = vrcp.pop %v1042
      %v1054 = vrcp.pop %v1044
      %v1055 = vrcp.pop %v1046
      %v1056 = vrcp.pop %v1048
      %v1057 = vmul.f32 %v1018, %v1049
      %v1058 = vmul.f32 %v1020, %v1050
      %v1059 = vmul.f32 %v1022, %v1051
      %v1060 = vmul.f32 %v1024, %v1052
      %v1061 = vmul.f32 %v1026, %v1053
      %v1062 = vmul.f32 %v1028, %v1054
      %v1063 = vmul.f32 %v1030, %v1055
      %v1064 = vmul.f32 %v1032, %v1056
      %v1065 = vpack.c.bf16 %v1058, %v1057
      %v1066 = vpack.c.bf16 %v1060, %v1059
      %v1067 = vpack.c.bf16 %v1062, %v1061
      %v1068 = vpack.c.bf16 %v1064, %v1063
      %1069 = vrot.lane.b32.xlu0 %v561, 56
      %v1070 = vpop.permute.xlu0 %1069
      %1071 = vrot.lane.b32.xlu0 %v562, 56
      %v1072 = vpop.permute.xlu0 %1071
      %1073 = vrot.lane.b32.xlu0 %v563, 56
      %v1074 = vpop.permute.xlu0 %1073
      %1075 = vrot.lane.b32.xlu0 %v564, 56
      %v1076 = vpop.permute.xlu0 %1075
      %1077 = vrot.lane.b32.xlu0 %v565, 56
      %v1078 = vpop.permute.xlu0 %1077
      %1079 = vrot.lane.b32.xlu0 %v566, 56
      %v1080 = vpop.permute.xlu0 %1079
      %1081 = vrot.lane.b32.xlu0 %v567, 56
      %v1082 = vpop.permute.xlu0 %1081
      %1083 = vrot.lane.b32.xlu0 %v568, 56
      %v1084 = vpop.permute.xlu0 %1083
      %1093 = vmatprep.subr.bf16.mxu0 0
      %1094 = vmatpush1.bf16.msra.mxu0 %v1084
      %1095 = vmatprep.subr.bf16.mxu0 0
      %1096 = vmatpush1.bf16.msra.mxu0 %v1082
      %1097 = vmatprep.subr.bf16.mxu0 0
      %1098 = vmatpush1.bf16.msra.mxu0 %v1080
      %1099 = vmatprep.subr.bf16.mxu0 0
      %1100 = vmatpush1.bf16.msra.mxu0 %v1078
      %1101 = vmatprep.subr.bf16.mxu0 0
      %1102 = vmatpush1.bf16.msra.mxu0 %v1076
      %1103 = vmatprep.subr.bf16.mxu0 0
      %1104 = vmatpush1.bf16.msra.mxu0 %v1074
      %1105 = vmatprep.subr.bf16.mxu0 0
      %1106 = vmatpush1.bf16.msra.mxu0 %v1072
      %1107 = vmatprep.subr.bf16.mxu0 0
      %1108 = vmatpush1.bf16.msra.mxu0 %v1070
      %1109 = vmatprep.subr.bf16.mxu0 0
      %1110 = vmatpush2.bf16.msra.mxu0 0
      %1111 = vmatprep.subr.bf16.mxu0 0
      %1112 = vmatpush2.bf16.msra.mxu0 0
      %1113 = vmatprep.subr.bf16.mxu0 0
      %1114 = vmatpush2.bf16.msra.mxu0 0
      %1115 = vmatprep.subr.bf16.mxu0 0
      %1116 = vmatpush2.bf16.msra.mxu0 0
      %1117 = vmatprep.subr.bf16.mxu0 0
      %1118 = vmatpush2.bf16.msra.mxu0 0
      %1119 = vmatprep.subr.bf16.mxu0 0
      %1120 = vmatpush2.bf16.msra.mxu0 0
      %1121 = vmatprep.subr.bf16.mxu0 0
      %1122 = vmatpush2.bf16.msra.mxu0 0
      %1123 = vmatprep.subr.bf16.mxu0 0
      %1124 = vmatpush2.bf16.msra.mxu0 0
      %1125 = vmatprep.mubr.bf16.mxu0 0
      %1126 = vmatmul.mubr.bf16.gmra.mxu0 %v1065
      %v1127 = vpop.f32.mrf.mxu0
      %v1128 = vadd.f32 0.0, %v1127
      %v1129 = vpop.f32.mrf.mxu0
      %v1130 = vpop.f32.mrf.mxu0
      %v1131 = vadd.f32 0.0, %v1130
      %v1132 = vpop.f32.mrf.mxu0
      %1133 = vmatprep.mubr.bf16.mxu0 0
      %1134 = vmatmul.mubr.bf16.gmra.mxu0 %v1066
      %v1135 = vpop.f32.mrf.mxu0
      %v1136 = vadd.f32 0.0, %v1135
      %v1137 = vpop.f32.mrf.mxu0
      %v1138 = vpop.f32.mrf.mxu0
      %v1139 = vadd.f32 0.0, %v1138
      %v1140 = vpop.f32.mrf.mxu0
      %1141 = vmatprep.mubr.bf16.mxu0 0
      %1142 = vmatmul.mubr.bf16.gmra.mxu0 %v1067
      %v1143 = vpop.f32.mrf.mxu0
      %v1144 = vadd.f32 0.0, %v1143
      %v1145 = vpop.f32.mrf.mxu0
      %v1146 = vpop.f32.mrf.mxu0
      %v1147 = vadd.f32 0.0, %v1146
      %v1148 = vpop.f32.mrf.mxu0
      %1149 = vmatprep.mubr.bf16.mxu0 0
      %1150 = vmatmul.mubr.bf16.gmra.mxu0 %v1068
      %v1151 = vpop.f32.mrf.mxu0
      %v1152 = vadd.f32 0.0, %v1151
      %v1153 = vpop.f32.mrf.mxu0
      %v1154 = vpop.f32.mrf.mxu0
      %v1155 = vadd.f32 0.0, %v1154
      %v1156 = vpop.f32.mrf.mxu0
      %1157 = vdwg.mxu0
      %1158 = vrot.lane.b32.xlu0 %v525, 112
      %v1159 = vpop.permute.xlu0 %1158
      %1160 = vrot.lane.b32.xlu0 %v526, 112
      %v1161 = vpop.permute.xlu0 %1160
      %1162 = vrot.lane.b32.xlu0 %v527, 112
      %v1163 = vpop.permute.xlu0 %1162
      %1164 = vrot.lane.b32.xlu0 %v528, 112
      %v1165 = vpop.permute.xlu0 %1164
      %1166 = vrot.lane.b32.xlu0 %v561, 80
      %v1167 = vpop.permute.xlu0 %1166
      %1168 = vrot.lane.b32.xlu0 %v562, 80
      %v1169 = vpop.permute.xlu0 %1168
      %1170 = vrot.lane.b32.xlu0 %v563, 80
      %v1171 = vpop.permute.xlu0 %1170
      %1172 = vrot.lane.b32.xlu0 %v564, 80
      %v1173 = vpop.permute.xlu0 %1172
      %1174 = vrot.lane.b32.xlu0 %v565, 80
      %v1175 = vpop.permute.xlu0 %1174
      %1176 = vrot.lane.b32.xlu0 %v566, 80
      %v1177 = vpop.permute.xlu0 %1176
      %1178 = vrot.lane.b32.xlu0 %v567, 80
      %v1179 = vpop.permute.xlu0 %1178
      %1180 = vrot.lane.b32.xlu0 %v568, 80
      %v1181 = vpop.permute.xlu0 %1180
      %v1183 = vsel %vm585, %v1159, 0
      %v1186 = vsel %vm585, %v1161, 0
      %v1189 = vsel %vm585, %v1163, 0
      %v1192 = vsel %vm585, %v1165, 0
      %v1195 = vsel %vm585, %v1167, 0
      %v1198 = vsel %vm585, %v1169, 0
      %v1201 = vsel %vm585, %v1171, 0
      %v1204 = vsel %vm585, %v1173, 0
      %v1207 = vsel %vm585, %v1175, 0
      %v1210 = vsel %vm585, %v1177, 0
      %v1213 = vsel %vm585, %v1179, 0
      %v1216 = vsel %vm585, %v1181, 0
      %1218 = vmatprep.subr.bf16.mxu0 0
      %1219 = vmatpush1.bf16.xpose.msra.mxu0 %v1216
      %1220 = vmatprep.subr.bf16.mxu0 0
      %1221 = vmatpush1.bf16.xpose.msra.mxu0 %v1213
      %1222 = vmatprep.subr.bf16.mxu0 0
      %1223 = vmatpush1.bf16.xpose.msra.mxu0 %v1210
      %1224 = vmatprep.subr.bf16.mxu0 0
      %1225 = vmatpush1.bf16.xpose.msra.mxu0 %v1207
      %1226 = vmatprep.subr.bf16.mxu0 0
      %1227 = vmatpush1.bf16.xpose.msra.mxu0 %v1204
      %1228 = vmatprep.subr.bf16.mxu0 0
      %1229 = vmatpush1.bf16.xpose.msra.mxu0 %v1201
      %1230 = vmatprep.subr.bf16.mxu0 0
      %1231 = vmatpush1.bf16.xpose.msra.mxu0 %v1198
      %1232 = vmatprep.subr.bf16.mxu0 0
      %1233 = vmatpush1.bf16.xpose.msra.mxu0 %v1195
      %1234 = vmatprep.subr.bf16.mxu0 0
      %1235 = vmatpush2.bf16.xpose.msra.mxu0 0
      %1236 = vmatprep.subr.bf16.mxu0 0
      %1237 = vmatpush2.bf16.xpose.msra.mxu0 0
      %1238 = vmatprep.subr.bf16.mxu0 0
      %1239 = vmatpush2.bf16.xpose.msra.mxu0 0
      %1240 = vmatprep.subr.bf16.mxu0 0
      %1241 = vmatpush2.bf16.xpose.msra.mxu0 0
      %1242 = vmatprep.subr.bf16.mxu0 0
      %1243 = vmatpush2.bf16.xpose.msra.mxu0 0
      %1244 = vmatprep.subr.bf16.mxu0 0
      %1245 = vmatpush2.bf16.xpose.msra.mxu0 0
      %1246 = vmatprep.subr.bf16.mxu0 0
      %1247 = vmatpush2.bf16.xpose.msra.mxu0 0
      %1248 = vmatprep.subr.bf16.mxu0 0
      %1249 = vmatpush2.bf16.xpose.msra.mxu0 0
      %1250 = vmatprep.mubr.bf16.mxu0 0
      %1251 = vmatmul.mubr.bf16.gmra.mxu0 %v1183
      %v1252 = vpop.f32.mrf.mxu0
      %v1253 = vadd.f32 0.0, %v1252
      %v1254 = vpop.f32.mrf.mxu0
      %v1255 = vpop.f32.mrf.mxu0
      %v1256 = vadd.f32 0.0, %v1255
      %v1257 = vpop.f32.mrf.mxu0
      %1258 = vmatprep.mubr.bf16.mxu0 0
      %1259 = vmatmul.mubr.bf16.gmra.mxu0 %v1186
      %v1260 = vpop.f32.mrf.mxu0
      %v1261 = vadd.f32 0.0, %v1260
      %v1262 = vpop.f32.mrf.mxu0
      %v1263 = vpop.f32.mrf.mxu0
      %v1264 = vadd.f32 0.0, %v1263
      %v1265 = vpop.f32.mrf.mxu0
      %1266 = vmatprep.mubr.bf16.mxu0 0
      %1267 = vmatmul.mubr.bf16.gmra.mxu0 %v1189
      %v1268 = vpop.f32.mrf.mxu0
      %v1269 = vadd.f32 0.0, %v1268
      %v1270 = vpop.f32.mrf.mxu0
      %v1271 = vpop.f32.mrf.mxu0
      %v1272 = vadd.f32 0.0, %v1271
      %v1273 = vpop.f32.mrf.mxu0
      %1274 = vmatprep.mubr.bf16.mxu0 0
      %1275 = vmatmul.mubr.bf16.gmra.mxu0 %v1192
      %v1276 = vpop.f32.mrf.mxu0
      %v1277 = vadd.f32 0.0, %v1276
      %v1278 = vpop.f32.mrf.mxu0
      %v1279 = vpop.f32.mrf.mxu0
      %v1280 = vadd.f32 0.0, %v1279
      %v1281 = vpop.f32.mrf.mxu0
      %1282 = vdwg.mxu0
      %v1283 = vsel %vm472, %v1253, -1e+30
      %v1284 = vsel %vm473, %v1256, -1e+30
      %v1285 = vsel %vm474, %v1261, -1e+30
      %v1286 = vsel %vm475, %v1264, -1e+30
      %v1287 = vsel %vm476, %v1269, -1e+30
      %v1288 = vsel %vm477, %v1272, -1e+30
      %v1289 = vsel %vm478, %v1277, -1e+30
      %v1290 = vsel %vm479, %v1280, -1e+30
      %1291 = vmax.xlane.f32.xlu0 %v1283
      %v1292 = vpop.xlane.xlu0 %1291
      %1293 = vmax.xlane.f32.xlu0 %v1284
      %v1294 = vpop.xlane.xlu0 %1293
      %1295 = vmax.xlane.f32.xlu0 %v1285
      %v1296 = vpop.xlane.xlu0 %1295
      %1297 = vmax.xlane.f32.xlu0 %v1286
      %v1298 = vpop.xlane.xlu0 %1297
      %1299 = vmax.xlane.f32.xlu0 %v1287
      %v1300 = vpop.xlane.xlu0 %1299
      %1301 = vmax.xlane.f32.xlu0 %v1288
      %v1302 = vpop.xlane.xlu0 %1301
      %1303 = vmax.xlane.f32.xlu0 %v1289
      %v1304 = vpop.xlane.xlu0 %1303
      %1305 = vmax.xlane.f32.xlu0 %v1290
      %v1306 = vpop.xlane.xlu0 %1305
      %v1307 = vsub.f32 %v1283, %v1292
      %v1308 = vsub.f32 %v1284, %v1294
      %v1309 = vsub.f32 %v1285, %v1296
      %v1310 = vsub.f32 %v1286, %v1298
      %v1311 = vsub.f32 %v1287, %v1300
      %v1312 = vsub.f32 %v1288, %v1302
      %v1313 = vsub.f32 %v1289, %v1304
      %v1314 = vsub.f32 %v1290, %v1306
      %v1315 = vmul.f32 %v1307, 1.442695
      %v1316 = vpow.pop %v1315
      %v1317 = vmul.f32 %v1308, 1.442695
      %v1318 = vpow.pop %v1317
      %v1319 = vmul.f32 %v1309, 1.442695
      %v1320 = vpow.pop %v1319
      %v1321 = vmul.f32 %v1310, 1.442695
      %v1322 = vpow.pop %v1321
      %v1323 = vmul.f32 %v1311, 1.442695
      %v1324 = vpow.pop %v1323
      %v1325 = vmul.f32 %v1312, 1.442695
      %v1326 = vpow.pop %v1325
      %v1327 = vmul.f32 %v1313, 1.442695
      %v1328 = vpow.pop %v1327
      %v1329 = vmul.f32 %v1314, 1.442695
      %v1330 = vpow.pop %v1329
      %1331 = vadd.xlane.f32.xlu0 %v1316
      %v1332 = vpop.xlane.xlu0 %1331
      %1333 = vadd.xlane.f32.xlu0 %v1318
      %v1334 = vpop.xlane.xlu0 %1333
      %1335 = vadd.xlane.f32.xlu0 %v1320
      %v1336 = vpop.xlane.xlu0 %1335
      %1337 = vadd.xlane.f32.xlu0 %v1322
      %v1338 = vpop.xlane.xlu0 %1337
      %1339 = vadd.xlane.f32.xlu0 %v1324
      %v1340 = vpop.xlane.xlu0 %1339
      %1341 = vadd.xlane.f32.xlu0 %v1326
      %v1342 = vpop.xlane.xlu0 %1341
      %1343 = vadd.xlane.f32.xlu0 %v1328
      %v1344 = vpop.xlane.xlu0 %1343
      %1345 = vadd.xlane.f32.xlu0 %v1330
      %v1346 = vpop.xlane.xlu0 %1345
      %v1347 = vrcp.pop %v1332
      %v1348 = vrcp.pop %v1334
      %v1349 = vrcp.pop %v1336
      %v1350 = vrcp.pop %v1338
      %v1351 = vrcp.pop %v1340
      %v1352 = vrcp.pop %v1342
      %v1353 = vrcp.pop %v1344
      %v1354 = vrcp.pop %v1346
      %v1355 = vmul.f32 %v1316, %v1347
      %v1356 = vmul.f32 %v1318, %v1348
      %v1357 = vmul.f32 %v1320, %v1349
      %v1358 = vmul.f32 %v1322, %v1350
      %v1359 = vmul.f32 %v1324, %v1351
      %v1360 = vmul.f32 %v1326, %v1352
      %v1361 = vmul.f32 %v1328, %v1353
      %v1362 = vmul.f32 %v1330, %v1354
      %v1363 = vpack.c.bf16 %v1356, %v1355
      %v1364 = vpack.c.bf16 %v1358, %v1357
      %v1365 = vpack.c.bf16 %v1360, %v1359
      %v1366 = vpack.c.bf16 %v1362, %v1361
      %1367 = vrot.lane.b32.xlu0 %v561, 48
      %v1368 = vpop.permute.xlu0 %1367
      %1369 = vrot.lane.b32.xlu0 %v562, 48
      %v1370 = vpop.permute.xlu0 %1369
      %1371 = vrot.lane.b32.xlu0 %v563, 48
      %v1372 = vpop.permute.xlu0 %1371
      %1373 = vrot.lane.b32.xlu0 %v564, 48
      %v1374 = vpop.permute.xlu0 %1373
      %1375 = vrot.lane.b32.xlu0 %v565, 48
      %v1376 = vpop.permute.xlu0 %1375
      %1377 = vrot.lane.b32.xlu0 %v566, 48
      %v1378 = vpop.permute.xlu0 %1377
      %1379 = vrot.lane.b32.xlu0 %v567, 48
      %v1380 = vpop.permute.xlu0 %1379
      %1381 = vrot.lane.b32.xlu0 %v568, 48
      %v1382 = vpop.permute.xlu0 %1381
      %1391 = vmatprep.subr.bf16.mxu0 0
      %1392 = vmatpush1.bf16.msra.mxu0 %v1382
      %1393 = vmatprep.subr.bf16.mxu0 0
      %1394 = vmatpush1.bf16.msra.mxu0 %v1380
      %1395 = vmatprep.subr.bf16.mxu0 0
      %1396 = vmatpush1.bf16.msra.mxu0 %v1378
      %1397 = vmatprep.subr.bf16.mxu0 0
      %1398 = vmatpush1.bf16.msra.mxu0 %v1376
      %1399 = vmatprep.subr.bf16.mxu0 0
      %1400 = vmatpush1.bf16.msra.mxu0 %v1374
      %1401 = vmatprep.subr.bf16.mxu0 0
      %1402 = vmatpush1.bf16.msra.mxu0 %v1372
      %1403 = vmatprep.subr.bf16.mxu0 0
      %1404 = vmatpush1.bf16.msra.mxu0 %v1370
      %1405 = vmatprep.subr.bf16.mxu0 0
      %1406 = vmatpush1.bf16.msra.mxu0 %v1368
      %1407 = vmatprep.subr.bf16.mxu0 0
      %1408 = vmatpush2.bf16.msra.mxu0 0
      %1409 = vmatprep.subr.bf16.mxu0 0
      %1410 = vmatpush2.bf16.msra.mxu0 0
      %1411 = vmatprep.subr.bf16.mxu0 0
      %1412 = vmatpush2.bf16.msra.mxu0 0
      %1413 = vmatprep.subr.bf16.mxu0 0
      %1414 = vmatpush2.bf16.msra.mxu0 0
      %1415 = vmatprep.subr.bf16.mxu0 0
      %1416 = vmatpush2.bf16.msra.mxu0 0
      %1417 = vmatprep.subr.bf16.mxu0 0
      %1418 = vmatpush2.bf16.msra.mxu0 0
      %1419 = vmatprep.subr.bf16.mxu0 0
      %1420 = vmatpush2.bf16.msra.mxu0 0
      %1421 = vmatprep.subr.bf16.mxu0 0
      %1422 = vmatpush2.bf16.msra.mxu0 0
      %1423 = vmatprep.mubr.bf16.mxu0 0
      %1424 = vmatmul.mubr.bf16.gmra.mxu0 %v1363
      %v1425 = vpop.f32.mrf.mxu0
      %v1426 = vadd.f32 0.0, %v1425
      %v1427 = vpop.f32.mrf.mxu0
      %v1428 = vpop.f32.mrf.mxu0
      %v1429 = vadd.f32 0.0, %v1428
      %v1430 = vpop.f32.mrf.mxu0
      %1431 = vmatprep.mubr.bf16.mxu0 0
      %1432 = vmatmul.mubr.bf16.gmra.mxu0 %v1364
      %v1433 = vpop.f32.mrf.mxu0
      %v1434 = vadd.f32 0.0, %v1433
      %v1435 = vpop.f32.mrf.mxu0
      %v1436 = vpop.f32.mrf.mxu0
      %v1437 = vadd.f32 0.0, %v1436
      %v1438 = vpop.f32.mrf.mxu0
      %1439 = vmatprep.mubr.bf16.mxu0 0
      %1440 = vmatmul.mubr.bf16.gmra.mxu0 %v1365
      %v1441 = vpop.f32.mrf.mxu0
      %v1442 = vadd.f32 0.0, %v1441
      %v1443 = vpop.f32.mrf.mxu0
      %v1444 = vpop.f32.mrf.mxu0
      %v1445 = vadd.f32 0.0, %v1444
      %v1446 = vpop.f32.mrf.mxu0
      %1447 = vmatprep.mubr.bf16.mxu0 0
      %1448 = vmatmul.mubr.bf16.gmra.mxu0 %v1366
      %v1449 = vpop.f32.mrf.mxu0
      %v1450 = vadd.f32 0.0, %v1449
      %v1451 = vpop.f32.mrf.mxu0
      %v1452 = vpop.f32.mrf.mxu0
      %v1453 = vadd.f32 0.0, %v1452
      %v1454 = vpop.f32.mrf.mxu0
      %1455 = vdwg.mxu0
      %1456 = vrot.lane.b32.xlu0 %v525, 104
      %v1457 = vpop.permute.xlu0 %1456
      %1458 = vrot.lane.b32.xlu0 %v526, 104
      %v1459 = vpop.permute.xlu0 %1458
      %1460 = vrot.lane.b32.xlu0 %v527, 104
      %v1461 = vpop.permute.xlu0 %1460
      %1462 = vrot.lane.b32.xlu0 %v528, 104
      %v1463 = vpop.permute.xlu0 %1462
      %1464 = vrot.lane.b32.xlu0 %v561, 72
      %v1465 = vpop.permute.xlu0 %1464
      %1466 = vrot.lane.b32.xlu0 %v562, 72
      %v1467 = vpop.permute.xlu0 %1466
      %1468 = vrot.lane.b32.xlu0 %v563, 72
      %v1469 = vpop.permute.xlu0 %1468
      %1470 = vrot.lane.b32.xlu0 %v564, 72
      %v1471 = vpop.permute.xlu0 %1470
      %1472 = vrot.lane.b32.xlu0 %v565, 72
      %v1473 = vpop.permute.xlu0 %1472
      %1474 = vrot.lane.b32.xlu0 %v566, 72
      %v1475 = vpop.permute.xlu0 %1474
      %1476 = vrot.lane.b32.xlu0 %v567, 72
      %v1477 = vpop.permute.xlu0 %1476
      %1478 = vrot.lane.b32.xlu0 %v568, 72
      %v1479 = vpop.permute.xlu0 %1478
      %v1481 = vsel %vm585, %v1457, 0
      %v1484 = vsel %vm585, %v1459, 0
      %v1487 = vsel %vm585, %v1461, 0
      %v1490 = vsel %vm585, %v1463, 0
      %v1493 = vsel %vm585, %v1465, 0
      %v1496 = vsel %vm585, %v1467, 0
      %v1499 = vsel %vm585, %v1469, 0
      %v1502 = vsel %vm585, %v1471, 0
      %v1505 = vsel %vm585, %v1473, 0
      %v1508 = vsel %vm585, %v1475, 0
      %v1511 = vsel %vm585, %v1477, 0
      %v1514 = vsel %vm585, %v1479, 0
      %1516 = vmatprep.subr.bf16.mxu0 0
      %1517 = vmatpush1.bf16.xpose.msra.mxu0 %v1514
      %1518 = vmatprep.subr.bf16.mxu0 0
      %1519 = vmatpush1.bf16.xpose.msra.mxu0 %v1511
      %1520 = vmatprep.subr.bf16.mxu0 0
      %1521 = vmatpush1.bf16.xpose.msra.mxu0 %v1508
      %1522 = vmatprep.subr.bf16.mxu0 0
      %1523 = vmatpush1.bf16.xpose.msra.mxu0 %v1505
      %1524 = vmatprep.subr.bf16.mxu0 0
      %1525 = vmatpush1.bf16.xpose.msra.mxu0 %v1502
      %1526 = vmatprep.subr.bf16.mxu0 0
      %1527 = vmatpush1.bf16.xpose.msra.mxu0 %v1499
      %1528 = vmatprep.subr.bf16.mxu0 0
      %1529 = vmatpush1.bf16.xpose.msra.mxu0 %v1496
      %1530 = vmatprep.subr.bf16.mxu0 0
      %1531 = vmatpush1.bf16.xpose.msra.mxu0 %v1493
      %1532 = vmatprep.subr.bf16.mxu0 0
      %1533 = vmatpush2.bf16.xpose.msra.mxu0 0
      %1534 = vmatprep.subr.bf16.mxu0 0
      %1535 = vmatpush2.bf16.xpose.msra.mxu0 0
      %1536 = vmatprep.subr.bf16.mxu0 0
      %1537 = vmatpush2.bf16.xpose.msra.mxu0 0
      %1538 = vmatprep.subr.bf16.mxu0 0
      %1539 = vmatpush2.bf16.xpose.msra.mxu0 0
      %1540 = vmatprep.subr.bf16.mxu0 0
      %1541 = vmatpush2.bf16.xpose.msra.mxu0 0
      %1542 = vmatprep.subr.bf16.mxu0 0
      %1543 = vmatpush2.bf16.xpose.msra.mxu0 0
      %1544 = vmatprep.subr.bf16.mxu0 0
      %1545 = vmatpush2.bf16.xpose.msra.mxu0 0
      %1546 = vmatprep.subr.bf16.mxu0 0
      %1547 = vmatpush2.bf16.xpose.msra.mxu0 0
      %1548 = vmatprep.mubr.bf16.mxu0 0
      %1549 = vmatmul.mubr.bf16.gmra.mxu0 %v1481
      %v1550 = vpop.f32.mrf.mxu0
      %v1551 = vadd.f32 0.0, %v1550
      %v1552 = vpop.f32.mrf.mxu0
      %v1553 = vpop.f32.mrf.mxu0
      %v1554 = vadd.f32 0.0, %v1553
      %v1555 = vpop.f32.mrf.mxu0
      %1556 = vmatprep.mubr.bf16.mxu0 0
      %1557 = vmatmul.mubr.bf16.gmra.mxu0 %v1484
      %v1558 = vpop.f32.mrf.mxu0
      %v1559 = vadd.f32 0.0, %v1558
      %v1560 = vpop.f32.mrf.mxu0
      %v1561 = vpop.f32.mrf.mxu0
      %v1562 = vadd.f32 0.0, %v1561
      %v1563 = vpop.f32.mrf.mxu0
      %1564 = vmatprep.mubr.bf16.mxu0 0
      %1565 = vmatmul.mubr.bf16.gmra.mxu0 %v1487
      %v1566 = vpop.f32.mrf.mxu0
      %v1567 = vadd.f32 0.0, %v1566
      %v1568 = vpop.f32.mrf.mxu0
      %v1569 = vpop.f32.mrf.mxu0
      %v1570 = vadd.f32 0.0, %v1569
      %v1571 = vpop.f32.mrf.mxu0
      %1572 = vmatprep.mubr.bf16.mxu0 0
      %1573 = vmatmul.mubr.bf16.gmra.mxu0 %v1490
      %v1574 = vpop.f32.mrf.mxu0
      %v1575 = vadd.f32 0.0, %v1574
      %v1576 = vpop.f32.mrf.mxu0
      %v1577 = vpop.f32.mrf.mxu0
      %v1578 = vadd.f32 0.0, %v1577
      %v1579 = vpop.f32.mrf.mxu0
      %1580 = vdwg.mxu0
      %v1581 = vsel %vm472, %v1551, -1e+30
      %v1582 = vsel %vm473, %v1554, -1e+30
      %v1583 = vsel %vm474, %v1559, -1e+30
      %v1584 = vsel %vm475, %v1562, -1e+30
      %v1585 = vsel %vm476, %v1567, -1e+30
      %v1586 = vsel %vm477, %v1570, -1e+30
      %v1587 = vsel %vm478, %v1575, -1e+30
      %v1588 = vsel %vm479, %v1578, -1e+30
      %1589 = vmax.xlane.f32.xlu0 %v1581
      %v1590 = vpop.xlane.xlu0 %1589
      %1591 = vmax.xlane.f32.xlu0 %v1582
      %v1592 = vpop.xlane.xlu0 %1591
      %1593 = vmax.xlane.f32.xlu0 %v1583
      %v1594 = vpop.xlane.xlu0 %1593
      %1595 = vmax.xlane.f32.xlu0 %v1584
      %v1596 = vpop.xlane.xlu0 %1595
      %1597 = vmax.xlane.f32.xlu0 %v1585
      %v1598 = vpop.xlane.xlu0 %1597
      %1599 = vmax.xlane.f32.xlu0 %v1586
      %v1600 = vpop.xlane.xlu0 %1599
      %1601 = vmax.xlane.f32.xlu0 %v1587
      %v1602 = vpop.xlane.xlu0 %1601
      %1603 = vmax.xlane.f32.xlu0 %v1588
      %v1604 = vpop.xlane.xlu0 %1603
      %v1605 = vsub.f32 %v1581, %v1590
      %v1606 = vsub.f32 %v1582, %v1592
      %v1607 = vsub.f32 %v1583, %v1594
      %v1608 = vsub.f32 %v1584, %v1596
      %v1609 = vsub.f32 %v1585, %v1598
      %v1610 = vsub.f32 %v1586, %v1600
      %v1611 = vsub.f32 %v1587, %v1602
      %v1612 = vsub.f32 %v1588, %v1604
      %v1613 = vmul.f32 %v1605, 1.442695
      %v1614 = vpow.pop %v1613
      %v1615 = vmul.f32 %v1606, 1.442695
      %v1616 = vpow.pop %v1615
      %v1617 = vmul.f32 %v1607, 1.442695
      %v1618 = vpow.pop %v1617
      %v1619 = vmul.f32 %v1608, 1.442695
      %v1620 = vpow.pop %v1619
      %v1621 = vmul.f32 %v1609, 1.442695
      %v1622 = vpow.pop %v1621
      %v1623 = vmul.f32 %v1610, 1.442695
      %v1624 = vpow.pop %v1623
      %v1625 = vmul.f32 %v1611, 1.442695
      %v1626 = vpow.pop %v1625
      %v1627 = vmul.f32 %v1612, 1.442695
      %v1628 = vpow.pop %v1627
      %1629 = vadd.xlane.f32.xlu0 %v1614
      %v1630 = vpop.xlane.xlu0 %1629
      %1631 = vadd.xlane.f32.xlu0 %v1616
      %v1632 = vpop.xlane.xlu0 %1631
      %1633 = vadd.xlane.f32.xlu0 %v1618
      %v1634 = vpop.xlane.xlu0 %1633
      %1635 = vadd.xlane.f32.xlu0 %v1620
      %v1636 = vpop.xlane.xlu0 %1635
      %1637 = vadd.xlane.f32.xlu0 %v1622
      %v1638 = vpop.xlane.xlu0 %1637
      %1639 = vadd.xlane.f32.xlu0 %v1624
      %v1640 = vpop.xlane.xlu0 %1639
      %1641 = vadd.xlane.f32.xlu0 %v1626
      %v1642 = vpop.xlane.xlu0 %1641
      %1643 = vadd.xlane.f32.xlu0 %v1628
      %v1644 = vpop.xlane.xlu0 %1643
      %v1645 = vrcp.pop %v1630
      %v1646 = vrcp.pop %v1632
      %v1647 = vrcp.pop %v1634
      %v1648 = vrcp.pop %v1636
      %v1649 = vrcp.pop %v1638
      %v1650 = vrcp.pop %v1640
      %v1651 = vrcp.pop %v1642
      %v1652 = vrcp.pop %v1644
      %v1653 = vmul.f32 %v1614, %v1645
      %v1654 = vmul.f32 %v1616, %v1646
      %v1655 = vmul.f32 %v1618, %v1647
      %v1656 = vmul.f32 %v1620, %v1648
      %v1657 = vmul.f32 %v1622, %v1649
      %v1658 = vmul.f32 %v1624, %v1650
      %v1659 = vmul.f32 %v1626, %v1651
      %v1660 = vmul.f32 %v1628, %v1652
      %v1661 = vpack.c.bf16 %v1654, %v1653
      %v1662 = vpack.c.bf16 %v1656, %v1655
      %v1663 = vpack.c.bf16 %v1658, %v1657
      %v1664 = vpack.c.bf16 %v1660, %v1659
      %1665 = vrot.lane.b32.xlu0 %v561, 40
      %v1666 = vpop.permute.xlu0 %1665
      %1667 = vrot.lane.b32.xlu0 %v562, 40
      %v1668 = vpop.permute.xlu0 %1667
      %1669 = vrot.lane.b32.xlu0 %v563, 40
      %v1670 = vpop.permute.xlu0 %1669
      %1671 = vrot.lane.b32.xlu0 %v564, 40
      %v1672 = vpop.permute.xlu0 %1671
      %1673 = vrot.lane.b32.xlu0 %v565, 40
      %v1674 = vpop.permute.xlu0 %1673
      %1675 = vrot.lane.b32.xlu0 %v566, 40
      %v1676 = vpop.permute.xlu0 %1675
      %1677 = vrot.lane.b32.xlu0 %v567, 40
      %v1678 = vpop.permute.xlu0 %1677
      %1679 = vrot.lane.b32.xlu0 %v568, 40
      %v1680 = vpop.permute.xlu0 %1679
      %1689 = vmatprep.subr.bf16.mxu0 0
      %1690 = vmatpush1.bf16.msra.mxu0 %v1680
      %1691 = vmatprep.subr.bf16.mxu0 0
      %1692 = vmatpush1.bf16.msra.mxu0 %v1678
      %1693 = vmatprep.subr.bf16.mxu0 0
      %1694 = vmatpush1.bf16.msra.mxu0 %v1676
      %1695 = vmatprep.subr.bf16.mxu0 0
      %1696 = vmatpush1.bf16.msra.mxu0 %v1674
      %1697 = vmatprep.subr.bf16.mxu0 0
      %1698 = vmatpush1.bf16.msra.mxu0 %v1672
      %1699 = vmatprep.subr.bf16.mxu0 0
      %1700 = vmatpush1.bf16.msra.mxu0 %v1670
      %1701 = vmatprep.subr.bf16.mxu0 0
      %1702 = vmatpush1.bf16.msra.mxu0 %v1668
      %1703 = vmatprep.subr.bf16.mxu0 0
      %1704 = vmatpush1.bf16.msra.mxu0 %v1666
      %1705 = vmatprep.subr.bf16.mxu0 0
      %1706 = vmatpush2.bf16.msra.mxu0 0
      %1707 = vmatprep.subr.bf16.mxu0 0
      %1708 = vmatpush2.bf16.msra.mxu0 0
      %1709 = vmatprep.subr.bf16.mxu0 0
      %1710 = vmatpush2.bf16.msra.mxu0 0
      %1711 = vmatprep.subr.bf16.mxu0 0
      %1712 = vmatpush2.bf16.msra.mxu0 0
      %1713 = vmatprep.subr.bf16.mxu0 0
      %1714 = vmatpush2.bf16.msra.mxu0 0
      %1715 = vmatprep.subr.bf16.mxu0 0
      %1716 = vmatpush2.bf16.msra.mxu0 0
      %1717 = vmatprep.subr.bf16.mxu0 0
      %1718 = vmatpush2.bf16.msra.mxu0 0
      %1719 = vmatprep.subr.bf16.mxu0 0
      %1720 = vmatpush2.bf16.msra.mxu0 0
      %1721 = vmatprep.mubr.bf16.mxu0 0
      %1722 = vmatmul.mubr.bf16.gmra.mxu0 %v1661
      %v1723 = vpop.f32.mrf.mxu0
      %v1724 = vadd.f32 0.0, %v1723
      %v1725 = vpop.f32.mrf.mxu0
      %v1726 = vpop.f32.mrf.mxu0
      %v1727 = vadd.f32 0.0, %v1726
      %v1728 = vpop.f32.mrf.mxu0
      %1729 = vmatprep.mubr.bf16.mxu0 0
      %1730 = vmatmul.mubr.bf16.gmra.mxu0 %v1662
      %v1731 = vpop.f32.mrf.mxu0
      %v1732 = vadd.f32 0.0, %v1731
      %v1733 = vpop.f32.mrf.mxu0
      %v1734 = vpop.f32.mrf.mxu0
      %v1735 = vadd.f32 0.0, %v1734
      %v1736 = vpop.f32.mrf.mxu0
      %1737 = vmatprep.mubr.bf16.mxu0 0
      %1738 = vmatmul.mubr.bf16.gmra.mxu0 %v1663
      %v1739 = vpop.f32.mrf.mxu0
      %v1740 = vadd.f32 0.0, %v1739
      %v1741 = vpop.f32.mrf.mxu0
      %v1742 = vpop.f32.mrf.mxu0
      %v1743 = vadd.f32 0.0, %v1742
      %v1744 = vpop.f32.mrf.mxu0
      %1745 = vmatprep.mubr.bf16.mxu0 0
      %1746 = vmatmul.mubr.bf16.gmra.mxu0 %v1664
      %v1747 = vpop.f32.mrf.mxu0
      %v1748 = vadd.f32 0.0, %v1747
      %v1749 = vpop.f32.mrf.mxu0
      %v1750 = vpop.f32.mrf.mxu0
      %v1751 = vadd.f32 0.0, %v1750
      %v1752 = vpop.f32.mrf.mxu0
      %1753 = vdwg.mxu0
      %1762 = vrot.lane.b32.xlu0 %v1128, 8
      %v1763 = vpop.permute.xlu0 %1762
      %1764 = vrot.lane.b32.xlu0 %v1131, 8
      %v1765 = vpop.permute.xlu0 %1764
      %1766 = vrot.lane.b32.xlu0 %v1136, 8
      %v1767 = vpop.permute.xlu0 %1766
      %1768 = vrot.lane.b32.xlu0 %v1139, 8
      %v1769 = vpop.permute.xlu0 %1768
      %1770 = vrot.lane.b32.xlu0 %v1144, 8
      %v1771 = vpop.permute.xlu0 %1770
      %1772 = vrot.lane.b32.xlu0 %v1147, 8
      %v1773 = vpop.permute.xlu0 %1772
      %1774 = vrot.lane.b32.xlu0 %v1152, 8
      %v1775 = vpop.permute.xlu0 %1774
      %1776 = vrot.lane.b32.xlu0 %v1155, 8
      %v1777 = vpop.permute.xlu0 %1776
      %1794 = vrot.lane.b32.xlu0 %v1426, 16
      %v1795 = vpop.permute.xlu0 %1794
      %1796 = vrot.lane.b32.xlu0 %v1429, 16
      %v1797 = vpop.permute.xlu0 %1796
      %1798 = vrot.lane.b32.xlu0 %v1434, 16
      %v1799 = vpop.permute.xlu0 %1798
      %1800 = vrot.lane.b32.xlu0 %v1437, 16
      %v1801 = vpop.permute.xlu0 %1800
      %1802 = vrot.lane.b32.xlu0 %v1442, 16
      %v1803 = vpop.permute.xlu0 %1802
      %1804 = vrot.lane.b32.xlu0 %v1445, 16
      %v1805 = vpop.permute.xlu0 %1804
      %1806 = vrot.lane.b32.xlu0 %v1450, 16
      %v1807 = vpop.permute.xlu0 %1806
      %1808 = vrot.lane.b32.xlu0 %v1453, 16
      %v1809 = vpop.permute.xlu0 %1808
      %1826 = vrot.lane.b32.xlu0 %v1724, 24
      %v1827 = vpop.permute.xlu0 %1826
      %1828 = vrot.lane.b32.xlu0 %v1727, 24
      %v1829 = vpop.permute.xlu0 %1828
      %1830 = vrot.lane.b32.xlu0 %v1732, 24
      %v1831 = vpop.permute.xlu0 %1830
      %1832 = vrot.lane.b32.xlu0 %v1735, 24
      %v1833 = vpop.permute.xlu0 %1832
      %1834 = vrot.lane.b32.xlu0 %v1740, 24
      %v1835 = vpop.permute.xlu0 %1834
      %1836 = vrot.lane.b32.xlu0 %v1743, 24
      %v1837 = vpop.permute.xlu0 %1836
      %1838 = vrot.lane.b32.xlu0 %v1748, 24
      %v1839 = vpop.permute.xlu0 %1838
      %1840 = vrot.lane.b32.xlu0 %v1751, 24
      %v1841 = vpop.permute.xlu0 %1840
      %v1850 = vsel %vm585, %v830, %v1763
      %v1851 = vsel %vm585, %v833, %v1765
      %v1852 = vsel %vm585, %v838, %v1767
      %v1853 = vsel %vm585, %v841, %v1769
      %v1854 = vsel %vm585, %v846, %v1771
      %v1855 = vsel %vm585, %v849, %v1773
      %v1856 = vsel %vm585, %v854, %v1775
      %v1857 = vsel %vm585, %v857, %v1777
      %vm1858 = vcmask 130048
      %v1859 = vsel %vm1858, %v1850, %v1795
      %v1860 = vsel %vm1858, %v1851, %v1797
      %v1861 = vsel %vm1858, %v1852, %v1799
      %v1862 = vsel %vm1858, %v1853, %v1801
      %v1863 = vsel %vm1858, %v1854, %v1803
      %v1864 = vsel %vm1858, %v1855, %v1805
      %v1865 = vsel %vm1858, %v1856, %v1807
      %v1866 = vsel %vm1858, %v1857, %v1809
      %vm1867 = vcmask 195584
      %v1868 = vsel %vm1867, %v1859, %v1827
      %v1869 = vsel %vm1867, %v1860, %v1829
      %v1870 = vsel %vm1867, %v1861, %v1831
      %v1871 = vsel %vm1867, %v1862, %v1833
      %v1872 = vsel %vm1867, %v1863, %v1835
      %v1873 = vsel %vm1867, %v1864, %v1837
      %v1874 = vsel %vm1867, %v1865, %v1839
      %v1875 = vsel %vm1867, %v1866, %v1841
      %v1876 = vpack.c.bf16 %v1869, %v1868
      %v1877 = vpack.c.bf16 %v1871, %v1870
      %v1878 = vpack.c.bf16 %v1873, %v1872
      %v1879 = vpack.c.bf16 %v1875, %v1874
      %v1884 = vunpack.c.l.b16 %v1876
      %v1885 = vunpack.c.h.b16 %v1876
      %v1886 = vunpack.c.l.b16 %v1877
      %v1887 = vunpack.c.h.b16 %v1877
      %v1888 = vunpack.c.l.b16 %v1878
      %v1889 = vunpack.c.h.b16 %v1878
      %v1890 = vunpack.c.l.b16 %v1879
      %v1891 = vunpack.c.h.b16 %v1879
      %v1892 = vpack.c.b16 %v1884, %v1884
      %v1893 = vpack.c.b16 %v1885, %v1885
      %v1894 = vpack.c.b16 %v1886, %v1886
      %v1895 = vpack.c.b16 %v1887, %v1887
      %v1896 = vpack.c.b16 %v1888, %v1888
      %v1897 = vpack.c.b16 %v1889, %v1889
      %v1898 = vpack.c.b16 %v1890, %v1890
      %v1899 = vpack.c.b16 %v1891, %v1891
      %vm1908 = vcmask 257024
      %1909 = vst.msk [vmem:[%s214] sm:$0xf] %vm1908, %v1892
      %1910 = vst.msk [vmem:[%s214 + $0x4] sm:$0xf] %vm1908, %v1893
      %1911 = vst.msk [vmem:[%s214 + $0x8] sm:$0xf] %vm1908, %v1894
      %1912 = vst.msk [vmem:[%s214 + $0xc] sm:$0xf] %vm1908, %v1895
      %1913 = vst.msk [vmem:[%s214 + $0x10] sm:$0xf] %vm1908, %v1896
      %1914 = vst.msk [vmem:[%s214 + $0x14] sm:$0xf] %vm1908, %v1897
      %1915 = vst.msk [vmem:[%s214 + $0x18] sm:$0xf] %vm1908, %v1898
      %1916 = vst.msk [vmem:[%s214 + $0x1c] sm:$0xf] %vm1908, %v1899
      %s1917 = smul.u32 8, %s19
      %p1918 = scmp.lt.s32.totalorder %s18, 1
      %s1919 = scalar_select %p1918, %s18, 1
      %p1920 = scmp.lt.s32.totalorder %s1917, 15
      %s1921 = scalar_select %p1920, %s1917, 15
      %s1922 = smul.addr %s1919, 16
      %s1923 = sadd.s32 %s1921, %s1922
      %s1924 = smul.addr %s1923, 4
      %s1925 = scalar_lea.vmem %s3, %s1924
      // Predicated region
      $region33: #{natten3d_transformer_block.6} parent=31 // pred_check
        %p1926 = pneg %p119
      $region34: #{natten3d_transformer_block.6} parent=31 // pred_check_branch
        %1928 = sbr.rel (%p1926) target = $region36
      $region35: #{natten3d_transformer_block.6} parent=31 // pred_region
        %s1929 = smul.u32 8, %s19
      $region36: #{natten3d_transformer_block.6} parent=31 // pred_fallthru
        _
    $region32: #{natten3d_transformer_block.6} parent=5 // pred_fallthru
      _
    %p1930 = scmp.le.s32.totalorder 2, %s9
    // Predicated region
    $region37: #{natten3d_transformer_block.6} parent=5 // pred_check
      %p1931 = pneg %p1930
    $region38: #{natten3d_transformer_block.6} parent=5 // pred_check_branch
      %1933 = sbr.rel (%p1931) target = $region40
    $region39: #{natten3d_transformer_block.6} parent=5 // pred_region
      %s1934 = ssub.s32 %s9, 2
      // Predicated region
      $region41: #{natten3d_transformer_block.6} parent=39 // pred_check
        %p1935 = pneg %p125
      $region42: #{natten3d_transformer_block.6} parent=39 // pred_check_branch
        %1937 = sbr.rel (%p1935) target = $region44
      $region43: #{natten3d_transformer_block.6} parent=39 // pred_region
        %s1938 = smul.u32 8, %s21
        %p1939 = scmp.lt.s32.totalorder %s20, 1
        %s1940 = scalar_select %p1939, %s20, 1
        %p1941 = scmp.lt.s32.totalorder %s1938, 15
        %s1942 = scalar_select %p1941, %s1938, 15
        %s1943 = smul.addr %s1940, 16
        %s1944 = sadd.s32 %s1942, %s1943
        %s1945 = smul.addr %s1944, 4
        %s1946 = scalar_lea.vmem %s3, %s1945
      $region44: #{natten3d_transformer_block.6} parent=39 // pred_fallthru
        _
    $region40: #{natten3d_transformer_block.6} parent=5 // pred_fallthru
      _
  $region6: #{natten3d_transformer_block.6} parent=0 // loop_footer
    %s13 = sadd.s32 1, %s9
  $region7: #{natten3d_transformer_block.6} parent=0 // loop_footer_branch
    %8 = sbr.rel target = $region3
  $region8: #{natten3d_transformer_block.6} parent=0 // loop_exit
    _

// kernel: natten3d_transformer_block.9
$region0: #{natten3d_transformer_block.9}
  #allocation0 [shape = 'u32[]', space=smem, size = 0x4, offset = 0x4, fixed_abs, tag = 'smem constant byte address 0x4 - core index']
  #allocation1 [shape = 'u32[144,128]{1,0:T(1,128)}', space=vmem, size = 0x12000, scoped, tag = 'internal scratch']
  %s0 = inlined_call_operand.vmem [shape: bf16[256,128], index: 0, kind: input, shape index: {}]
  %s1 = inlined_call_operand.vmem [shape: f32[256,32], index: 1, kind: input, shape index: {}]
  %s2 = inlined_call_operand.vmem [shape: bf16[128,32], index: 2, kind: input, shape index: {}]
  %s3 = inlined_call_operand.vmem [shape: f32[1,32], index: 3, kind: input, shape index: {}]
  %s4 = inlined_call_operand.vmem [shape: f32[256,32], index: 4, kind: output, shape index: {}]
  %s5 = sld [smem:[#allocation0]]
  $region49: #{natten3d_transformer_block.9} parent=0
    _
  %s7 = ssub.s32 1, %s5
  %s8 = scalar_select 0, %s7, %s5
  loop: start=0, step=1, limit=4
  $region2: #{natten3d_transformer_block.9} parent=0 // loop_pre_header
    _
  $region3: #{natten3d_transformer_block.9} parent=0 // loop_header
    %s10 = sphi 0, %s14
    %p11 = scmp.ge.s32.totalorder %s10, 4
    %s20 = sphi 0, %s22
    %s23 = sphi 0, %s20
    %s24 = sphi 0, %s23
    %s40 = sphi 0, %s24
    %s46 = sphi 0, %s48
    %s49 = sphi 0, %s46
    %s50 = sphi 0, %s49
    %s66 = sphi 0, %s50
    %s70 = sphi 0, %s70
    %s72 = sphi 0, %s70
    %s73 = sphi 0, %s72
    %s87 = sphi 0, %s73
    %s91 = sphi 0, %s91
    %s93 = sphi 0, %s91
    %s94 = sphi 0, %s93
    %s108 = sphi 0, %s94
    %s114 = sphi 0, %s116
    %s117 = sphi 0, %s114
    %s118 = sphi 0, %s117
    %s134 = sphi 0, %s118
  $region4: #{natten3d_transformer_block.9} parent=0 // loop_header_branch
    %13 = sbr.rel (%p11) target = $region8
  $region5: #{natten3d_transformer_block.9} parent=0 // loop_body
    %s15 = ssub.s32 %s10, 1
    %s16 = ssub.s32 %s10, 2
    %s17 = sadd.s32 %s10, 1
    %s18 = ssub.s32 %s10, %s17
    %p19 = scmp.eq.s32.totalorder %s18, 0
    %s21 = sadd.s32 %s20, 1
    %s22 = scalar_select %p19, %s20, %s21
    %p25 = pneg %p19
    %p26 = scmp.eq.s32.totalorder %s10, 1
    %p27 = por %p25, %p26
    %p28 = scmp.ne.s32.totalorder %s20, %s23
    %p29 = scmp.eq.s32.totalorder %s10, 0
    %p30 = por %p28, %p29
    %p31 = scmp.ne.s32.totalorder %s20, %s23
    %p32 = scmp.eq.s32.totalorder %s15, 1
    %p33 = por %p31, %p32
    %p34 = scmp.ne.s32.totalorder %s23, %s24
    %p35 = scmp.eq.s32.totalorder %s15, 0
    %p36 = por %p34, %p35
    %p37 = scmp.ne.s32.totalorder %s23, %s24
    %p38 = scmp.eq.s32.totalorder %s16, 1
    %p39 = por %p37, %p38
    %p41 = scmp.ne.s32.totalorder %s24, %s40
    %p42 = scmp.eq.s32.totalorder %s16, 0
    %p43 = por %p41, %p42
    %s44 = ssub.s32 %s10, %s17
    %p45 = scmp.eq.s32.totalorder %s44, 0
    %s47 = sadd.s32 %s46, 1
    %s48 = scalar_select %p45, %s46, %s47
    %p51 = pneg %p45
    %p52 = scmp.eq.s32.totalorder %s10, 1
    %p53 = por %p51, %p52
    %p54 = scmp.ne.s32.totalorder %s46, %s49
    %p55 = scmp.eq.s32.totalorder %s10, 0
    %p56 = por %p54, %p55
    %p57 = scmp.ne.s32.totalorder %s46, %s49
    %p58 = scmp.eq.s32.totalorder %s15, 1
    %p59 = por %p57, %p58
    %p60 = scmp.ne.s32.totalorder %s49, %s50
    %p61 = scmp.eq.s32.totalorder %s15, 0
    %p62 = por %p60, %p61
    %p63 = scmp.ne.s32.totalorder %s49, %s50
    %p64 = scmp.eq.s32.totalorder %s16, 1
    %p65 = por %p63, %p64
    %p67 = scmp.ne.s32.totalorder %s50, %s66
    %p68 = scmp.eq.s32.totalorder %s16, 0
    %p69 = por %p67, %p68
    %s71 = sadd.s32 %s70, 1
    %p74 = scmp.eq.s32.totalorder %s10, 1
    %p75 = scmp.ne.s32.totalorder %s70, %s72
    %p76 = scmp.eq.s32.totalorder %s10, 0
    %p77 = por %p75, %p76
    %p78 = scmp.ne.s32.totalorder %s70, %s72
    %p79 = scmp.eq.s32.totalorder %s15, 1
    %p80 = por %p78, %p79
    %p81 = scmp.ne.s32.totalorder %s72, %s73
    %p82 = scmp.eq.s32.totalorder %s15, 0
    %p83 = por %p81, %p82
    %p84 = scmp.ne.s32.totalorder %s72, %s73
    %p85 = scmp.eq.s32.totalorder %s16, 1
    %p86 = por %p84, %p85
    %p88 = scmp.ne.s32.totalorder %s73, %s87
    %p89 = scmp.eq.s32.totalorder %s16, 0
    %p90 = por %p88, %p89
    %s92 = sadd.s32 %s91, 1
    %p95 = scmp.eq.s32.totalorder %s10, 1
    %p96 = scmp.ne.s32.totalorder %s91, %s93
    %p97 = scmp.eq.s32.totalorder %s10, 0
    %p98 = por %p96, %p97
    %p99 = scmp.ne.s32.totalorder %s91, %s93
    %p100 = scmp.eq.s32.totalorder %s15, 1
    %p101 = por %p99, %p100
    %p102 = scmp.ne.s32.totalorder %s93, %s94
    %p103 = scmp.eq.s32.totalorder %s15, 0
    %p104 = por %p102, %p103
    %p105 = scmp.ne.s32.totalorder %s93, %s94
    %p106 = scmp.eq.s32.totalorder %s16, 1
    %p107 = por %p105, %p106
    %p109 = scmp.ne.s32.totalorder %s94, %s108
    %p110 = scmp.eq.s32.totalorder %s16, 0
    %p111 = por %p109, %p110
    %s112 = ssub.s32 %s10, %s17
    %p113 = scmp.eq.s32.totalorder %s112, 0
    %s115 = sadd.s32 %s114, 1
    %s116 = scalar_select %p113, %s114, %s115
    %p119 = pneg %p113
    %p120 = scmp.eq.s32.totalorder %s10, 1
    %p121 = por %p119, %p120
    %p122 = scmp.ne.s32.totalorder %s114, %s117
    %p123 = scmp.eq.s32.totalorder %s10, 0
    %p124 = por %p122, %p123
    %p125 = scmp.ne.s32.totalorder %s114, %s117
    %p126 = scmp.eq.s32.totalorder %s15, 1
    %p127 = por %p125, %p126
    %p128 = scmp.ne.s32.totalorder %s117, %s118
    %p129 = scmp.eq.s32.totalorder %s15, 0
    %p130 = por %p128, %p129
    %p131 = scmp.ne.s32.totalorder %s117, %s118
    %p132 = scmp.eq.s32.totalorder %s16, 1
    %p133 = por %p131, %p132
    %p135 = scmp.ne.s32.totalorder %s118, %s134
    %p136 = scmp.eq.s32.totalorder %s16, 0
    %p137 = por %p135, %p136
    %p138 = scmp.le.s32.totalorder 1, %s10
    %p139 = scmp.lt.s32.totalorder %s10, 3
    %p140 = pnand %p138, %p139
    %p141 = pneg %p140
    // Predicated region
    $region9: #{natten3d_transformer_block.9} parent=5 // pred_check
      _
    $region10: #{natten3d_transformer_block.9} parent=5 // pred_check_branch
      %143 = sbr.rel (%p140) target = $region12
    $region11: #{natten3d_transformer_block.9} parent=5 // pred_region
      %s144 = ssub.s32 %s10, 1
      // Predicated region
      $region13: #{natten3d_transformer_block.9} parent=11 // pred_check
        %p145 = pneg %p83
      $region14: #{natten3d_transformer_block.9} parent=11 // pred_check_branch
        %147 = sbr.rel (%p145) target = $region16
      $region15: #{natten3d_transformer_block.9} parent=11 // pred_region
        _
      $region16: #{natten3d_transformer_block.9} parent=11 // pred_fallthru
        _
      // Predicated region
      $region17: #{natten3d_transformer_block.9} parent=11 // pred_check
        %p148 = pneg %p104
      $region18: #{natten3d_transformer_block.9} parent=11 // pred_check_branch
        %150 = sbr.rel (%p148) target = $region20
      $region19: #{natten3d_transformer_block.9} parent=11 // pred_region
        _
      $region20: #{natten3d_transformer_block.9} parent=11 // pred_fallthru
        _
    $region12: #{natten3d_transformer_block.9} parent=5 // pred_fallthru
      _
    %p151 = scmp.lt.s32.totalorder %s10, 2
    // Predicated region
    $region21: #{natten3d_transformer_block.9} parent=5 // pred_check
      %p152 = pneg %p151
    $region22: #{natten3d_transformer_block.9} parent=5 // pred_check_branch
      %154 = sbr.rel (%p152) target = $region24
    $region23: #{natten3d_transformer_block.9} parent=5 // pred_region
      // Predicated region
      $region25: #{natten3d_transformer_block.9} parent=23 // pred_check
        %p155 = pneg %p30
      $region26: #{natten3d_transformer_block.9} parent=23 // pred_check_branch
        %157 = sbr.rel (%p155) target = $region28
      $region27: #{natten3d_transformer_block.9} parent=23 // pred_region
        %s158 = smul.u32 16, %s10
        %p159 = scmp.lt.s32.totalorder %s158, 31
        %s160 = scalar_select %p159, %s158, 31
        %s161 = smul.addr %s160, 4
        %s162 = scalar_lea.vmem %s0, %s161
        %s163 = smul.u32 16, %s10
      $region28: #{natten3d_transformer_block.9} parent=23 // pred_fallthru
        _
      // Predicated region
      $region29: #{natten3d_transformer_block.9} parent=23 // pred_check
        %p164 = pneg %p56
      $region30: #{natten3d_transformer_block.9} parent=23 // pred_check_branch
        %166 = sbr.rel (%p164) target = $region32
      $region31: #{natten3d_transformer_block.9} parent=23 // pred_region
        %s167 = smul.u32 16, %s10
        %p168 = scmp.lt.s32.totalorder %s167, 31
        %s169 = scalar_select %p168, %s167, 31
        %s170 = smul.addr %s169, 8
        %s171 = scalar_lea.vmem %s1, %s170
        %s172 = smul.u32 16, %s10
      $region32: #{natten3d_transformer_block.9} parent=23 // pred_fallthru
        _
    $region24: #{natten3d_transformer_block.9} parent=5 // pred_fallthru
      _
    %p173 = scmp.le.s32.totalorder 1, %s10
    %p174 = scmp.lt.s32.totalorder %s10, 3
    %p175 = pnand %p173, %p174
    %p176 = pneg %p175
    // Predicated region
    $region33: #{natten3d_transformer_block.9} parent=5 // pred_check
      _
    $region34: #{natten3d_transformer_block.9} parent=5 // pred_check_branch
      %178 = sbr.rel (%p175) target = $region36
    $region35: #{natten3d_transformer_block.9} parent=5 // pred_region
      %s179 = ssub.s32 %s10, 1
      %s180 = smul.u32 16, %s15
      %p181 = scmp.lt.s32.totalorder %s180, 31
      %s182 = scalar_select %p181, %s180, 31
      %s183 = smul.addr %s182, 4
      %s184 = scalar_lea.vmem %s0, %s183
      %p185 = pneg %p36
      %p186 = pneg %p33
      %s187 = smul.u32 16, %s15
      %p188 = scmp.lt.s32.totalorder %s187, 31
      %s189 = scalar_select %p188, %s187, 31
      %s190 = smul.addr %s189, 8
      %s191 = scalar_lea.vmem %s1, %s190
      %p192 = pneg %p62
      %p193 = pneg %p59
      %p194 = pneg %p83
      %p195 = pneg %p80
      %p196 = pneg %p104
      %p197 = pneg %p101
      %p198 = pneg %p130
      %p199 = pneg %p127
      %s200 = smul.u32 16, %s15
      %p201 = scmp.lt.s32.totalorder %s200, 31
      %s202 = scalar_select %p201, %s200, 31
      %s203 = smul.addr %s202, 8
      %s204 = scalar_lea.vmem %s4, %s203
      %s205 = smul.u32 16, %s15
      %p206 = scmp.lt.s32.totalorder %s205, 31
      %s207 = scalar_select %p206, %s205, 31
      %s208 = smul.addr %s207, 4
      %s209 = scalar_lea.vmem %s0, %s208
      %s210 = smul.u32 16, %s15
      %s211 = smul.u32 16, %s15
      %p212 = scmp.lt.s32.totalorder %s211, 31
      %s213 = scalar_select %p212, %s211, 31
      %s214 = smul.addr %s213, 8
      %s215 = scalar_lea.vmem %s1, %s214
      %s216 = smul.u32 16, %s15
      %s217 = smul.u32 16, %s15
      %p218 = scmp.lt.s32.totalorder %s217, 31
      %s219 = scalar_select %p218, %s217, 31
      %s220 = smul.addr %s219, 8
      %s221 = scalar_lea.vmem %s4, %s220
      %s222 = smul.u32 16, %s15
      %v224 = vld [vmem:[%s209] sm:$0xf]
      %v225 = vld [vmem:[%s209 + $0x4] sm:$0xf]
      %v226 = vld [vmem:[%s209 + $0x8] sm:$0xf]
      %v227 = vld [vmem:[%s209 + $0xc] sm:$0xf]
      %v228 = vld [vmem:[%s209 + $0x10] sm:$0xf]
      %v229 = vld [vmem:[%s209 + $0x14] sm:$0xf]
      %v230 = vld [vmem:[%s209 + $0x18] sm:$0xf]
      %v231 = vld [vmem:[%s209 + $0x1c] sm:$0xf]
      %v232 = vld [vmem:[%s209 + $0x20] sm:$0xf]
      %v233 = vld [vmem:[%s209 + $0x24] sm:$0xf]
      %v234 = vld [vmem:[%s209 + $0x28] sm:$0xf]
      %v235 = vld [vmem:[%s209 + $0x2c] sm:$0xf]
      %v236 = vld [vmem:[%s209 + $0x30] sm:$0xf]
      %v237 = vld [vmem:[%s209 + $0x34] sm:$0xf]
      %v238 = vld [vmem:[%s209 + $0x38] sm:$0xf]
      %v239 = vld [vmem:[%s209 + $0x3c] sm:$0xf]
      %v240 = vld [vmem:[%s2] sm:$0xf]
      %v241 = vld [vmem:[%s2 + $0x4] sm:$0xf]
      %v242 = vld [vmem:[%s2 + $0x8] sm:$0xf]
      %v243 = vld [vmem:[%s2 + $0xc] sm:$0xf]
      %v244 = vld [vmem:[%s2 + $0x10] sm:$0xf]
      %v245 = vld [vmem:[%s2 + $0x14] sm:$0xf]
      %v246 = vld [vmem:[%s2 + $0x18] sm:$0xf]
      %v247 = vld [vmem:[%s2 + $0x1c] sm:$0xf]
      %v248 = vld [vmem:[%s2 + $0x20] sm:$0xf]
      %v249 = vld [vmem:[%s2 + $0x24] sm:$0xf]
      %v250 = vld [vmem:[%s2 + $0x28] sm:$0xf]
      %v251 = vld [vmem:[%s2 + $0x2c] sm:$0xf]
      %v252 = vld [vmem:[%s2 + $0x30] sm:$0xf]
      %v253 = vld [vmem:[%s2 + $0x34] sm:$0xf]
      %v254 = vld [vmem:[%s2 + $0x38] sm:$0xf]
      %v255 = vld [vmem:[%s2 + $0x3c] sm:$0xf]
      %v256 = vld [vmem:[%s3] sm:$0x1]
      %v258 = vlaneseq
      %v259 = vshrl.u32 %v258, 7
      %v260 = vsub.s32 0, %v259
      %v261 = vrot.slane %v256, %v260
      %v279 = vunpack.c.l.b16 %v224
      %v280 = vunpack.c.l.b16 %v225
      %v281 = vunpack.c.l.b16 %v226
      %v282 = vunpack.c.l.b16 %v227
      %v283 = vunpack.c.l.b16 %v228
      %v284 = vunpack.c.l.b16 %v229
      %v285 = vunpack.c.l.b16 %v230
      %v286 = vunpack.c.l.b16 %v231
      %v287 = vunpack.c.l.b16 %v232
      %v288 = vunpack.c.l.b16 %v233
      %v289 = vunpack.c.l.b16 %v234
      %v290 = vunpack.c.l.b16 %v235
      %v291 = vunpack.c.l.b16 %v236
      %v292 = vunpack.c.l.b16 %v237
      %v293 = vunpack.c.l.b16 %v238
      %v294 = vunpack.c.l.b16 %v239
      %v295 = vpack.c.b16 %v280, %v279
      %v296 = vpack.c.b16 %v282, %v281
      %v297 = vpack.c.b16 %v284, %v283
      %v298 = vpack.c.b16 %v286, %v285
      %v299 = vpack.c.b16 %v288, %v287
      %v300 = vpack.c.b16 %v290, %v289
      %v301 = vpack.c.b16 %v292, %v291
      %v302 = vpack.c.b16 %v294, %v293
      %v327 = vunpack.c.l.b16 %v240
      %v328 = vunpack.c.l.b16 %v241
      %v329 = vunpack.c.l.b16 %v242
      %v330 = vunpack.c.l.b16 %v243
      %v331 = vunpack.c.l.b16 %v244
      %v332 = vunpack.c.l.b16 %v245
      %v333 = vunpack.c.l.b16 %v246
      %v334 = vunpack.c.l.b16 %v247
      %v335 = vunpack.c.l.b16 %v248
      %v336 = vunpack.c.l.b16 %v249
      %v337 = vunpack.c.l.b16 %v250
      %v338 = vunpack.c.l.b16 %v251
      %v339 = vunpack.c.l.b16 %v252
      %v340 = vunpack.c.l.b16 %v253
      %v341 = vunpack.c.l.b16 %v254
      %v342 = vunpack.c.l.b16 %v255
      %v343 = vpack.c.b16 %v328, %v327
      %v344 = vpack.c.b16 %v330, %v329
      %v345 = vpack.c.b16 %v332, %v331
      %v346 = vpack.c.b16 %v334, %v333
      %v347 = vpack.c.b16 %v336, %v335
      %v348 = vpack.c.b16 %v338, %v337
      %v349 = vpack.c.b16 %v340, %v339
      %v350 = vpack.c.b16 %v342, %v341
      %359 = vmatprep.subr.bf16.mxu0 0
      %360 = vmatpush1.bf16.msra.mxu0 %v350
      %361 = vmatprep.subr.bf16.mxu0 0
      %362 = vmatpush1.bf16.msra.mxu0 %v349
      %363 = vmatprep.subr.bf16.mxu0 0
      %364 = vmatpush1.bf16.msra.mxu0 %v348
      %365 = vmatprep.subr.bf16.mxu0 0
      %366 = vmatpush1.bf16.msra.mxu0 %v347
      %367 = vmatprep.subr.bf16.mxu0 0
      %368 = vmatpush1.bf16.msra.mxu0 %v346
      %369 = vmatprep.subr.bf16.mxu0 0
      %370 = vmatpush1.bf16.msra.mxu0 %v345
      %371 = vmatprep.subr.bf16.mxu0 0
      %372 = vmatpush1.bf16.msra.mxu0 %v344
      %373 = vmatprep.subr.bf16.mxu0 0
      %374 = vmatpush1.bf16.msra.mxu0 %v343
      %375 = vmatprep.subr.bf16.mxu0 0
      %376 = vmatpush2.bf16.msra.mxu0 0
      %377 = vmatprep.subr.bf16.mxu0 0
      %378 = vmatpush2.bf16.msra.mxu0 0
      %379 = vmatprep.subr.bf16.mxu0 0
      %380 = vmatpush2.bf16.msra.mxu0 0
      %381 = vmatprep.subr.bf16.mxu0 0
      %382 = vmatpush2.bf16.msra.mxu0 0
      %383 = vmatprep.subr.bf16.mxu0 0
      %384 = vmatpush2.bf16.msra.mxu0 0
      %385 = vmatprep.subr.bf16.mxu0 0
      %386 = vmatpush2.bf16.msra.mxu0 0
      %387 = vmatprep.subr.bf16.mxu0 0
      %388 = vmatpush2.bf16.msra.mxu0 0
      %389 = vmatprep.subr.bf16.mxu0 0
      %390 = vmatpush2.bf16.msra.mxu0 0
      %391 = vmatprep.mubr.bf16.mxu0 0
      %392 = vmatmul.mubr.bf16.gmra.mxu0 %v295
      %v393 = vpop.f32.mrf.mxu0
      %v394 = vadd.f32 %v261, %v393
      %v395 = vpop.f32.mrf.mxu0
      %v396 = vpop.f32.mrf.mxu0
      %v397 = vadd.f32 %v261, %v396
      %v398 = vpop.f32.mrf.mxu0
      %399 = vmatprep.mubr.bf16.mxu0 0
      %400 = vmatmul.mubr.bf16.gmra.mxu0 %v296
      %v401 = vpop.f32.mrf.mxu0
      %v402 = vadd.f32 %v261, %v401
      %v403 = vpop.f32.mrf.mxu0
      %v404 = vpop.f32.mrf.mxu0
      %v405 = vadd.f32 %v261, %v404
      %v406 = vpop.f32.mrf.mxu0
      %407 = vmatprep.mubr.bf16.mxu0 0
      %408 = vmatmul.mubr.bf16.gmra.mxu0 %v297
      %v409 = vpop.f32.mrf.mxu0
      %v410 = vadd.f32 %v261, %v409
      %v411 = vpop.f32.mrf.mxu0
      %v412 = vpop.f32.mrf.mxu0
      %v413 = vadd.f32 %v261, %v412
      %v414 = vpop.f32.mrf.mxu0
      %415 = vmatprep.mubr.bf16.mxu0 0
      %416 = vmatmul.mubr.bf16.gmra.mxu0 %v298
      %v417 = vpop.f32.mrf.mxu0
      %v418 = vadd.f32 %v261, %v417
      %v419 = vpop.f32.mrf.mxu0
      %v420 = vpop.f32.mrf.mxu0
      %v421 = vadd.f32 %v261, %v420
      %v422 = vpop.f32.mrf.mxu0
      %423 = vmatprep.mubr.bf16.mxu0 0
      %424 = vmatmul.mubr.bf16.gmra.mxu0 %v299
      %v425 = vpop.f32.mrf.mxu0
      %v426 = vadd.f32 %v261, %v425
      %v427 = vpop.f32.mrf.mxu0
      %v428 = vpop.f32.mrf.mxu0
      %v429 = vadd.f32 %v261, %v428
      %v430 = vpop.f32.mrf.mxu0
      %431 = vmatprep.mubr.bf16.mxu0 0
      %432 = vmatmul.mubr.bf16.gmra.mxu0 %v300
      %v433 = vpop.f32.mrf.mxu0
      %v434 = vadd.f32 %v261, %v433
      %v435 = vpop.f32.mrf.mxu0
      %v436 = vpop.f32.mrf.mxu0
      %v437 = vadd.f32 %v261, %v436
      %v438 = vpop.f32.mrf.mxu0
      %439 = vmatprep.mubr.bf16.mxu0 0
      %440 = vmatmul.mubr.bf16.gmra.mxu0 %v301
      %v441 = vpop.f32.mrf.mxu0
      %v442 = vadd.f32 %v261, %v441
      %v443 = vpop.f32.mrf.mxu0
      %v444 = vpop.f32.mrf.mxu0
      %v445 = vadd.f32 %v261, %v444
      %v446 = vpop.f32.mrf.mxu0
      %447 = vmatprep.mubr.bf16.mxu0 0
      %448 = vmatmul.mubr.bf16.gmra.mxu0 %v302
      %v449 = vpop.f32.mrf.mxu0
      %v450 = vadd.f32 %v261, %v449
      %v451 = vpop.f32.mrf.mxu0
      %v452 = vpop.f32.mrf.mxu0
      %v453 = vadd.f32 %v261, %v452
      %v454 = vpop.f32.mrf.mxu0
      %455 = vdwg.mxu0
      %v456 = vld [vmem:[%s215] sm:$0xff]
      %v457 = vld [vmem:[%s215 + $0x8] sm:$0xff]
      %v458 = vld [vmem:[%s215 + $0x10] sm:$0xff]
      %v459 = vld [vmem:[%s215 + $0x18] sm:$0xff]
      %v460 = vld [vmem:[%s215 + $0x20] sm:$0xff]
      %v461 = vld [vmem:[%s215 + $0x28] sm:$0xff]
      %v462 = vld [vmem:[%s215 + $0x30] sm:$0xff]
      %v463 = vld [vmem:[%s215 + $0x38] sm:$0xff]
      %v464 = vld [vmem:[%s215 + $0x40] sm:$0xff]
      %v465 = vld [vmem:[%s215 + $0x48] sm:$0xff]
      %v466 = vld [vmem:[%s215 + $0x50] sm:$0xff]
      %v467 = vld [vmem:[%s215 + $0x58] sm:$0xff]
      %v468 = vld [vmem:[%s215 + $0x60] sm:$0xff]
      %v469 = vld [vmem:[%s215 + $0x68] sm:$0xff]
      %v470 = vld [vmem:[%s215 + $0x70] sm:$0xff]
      %v471 = vld [vmem:[%s215 + $0x78] sm:$0xff]
      %v472 = vadd.f32 %v394, %v456
      %v473 = vadd.f32 %v397, %v457
      %v474 = vadd.f32 %v402, %v458
      %v475 = vadd.f32 %v405, %v459
      %v476 = vadd.f32 %v410, %v460
      %v477 = vadd.f32 %v413, %v461
      %v478 = vadd.f32 %v418, %v462
      %v479 = vadd.f32 %v421, %v463
      %v480 = vadd.f32 %v426, %v464
      %v481 = vadd.f32 %v429, %v465
      %v482 = vadd.f32 %v434, %v466
      %v483 = vadd.f32 %v437, %v467
      %v484 = vadd.f32 %v442, %v468
      %v485 = vadd.f32 %v445, %v469
      %v486 = vadd.f32 %v450, %v470
      %v487 = vadd.f32 %v453, %v471
      %vm488 = vcmask 261120
      %489 = vst.msk [vmem:[%s221] sm:$0xff] %vm488, %v472
      %490 = vst.msk [vmem:[%s221 + $0x8] sm:$0xff] %vm488, %v473
      %491 = vst.msk [vmem:[%s221 + $0x10] sm:$0xff] %vm488, %v474
      %492 = vst.msk [vmem:[%s221 + $0x18] sm:$0xff] %vm488, %v475
      %493 = vst.msk [vmem:[%s221 + $0x20] sm:$0xff] %vm488, %v476
      %494 = vst.msk [vmem:[%s221 + $0x28] sm:$0xff] %vm488, %v477
      %495 = vst.msk [vmem:[%s221 + $0x30] sm:$0xff] %vm488, %v478
      %496 = vst.msk [vmem:[%s221 + $0x38] sm:$0xff] %vm488, %v479
      %497 = vst.msk [vmem:[%s221 + $0x40] sm:$0xff] %vm488, %v480
      %498 = vst.msk [vmem:[%s221 + $0x48] sm:$0xff] %vm488, %v481
      %499 = vst.msk [vmem:[%s221 + $0x50] sm:$0xff] %vm488, %v482
      %500 = vst.msk [vmem:[%s221 + $0x58] sm:$0xff] %vm488, %v483
      %501 = vst.msk [vmem:[%s221 + $0x60] sm:$0xff] %vm488, %v484
      %502 = vst.msk [vmem:[%s221 + $0x68] sm:$0xff] %vm488, %v485
      %503 = vst.msk [vmem:[%s221 + $0x70] sm:$0xff] %vm488, %v486
      %504 = vst.msk [vmem:[%s221 + $0x78] sm:$0xff] %vm488, %v487
      %s505 = smul.u32 16, %s15
      %p506 = scmp.lt.s32.totalorder %s505, 31
      %s507 = scalar_select %p506, %s505, 31
      %s508 = smul.addr %s507, 8
      %s509 = scalar_lea.vmem %s4, %s508
      // Predicated region
      $region37: #{natten3d_transformer_block.9} parent=35 // pred_check
        %p510 = pneg %p127
      $region38: #{natten3d_transformer_block.9} parent=35 // pred_check_branch
        %512 = sbr.rel (%p510) target = $region40
      $region39: #{natten3d_transformer_block.9} parent=35 // pred_region
        %s513 = smul.u32 16, %s15
      $region40: #{natten3d_transformer_block.9} parent=35 // pred_fallthru
        _
    $region36: #{natten3d_transformer_block.9} parent=5 // pred_fallthru
      _
    %p514 = scmp.le.s32.totalorder 2, %s10
    // Predicated region
    $region41: #{natten3d_transformer_block.9} parent=5 // pred_check
      %p515 = pneg %p514
    $region42: #{natten3d_transformer_block.9} parent=5 // pred_check_branch
      %517 = sbr.rel (%p515) target = $region44
    $region43: #{natten3d_transformer_block.9} parent=5 // pred_region
      %s518 = ssub.s32 %s10, 2
      // Predicated region
      $region45: #{natten3d_transformer_block.9} parent=43 // pred_check
        %p519 = pneg %p133
      $region46: #{natten3d_transformer_block.9} parent=43 // pred_check_branch
        %521 = sbr.rel (%p519) target = $region48
      $region47: #{natten3d_transformer_block.9} parent=43 // pred_region
        %s522 = smul.u32 16, %s16
        %p523 = scmp.lt.s32.totalorder %s522, 31
        %s524 = scalar_select %p523, %s522, 31
        %s525 = smul.addr %s524, 8
        %s526 = scalar_lea.vmem %s4, %s525
      $region48: #{natten3d_transformer_block.9} parent=43 // pred_fallthru
        _
    $region44: #{natten3d_transformer_block.9} parent=5 // pred_fallthru
      _
  $region6: #{natten3d_transformer_block.9} parent=0 // loop_footer
    %s14 = sadd.s32 1, %s10
  $region7: #{natten3d_transformer_block.9} parent=0 // loop_footer_branch
    %9 = sbr.rel target = $region3
  $region8: #{natten3d_transformer_block.9} parent=0 // loop_exit
    _

</llo_original>
